<compile_context>
chip_gen: v6e
topology: v6e:2x2x1
jax: 0.10.0
libtpu: 0.0.40
codegen_flags: <defaults>
</compile_context>

<pallas_src>
import functools
import math

import jax
import jax.numpy as jnp
from jax.experimental import pallas as pl
from jax.experimental.pallas import tpu as pltpu


# ----------------------------------------------------------------------------
# VMEM-capacity-aware defaults
# ----------------------------------------------------------------------------
def _vmem_capacity_bytes():
    try:
        return int(pltpu.get_tpu_info().vmem_capacity_bytes)
    except Exception:
        return 64 * 1024 * 1024          # conservative (v7x-sized) fallback


_VMEM_CAP = _vmem_capacity_bytes()
_BIG_VMEM = _VMEM_CAP >= 100 * 1024 * 1024       # v5e/v6e: 128 MiB, v7x: 64 MiB
_VMEM_LIMIT = min(int(_VMEM_CAP * 3 // 4), 100 * 1024 * 1024)

_TM = 512 if _BIG_VMEM else 256      # activation row tile
_TN = 1024 if _BIG_VMEM else 512     # output-column tile
_TK = 512                            # matmul reduction tile
_TH = 512 if _BIG_VMEM else 256      # FFN hidden tile
_TQ = 256                            # attention query-row tile
_TKV = 512                           # attention key/value tile


def _cparams(*semantics):
    return pltpu.CompilerParams(dimension_semantics=semantics,
                                vmem_limit_bytes=_VMEM_LIMIT)


def _tile(dim, target, align):
    """Largest block <= target that divides `dim` and is a multiple of `align`
    (TPU (8,128) layout rule); falls back to the full dim (full-extent block)."""
    if dim <= target:
        return dim
    t = (target // align) * align
    while t >= align:
        if dim % t == 0:
            return t
        t -= align
    return dim


# ----------------------------------------------------------------------------
# Pallas kernels
# ----------------------------------------------------------------------------
def _matmul_res_kernel(a_ref, b_ref, r_ref, o_ref, acc_ref):
    """Tiled A @ B + residual, K-reduction accumulator, residual fused into
    the finalize step (residual block is only DMA'd once per (i, j))."""
    @pl.when(pl.program_id(2) == 0)
    def _():
        acc_ref[...] = jnp.zeros_like(acc_ref)

    acc_ref[...] += jnp.dot(a_ref[...], b_ref[...],
                            preferred_element_type=jnp.float32)

    @pl.when(pl.program_id(2) == pl.num_programs(2) - 1)
    def _():
        o_ref[...] = (acc_ref[...] +
                      r_ref[...].astype(jnp.float32)).astype(o_ref.dtype)


def matmul_residual(a, b, res, out_dtype=jnp.bfloat16):
    """(M, K) @ (K, N) + res, res: (M, N)."""
    M, K = a.shape
    K2, N = b.shape
    assert K == K2 and res.shape == (M, N)
    tm = _tile(M, _TM, 8)
    tn = _tile(N, _TN, 128)
    tk = _tile(K, _TK, 128)
    return pl.pallas_call(
        _matmul_res_kernel,
        out_shape=jax.ShapeDtypeStruct((M, N), out_dtype),
        grid=(M // tm, N // tn, K // tk),
        in_specs=[pl.BlockSpec((tm, tk), lambda i, j, k: (i, k)),
                  pl.BlockSpec((tk, tn), lambda i, j, k: (k, j)),
                  pl.BlockSpec((tm, tn), lambda i, j, k: (i, j))],
        out_specs=pl.BlockSpec((tm, tn), lambda i, j, k: (i, j)),
        scratch_shapes=[pltpu.VMEM((tm, tn), jnp.float32)],
        compiler_params=_cparams("parallel", "parallel", "arbitrary"),
    )(a, b, res)


def _rmsnorm_matmul_kernel(x_ref, nw_ref, w_ref, o_ref, xn_scr, *, eps):
    # Hoisted norm: compute the normalized row tile once (j == 0) and reuse it
    # for every output-column tile j.
    @pl.when(pl.program_id(1) == 0)
    def _():
        x = x_ref[...].astype(jnp.float32)
        ms = jnp.mean(x * x, axis=-1, keepdims=True)
        xn_scr[...] = ((x * jax.lax.rsqrt(ms + eps)) *
                       nw_ref[...].astype(jnp.float32)).astype(xn_scr.dtype)

    o_ref[...] = jnp.dot(xn_scr[...], w_ref[...],
                         preferred_element_type=jnp.float32).astype(o_ref.dtype)


def rmsnorm_matmul(x, norm_w, w, eps, out_dtype=jnp.bfloat16):
    """Fused RMSNorm(x) @ W.  x: (M, D), norm_w: (1, D), w: (D, N)."""
    M, D = x.shape
    D2, N = w.shape
    assert D == D2
    tm = _tile(M, _TM, 8)
    tn = _tile(N, _TN, 128)
    return pl.pallas_call(
        functools.partial(_rmsnorm_matmul_kernel, eps=eps),
        out_shape=jax.ShapeDtypeStruct((M, N), out_dtype),
        grid=(M // tm, N // tn),
        in_specs=[pl.BlockSpec((tm, D), lambda i, j: (i, 0)),
                  pl.BlockSpec((1, D), lambda i, j: (0, 0)),
                  pl.BlockSpec((D, tn), lambda i, j: (0, j))],
        out_specs=pl.BlockSpec((tm, tn), lambda i, j: (i, j)),
        scratch_shapes=[pltpu.VMEM((tm, D), x.dtype)],        # hoisted xn
        # N axis is "arbitrary": the xn scratch is carried across it.
        compiler_params=_cparams("parallel", "arbitrary"),
    )(x, norm_w, w)


def _ffn_kernel(x_ref, nw_ref, w1_ref, w3_ref, w2_ref, o_ref,
                xn_scr, acc_scr, *, eps):
    j = pl.program_id(1)

    @pl.when(j == 0)
    def _():
        x = x_ref[...].astype(jnp.float32)
        ms = jnp.mean(x * x, axis=-1, keepdims=True)
        xn_scr[...] = ((x * jax.lax.rsqrt(ms + eps)) *
                       nw_ref[...].astype(jnp.float32)).astype(xn_scr.dtype)
        acc_scr[...] = jnp.zeros_like(acc_scr)

    xn = xn_scr[...]
    h1 = jnp.dot(xn, w1_ref[...], preferred_element_type=jnp.float32)
    h3 = jnp.dot(xn, w3_ref[...], preferred_element_type=jnp.float32)
    g = (h1 * jax.nn.sigmoid(h1)) * h3                      # silu(w1 x) * (w3 x)
    acc_scr[...] += jnp.dot(g.astype(w2_ref.dtype), w2_ref[...],
                            preferred_element_type=jnp.float32)

    @pl.when(j == pl.num_programs(1) - 1)
    def _():
        # Fused residual: the FFN input x *is* the residual stream.
        o_ref[...] = (acc_scr[...] +
                      x_ref[...].astype(jnp.float32)).astype(o_ref.dtype)


def feed_forward(x, norm_w, w1, w3, w2, eps, out_dtype=jnp.bfloat16):
    """Fused ffn_norm + SwiGLU FFN + residual, tiled over (M rows, hidden)."""
    M, D = x.shape
    H = w1.shape[1]
    tm = _tile(M, _TM, 8)
    th = _tile(H, _TH, 128)
    return pl.pallas_call(
        functools.partial(_ffn_kernel, eps=eps),
        out_shape=jax.ShapeDtypeStruct((M, D), out_dtype),
        grid=(M // tm, H // th),
        in_specs=[pl.BlockSpec((tm, D), lambda i, j: (i, 0)),
                  pl.BlockSpec((1, D), lambda i, j: (0, 0)),
                  pl.BlockSpec((D, th), lambda i, j: (0, j)),
                  pl.BlockSpec((D, th), lambda i, j: (0, j)),
                  pl.BlockSpec((th, D), lambda i, j: (j, 0))],
        out_specs=pl.BlockSpec((tm, D), lambda i, j: (i, 0)),
        scratch_shapes=[pltpu.VMEM((tm, D), x.dtype),          # hoisted xn
                        pltpu.VMEM((tm, D), jnp.float32)],     # w2 accumulator
        compiler_params=_cparams("parallel", "arbitrary"),
    )(x, norm_w, w1, w3, w2)


def _flash_attn_kernel(start_pos_ref, q_ref, k_ref, v_ref, o_ref,
                       m_scr, l_scr, acc_scr, *, scale, seqlen):
    kv = pl.program_id(2)

    @pl.when(kv == 0)
    def _():
        m_scr[...] = jnp.full_like(m_scr, -jnp.inf)
        l_scr[...] = jnp.zeros_like(l_scr)
        acc_scr[...] = jnp.zeros_like(acc_scr)

    q = q_ref[0]                                  # (tq, Dh): rows of one KV group
    k = k_ref[0]                                  # (tkv, Dh)
    v = v_ref[0]                                  # (tkv, Dh)
    # QK^T via dot_general contracting the last dims — no K transpose copy.
    s = jax.lax.dot_general(q, k, (((1,), (1,)), ((), ())),
                            preferred_element_type=jnp.float32) * scale
    tq, tkv = s.shape

    # In-kernel causal mask from iotas; rows are head-major within a KV group
    # so the query position is (global row % seqlen).  start_pos comes from
    # SMEM (runtime scalar, no recompile per decode step).
    start_pos = start_pos_ref[0]
    row = jax.lax.broadcasted_iota(jnp.int32, (tq, tkv), 0) + pl.program_id(1) * tq
    q_pos = row % seqlen + start_pos
    k_pos = (jax.lax.broadcasted_iota(jnp.int32, (tq, tkv), 1) + kv * tkv
             + start_pos)
    s = jnp.where(k_pos <= q_pos, s, -1e30)

    # Online softmax update (f32).
    m_prev = m_scr[...]
    m_new = jnp.maximum(m_prev, jnp.max(s, axis=-1, keepdims=True))
    alpha = jnp.exp(m_prev - m_new)
    p = jnp.exp(s - m_new)
    l_scr[...] = alpha * l_scr[...] + jnp.sum(p, axis=-1, keepdims=True)
    acc_scr[...] = alpha * acc_scr[...] + jnp.dot(
        p.astype(v.dtype), v, preferred_element_type=jnp.float32)
    m_scr[...] = m_new

    @pl.when(kv == pl.num_programs(2) - 1)
    def _():
        o_ref[0] = (acc_scr[...] *
                    pl.reciprocal(l_scr[...], approx=True)).astype(o_ref.dtype)


def attention(q, k, v, start_pos, scale, seqlen):
    """Flash attention over grouped queries.

    q: (B*KVH, n_rep*S, Dh); k/v: (B*KVH, T, Dh).  One KV group per outer grid
    step (all n_rep query heads share one K/V stream — no repeat_kv), tiled
    over query rows and KV positions with an online-softmax accumulator.
    """
    BKV, GS, Dh = q.shape
    _, T, _ = k.shape
    tq = _tile(GS, _TQ, 8)
    tkv = _tile(T, _TKV, 8)
    # TODO(synk): with Dh < 128 (e.g. 64) the output store is not lane-dense;
    # packing 2 heads per row would widen it but changes the matmul structure.
    grid_spec = pltpu.PrefetchScalarGridSpec(
        num_scalar_prefetch=1,
        grid=(BKV, GS // tq, T // tkv),
        in_specs=[pl.BlockSpec((1, tq, Dh), lambda b, i, j, sp: (b, i, 0)),
                  pl.BlockSpec((1, tkv, Dh), lambda b, i, j, sp: (b, j, 0)),
                  pl.BlockSpec((1, tkv, Dh), lambda b, i, j, sp: (b, j, 0))],
        out_specs=pl.BlockSpec((1, tq, Dh), lambda b, i, j, sp: (b, i, 0)),
        scratch_shapes=[pltpu.VMEM((tq, 1), jnp.float32),    # running max
                        pltpu.VMEM((tq, 1), jnp.float32),    # running denom
                        pltpu.VMEM((tq, Dh), jnp.float32)])  # running output
    return pl.pallas_call(
        functools.partial(_flash_attn_kernel, scale=scale, seqlen=seqlen),
        out_shape=jax.ShapeDtypeStruct((BKV, GS, Dh), q.dtype),
        grid_spec=grid_spec,
        compiler_params=_cparams("parallel", "parallel", "arbitrary"),
    )(start_pos, q, k, v)


# ----------------------------------------------------------------------------
# JAX glue: RoPE, parameter construction, model assembly
# ----------------------------------------------------------------------------
def precompute_freqs_cis(dim, end, theta):
    freqs = 1.0 / theta ** (jnp.arange(0, dim, 2)[: dim // 2].astype(jnp.float32) / dim)
    t = jnp.arange(end, dtype=jnp.float32)
    freqs = jnp.outer(t, freqs)                     # (end, dim//2)
    return jnp.cos(freqs), jnp.sin(freqs)


def apply_rotary_emb(xq, xk, cos, sin):
    """xq: (B, S, H, Dh), xk: (B, S, KVH, Dh), cos/sin: (S, Dh//2)."""
    def rot(x):
        b, s, h, d = x.shape
        xf = x.astype(jnp.float32).reshape(b, s, h, d // 2, 2)
        xre, xim = xf[..., 0], xf[..., 1]
        c = cos[None, :, None, :]
        sn = sin[None, :, None, :]
        out_re = xre * c - xim * sn
        out_im = xre * sn + xim * c
        return jnp.stack([out_re, out_im], axis=-1).reshape(b, s, h, d).astype(x.dtype)
    return rot(xq), rot(xk)


def init_params(key, *, dim, n_layers, n_heads, n_kv_heads, vocab_size,
                multiple_of, ffn_dim_multiplier, dtype=jnp.bfloat16):
    head_dim = dim // n_heads
    hidden_dim = int(2 * (4 * dim) / 3)
    if ffn_dim_multiplier is not None:
        hidden_dim = int(ffn_dim_multiplier * hidden_dim)
    hidden_dim = multiple_of * ((hidden_dim + multiple_of - 1) // multiple_of)

    def dense(k, fan_in, fan_out):
        return (jax.random.normal(k, (fan_in, fan_out), jnp.float32) * 0.02
                ).astype(dtype)

    keys = jax.random.split(key, 2 + n_layers)
    params = {
        "tok_embeddings": (jax.random.normal(keys[0], (vocab_size, dim),
                                             jnp.float32) * 0.02).astype(dtype),
        "norm_w": jnp.ones((1, dim), jnp.float32),
        "output_w": dense(keys[1], dim, vocab_size),
        "layers": [],
    }
    qkv_out = (n_heads + 2 * n_kv_heads) * head_dim
    for l in range(n_layers):
        lk = jax.random.split(keys[2 + l], 5)
        params["layers"].append({
            # wq | wk | wv concatenated along the output dim -> one tiled matmul.
            "wqkv": dense(lk[0], dim, qkv_out),
            "wo": dense(lk[1], n_heads * head_dim, dim),
            "w1": dense(lk[2], dim, hidden_dim),
            "w2": dense(lk[3], hidden_dim, dim),
            "w3": dense(lk[4], dim, hidden_dim),
            "attn_norm_w": jnp.ones((1, dim), jnp.float32),
            "ffn_norm_w": jnp.ones((1, dim), jnp.float32),
        })
    return params


def transformer_forward(params, tokens, start_pos, *, dim, n_heads, n_kv_heads,
                        norm_eps, rope_theta, max_seq_len):
    """start_pos: (1,) int32 array (runtime scalar — no recompile per step)."""
    bsz, seqlen = tokens.shape
    head_dim = dim // n_heads
    n_rep = n_heads // n_kv_heads
    q_width = n_heads * head_dim
    kv_width = n_kv_heads * head_dim

    h = jnp.take(params["tok_embeddings"], tokens, axis=0)     # (B, S, D) bf16

    cos_full, sin_full = precompute_freqs_cis(head_dim, max_seq_len * 2, rope_theta)
    sp = start_pos[0]
    cos = jax.lax.dynamic_slice_in_dim(cos_full, sp, seqlen, axis=0)
    sin = jax.lax.dynamic_slice_in_dim(sin_full, sp, seqlen, axis=0)

    scale = 1.0 / math.sqrt(head_dim)
    # TODO(synk): persistent KV cache across calls is not modeled; keys/values
    # only cover the current chunk, so only start_pos=0 is fully correct.

    for lp in params["layers"]:
        # ---- attention block: fused attention_norm + QKV projection ----
        x2d = h.reshape(bsz * seqlen, dim)
        qkv = rmsnorm_matmul(x2d, lp["attn_norm_w"], lp["wqkv"], norm_eps)
        xq = qkv[:, :q_width].reshape(bsz, seqlen, n_heads, head_dim)
        xk = qkv[:, q_width:q_width + kv_width].reshape(
            bsz, seqlen, n_kv_heads, head_dim)
        xv = qkv[:, q_width + kv_width:].reshape(
            bsz, seqlen, n_kv_heads, head_dim)
        xq, xk = apply_rotary_emb(xq, xk, cos, sin)

        # group query heads by their KV head (GQA) — no repeat_kv duplication.
        # TODO(synk): these transposes remain XLA glue (not folded into
        # attention BlockSpecs).
        q_g = xq.transpose(0, 2, 1, 3).reshape(
            bsz * n_kv_heads, n_rep * seqlen, head_dim)
        k_g = xk.transpose(0, 2, 1, 3).reshape(
            bsz * n_kv_heads, seqlen, head_dim)
        v_g = xv.transpose(0, 2, 1, 3).reshape(
            bsz * n_kv_heads, seqlen, head_dim)

        attn = attention(q_g, k_g, v_g, start_pos, scale, seqlen)
        attn = attn.reshape(bsz, n_kv_heads, n_rep, seqlen, head_dim)
        attn = attn.transpose(0, 3, 1, 2, 4).reshape(bsz * seqlen, q_width)
        # wo projection with the residual add fused into the kernel finalize.
        h = matmul_residual(attn, lp["wo"], x2d).reshape(bsz, seqlen, dim)

        # ---- feed-forward block: fused ffn_norm + SwiGLU + residual ----
        h2d = h.reshape(bsz * seqlen, dim)
        h = feed_forward(h2d, lp["ffn_norm_w"], lp["w1"], lp["w3"],
                         lp["w2"], norm_eps).reshape(bsz, seqlen, dim)

    # final RMSNorm fused into the (lane-dense, vocab-tiled) logits projection.
    h2d = h.reshape(bsz * seqlen, dim)
    logits = rmsnorm_matmul(h2d, params["norm_w"], params["output_w"],
                            norm_eps, out_dtype=jnp.float32)
    return logits.reshape(bsz, seqlen, -1)


# ----------------------------------------------------------------------------
if __name__ == "__main__":
    # Small, TPU-layout-friendly configuration (Dh=64, GQA with n_rep=2).
    DIM = 256
    N_LAYERS = 2
    N_HEADS = 4
    N_KV_HEADS = 2
    VOCAB = 512
    MULTIPLE_OF = 32
    NORM_EPS = 1e-5
    ROPE_THETA = 500000.0
    MAX_SEQ_LEN = 32

    BATCH = 2
    SEQLEN = 16
    START_POS = 0

    key = jax.random.PRNGKey(0)
    pkey, tkey = jax.random.split(key)
    params = init_params(pkey, dim=DIM, n_layers=N_LAYERS, n_heads=N_HEADS,
                         n_kv_heads=N_KV_HEADS, vocab_size=VOCAB,
                         multiple_of=MULTIPLE_OF, ffn_dim_multiplier=None)
    tokens = jax.random.randint(tkey, (BATCH, SEQLEN), 0, VOCAB, dtype=jnp.int32)

    fwd = jax.jit(functools.partial(
        transformer_forward, dim=DIM, n_heads=N_HEADS, n_kv_heads=N_KV_HEADS,
        norm_eps=NORM_EPS, rope_theta=ROPE_THETA, max_seq_len=MAX_SEQ_LEN))

    logits = fwd(params, tokens, jnp.array([START_POS], jnp.int32))
    logits = jax.block_until_ready(logits)

    assert logits.shape == (BATCH, SEQLEN, VOCAB)
    assert logits.dtype == jnp.float32
    assert bool(jnp.all(jnp.isfinite(logits)))
    print("KERNEL_OK")
</pallas_src>

<mosaic_0001>
module attributes {stable_mosaic.version = 11 : i64} {
  func.func @_rmsnorm_matmul_kernel(%arg0: i32, %arg1: i32, %arg2: memref<32x256xbf16, #tpu.memory_space<vmem>>, %arg3: memref<1x256xf32, #tpu.memory_space<vmem>>, %arg4: memref<256x512xbf16, #tpu.memory_space<vmem>>, %arg5: memref<32x512xbf16, #tpu.memory_space<vmem>>, %arg6: memref<32x256xbf16, #tpu.memory_space<vmem>>) attributes {dimension_semantics = [#tpu.dimension_semantics<parallel>, #tpu.dimension_semantics<arbitrary>], iteration_bounds = array<i64: 1, 1>, scalar_prefetch = 0 : i64, scratch_operands = 1 : i64, tpu.core_type = #tpu.core_type<tc>, window_params = [{transform_indices = @transform_0, window_bounds = array<i64: 32, 256>}, {pipeline_mode = #tpu.pipeline_mode<synchronous>, transform_indices = @transform_1, window_bounds = array<i64: 1, 256>}, {transform_indices = @transform_2, window_bounds = array<i64: 256, 512>}, {transform_indices = @transform_3, window_bounds = array<i64: 32, 512>}]} {
    %c0_i32 = arith.constant 0 : i32
    %0 = arith.cmpi eq, %arg1, %c0_i32 : i32
    %1 = arith.extui %0 : i1 to i32
    %c0_i32_0 = arith.constant 0 : i32
    %2 = arith.cmpi ne, %1, %c0_i32_0 : i32
    scf.if %2 {
      %c0_6 = arith.constant 0 : index
      %c0_7 = arith.constant 0 : index
      %8 = vector.load %arg2[%c0_6, %c0_7] : memref<32x256xbf16, #tpu.memory_space<vmem>>, vector<32x256xbf16>
      %9 = arith.extf %8 : vector<32x256xbf16> to vector<32x256xf32>
      %10 = arith.mulf %9, %9 : vector<32x256xf32>
      %cst_8 = arith.constant dense<0.000000e+00> : vector<32xf32>
      %11 = vector.multi_reduction <add>, %10, %cst_8 [1] : vector<32x256xf32> to vector<32xf32>
      %12 = vector.shape_cast %11 : vector<32xf32> to vector<32x1xf32>
      %cst_9 = arith.constant 2.560000e+02 : f32
      %13 = vector.broadcast %cst_9 : f32 to vector<32x1xf32>
      %14 = arith.divf %12, %13 : vector<32x1xf32>
      %cst_10 = arith.constant 9.99999974E-6 : f32
      %15 = vector.broadcast %cst_10 : f32 to vector<32x1xf32>
      %16 = arith.addf %14, %15 : vector<32x1xf32>
      %17 = math.rsqrt %16 : vector<32x1xf32>
      %18 = vector.broadcast %17 : vector<32x1xf32> to vector<32x256xf32>
      %19 = arith.mulf %9, %18 : vector<32x256xf32>
      %c0_11 = arith.constant 0 : index
      %c0_12 = arith.constant 0 : index
      %20 = vector.load %arg3[%c0_11, %c0_12] : memref<1x256xf32, #tpu.memory_space<vmem>>, vector<1x256xf32>
      %21 = vector.broadcast %20 : vector<1x256xf32> to vector<32x256xf32>
      %22 = arith.mulf %19, %21 : vector<32x256xf32>
      %23 = arith.truncf %22 : vector<32x256xf32> to vector<32x256xbf16>
      %c0_13 = arith.constant 0 : index
      %c0_14 = arith.constant 0 : index
      %24 = vector.load %arg6[%c0_13, %c0_14] : memref<32x256xbf16, #tpu.memory_space<vmem>>, vector<32x256xbf16>
      tpu.vector_store %arg6[%c0_13, %c0_14], %23 {strides = array<i32>} : memref<32x256xbf16, #tpu.memory_space<vmem>>, vector<32x256xbf16>,
    } else {
    }
    %c0 = arith.constant 0 : index
    %c0_1 = arith.constant 0 : index
    %3 = vector.load %arg6[%c0, %c0_1] : memref<32x256xbf16, #tpu.memory_space<vmem>>, vector<32x256xbf16>
    %c0_2 = arith.constant 0 : index
    %c0_3 = arith.constant 0 : index
    %4 = vector.load %arg4[%c0_2, %c0_3] : memref<256x512xbf16, #tpu.memory_space<vmem>>, vector<256x512xbf16>
    %cst = arith.constant dense<0.000000e+00> : vector<32x512xf32>
    %5 = tpu.matmul %3, %4, %cst {dimension_numbers = #tpu.dot_dimension_numbers<[1], [0], [0], [1], [0, 0, 1, 1], [], []>} : vector<32x256xbf16>, vector<256x512xbf16>, vector<32x512xf32> -> vector<32x512xf32>
    %6 = arith.truncf %5 : vector<32x512xf32> to vector<32x512xbf16>
    %c0_4 = arith.constant 0 : index
    %c0_5 = arith.constant 0 : index
    %7 = vector.load %arg5[%c0_4, %c0_5] : memref<32x512xbf16, #tpu.memory_space<vmem>>, vector<32x512xbf16>
    tpu.vector_store %arg5[%c0_4, %c0_5], %6 {strides = array<i32>} : memref<32x512xbf16, #tpu.memory_space<vmem>>, vector<32x512xbf16>,
    return
  }
  func.func @transform_0(%arg0: i32, %arg1: i32) -> (i32, i32) {
    %c0_i32 = arith.constant 0 : i32
    %c0_i32_0 = arith.constant 0 : i32
    return %arg0, %c0_i32 : i32, i32
  }
  func.func @transform_1(%arg0: i32, %arg1: i32) -> (i32, i32) {
    %c0_i32 = arith.constant 0 : i32
    %c0_i32_0 = arith.constant 0 : i32
    %c0_i32_1 = arith.constant 0 : i32
    return %c0_i32, %c0_i32_0 : i32, i32
  }
  func.func @transform_2(%arg0: i32, %arg1: i32) -> (i32, i32) {
    %c0_i32 = arith.constant 0 : i32
    %c0_i32_0 = arith.constant 0 : i32
    return %c0_i32, %arg1 : i32, i32
  }
  func.func @transform_3(%arg0: i32, %arg1: i32) -> (i32, i32) {
    %c0_i32 = arith.constant 0 : i32
    return %arg0, %arg1 : i32, i32
  }
}

module attributes {stable_mosaic.version = 11 : i64} {
  func.func @_flash_attn_kernel(%arg0: i32, %arg1: i32, %arg2: i32, %arg3: memref<1xi32, #tpu.memory_space<smem>>, %arg4: memref<1x32x64xbf16, #tpu.memory_space<vmem>>, %arg5: memref<1x16x64xbf16, #tpu.memory_space<vmem>>, %arg6: memref<1x16x64xbf16, #tpu.memory_space<vmem>>, %arg7: memref<1x32x64xbf16, #tpu.memory_space<vmem>>, %arg8: memref<32x1xf32, #tpu.memory_space<vmem>>, %arg9: memref<32x1xf32, #tpu.memory_space<vmem>>, %arg10: memref<32x64xf32, #tpu.memory_space<vmem>>) attributes {dimension_semantics = [#tpu.dimension_semantics<parallel>, #tpu.dimension_semantics<parallel>, #tpu.dimension_semantics<arbitrary>], iteration_bounds = array<i64: 4, 1, 1>, scalar_prefetch = 1 : i64, scratch_operands = 3 : i64, tpu.core_type = #tpu.core_type<tc>, window_params = [{transform_indices = @transform_0, window_bounds = array<i64: 1, 32, 64>}, {transform_indices = @transform_1, window_bounds = array<i64: 1, 16, 64>}, {transform_indices = @transform_2, window_bounds = array<i64: 1, 16, 64>}, {transform_indices = @transform_3, window_bounds = array<i64: 1, 32, 64>}]} {
    %c0_i32 = arith.constant 0 : i32
    %0 = arith.cmpi eq, %arg2, %c0_i32 : i32
    %1 = arith.extui %0 : i1 to i32
    %c0_i32_0 = arith.constant 0 : i32
    %2 = arith.cmpi ne, %1, %c0_i32_0 : i32
    scf.if %2 {
      %cst_34 = arith.constant 0xFF800000 : f32
      %70 = vector.broadcast %cst_34 : f32 to vector<32x1xf32>
      %c0_35 = arith.constant 0 : index
      %c0_36 = arith.constant 0 : index
      %71 = vector.load %arg8[%c0_35, %c0_36] : memref<32x1xf32, #tpu.memory_space<vmem>>, vector<32x1xf32>
      tpu.vector_store %arg8[%c0_35, %c0_36], %70 {strides = array<i32>} : memref<32x1xf32, #tpu.memory_space<vmem>>, vector<32x1xf32>,
      %cst_37 = arith.constant 0.000000e+00 : f32
      %72 = vector.broadcast %cst_37 : f32 to vector<32x1xf32>
      %c0_38 = arith.constant 0 : index
      %c0_39 = arith.constant 0 : index
      %73 = vector.load %arg9[%c0_38, %c0_39] : memref<32x1xf32, #tpu.memory_space<vmem>>, vector<32x1xf32>
      tpu.vector_store %arg9[%c0_38, %c0_39], %72 {strides = array<i32>} : memref<32x1xf32, #tpu.memory_space<vmem>>, vector<32x1xf32>,
      %cst_40 = arith.constant 0.000000e+00 : f32
      %74 = vector.broadcast %cst_40 : f32 to vector<32x64xf32>
      %c0_41 = arith.constant 0 : index
      %c0_42 = arith.constant 0 : index
      %75 = vector.load %arg10[%c0_41, %c0_42] : memref<32x64xf32, #tpu.memory_space<vmem>>, vector<32x64xf32>
      tpu.vector_store %arg10[%c0_41, %c0_42], %74 {strides = array<i32>} : memref<32x64xf32, #tpu.memory_space<vmem>>, vector<32x64xf32>,
    } else {
    }
    %c0 = arith.constant 0 : index
    %c0_1 = arith.constant 0 : index
    %c0_2 = arith.constant 0 : index
    %3 = vector.load %arg4[%c0, %c0_1, %c0_2] : memref<1x32x64xbf16, #tpu.memory_space<vmem>>, vector<1x32x64xbf16>
    %4 = vector.shape_cast %3 : vector<1x32x64xbf16> to vector<32x64xbf16>
    %c0_3 = arith.constant 0 : index
    %c0_4 = arith.constant 0 : index
    %c0_5 = arith.constant 0 : index
    %5 = vector.load %arg5[%c0_3, %c0_4, %c0_5] : memref<1x16x64xbf16, #tpu.memory_space<vmem>>, vector<1x16x64xbf16>
    %6 = vector.shape_cast %5 : vector<1x16x64xbf16> to vector<16x64xbf16>
    %c0_6 = arith.constant 0 : index
    %c0_7 = arith.constant 0 : index
    %c0_8 = arith.constant 0 : index
    %7 = vector.load %arg6[%c0_6, %c0_7, %c0_8] : memref<1x16x64xbf16, #tpu.memory_space<vmem>>, vector<1x16x64xbf16>
    %8 = vector.shape_cast %7 : vector<1x16x64xbf16> to vector<16x64xbf16>
    %cst = arith.constant dense<0.000000e+00> : vector<32x16xf32>
    %9 = tpu.matmul %4, %6, %cst {dimension_numbers = #tpu.dot_dimension_numbers<[1], [1], [0], [0], [0, 0, 1, 0], [], []>} : vector<32x64xbf16>, vector<16x64xbf16>, vector<32x16xf32> -> vector<32x16xf32>
    %cst_9 = arith.constant 1.250000e-01 : f32
    %10 = vector.broadcast %cst_9 : f32 to vector<32x16xf32>
    %11 = arith.mulf %9, %10 : vector<32x16xf32>
    %c0_10 = arith.constant 0 : index
    %12 = memref.load %arg3[%c0_10] : memref<1xi32, #tpu.memory_space<smem>>
    %13 = tpu.iota {dimensions = array<i32: 0>} : vector<32x16xi32>
    %c32_i32 = arith.constant 32 : i32
    %14 = arith.muli %arg1, %c32_i32 : i32
    %15 = vector.broadcast %14 : i32 to vector<32x16xi32>
    %16 = arith.addi %13, %15 : vector<32x16xi32>
    %c16_i32 = arith.constant 16 : i32
    %c0_i32_11 = arith.constant 0 : i32
    %17 = arith.cmpi eq, %c16_i32, %c0_i32_11 : i32
    %c1_i32 = arith.constant 1 : i32
    %18 = arith.select %17, %c1_i32, %c16_i32 : i32
    %19 = vector.broadcast %18 : i32 to vector<32x16xi32>
    %20 = arith.remsi %16, %19 : vector<32x16xi32>
    %c0_i32_12 = arith.constant 0 : i32
    %21 = vector.broadcast %c0_i32_12 : i32 to vector<32x16xi32>
    %22 = arith.cmpi ne, %20, %21 : vector<32x16xi32>
    %c0_i32_13 = arith.constant 0 : i32
    %23 = vector.broadcast %c0_i32_13 : i32 to vector<32x16xi32>
    %24 = arith.cmpi slt, %20, %23 : vector<32x16xi32>
    %c0_i32_14 = arith.constant 0 : i32
    %25 = arith.cmpi slt, %18, %c0_i32_14 : i32
    %26 = vector.broadcast %25 : i1 to vector<32x16xi1>
    %27 = vector.broadcast %26 : vector<32x16xi1> to vector<32x16xi1>
    %28 = arith.xori %24, %27 : vector<32x16xi1>
    %29 = arith.andi %28, %22 : vector<32x16xi1>
    %30 = vector.broadcast %18 : i32 to vector<32x16xi32>
    %31 = arith.addi %20, %30 : vector<32x16xi32>
    %32 = arith.select %29, %31, %20 : vector<32x16xi1>, vector<32x16xi32>
    %33 = vector.broadcast %12 : i32 to vector<32x16xi32>
    %34 = arith.addi %32, %33 : vector<32x16xi32>
    %35 = tpu.iota {dimensions = array<i32: 1>} : vector<32x16xi32>
    %c16_i32_15 = arith.constant 16 : i32
    %36 = arith.muli %arg2, %c16_i32_15 : i32
    %37 = vector.broadcast %36 : i32 to vector<32x16xi32>
    %38 = arith.addi %35, %37 : vector<32x16xi32>
    %39 = vector.broadcast %12 : i32 to vector<32x16xi32>
    %40 = arith.addi %38, %39 : vector<32x16xi32>
    %41 = arith.cmpi sle, %40, %34 : vector<32x16xi32>
    %cst_16 = arith.constant -1.000000e+30 : f32
    %42 = vector.broadcast %cst_16 : f32 to vector<32x16xf32>
    %43 = arith.select %41, %11, %42 : vector<32x16xi1>, vector<32x16xf32>
    %c0_17 = arith.constant 0 : index
    %c0_18 = arith.constant 0 : index
    %44 = vector.load %arg8[%c0_17, %c0_18] : memref<32x1xf32, #tpu.memory_space<vmem>>, vector<32x1xf32>
    %cst_19 = arith.constant dense<0xFF800000> : vector<32xf32>
    %45 = vector.multi_reduction <maximumf>, %43, %cst_19 [1] : vector<32x16xf32> to vector<32xf32>
    %46 = vector.shape_cast %45 : vector<32xf32> to vector<32x1xf32>
    %47 = arith.maximumf %44, %46 : vector<32x1xf32>
    %48 = arith.subf %44, %47 : vector<32x1xf32>
    %49 = math.exp %48 : vector<32x1xf32>
    %50 = vector.broadcast %47 : vector<32x1xf32> to vector<32x16xf32>
    %51 = arith.subf %43, %50 : vector<32x16xf32>
    %52 = math.exp %51 : vector<32x16xf32>
    %c0_20 = arith.constant 0 : index
    %c0_21 = arith.constant 0 : index
    %53 = vector.load %arg9[%c0_20, %c0_21] : memref<32x1xf32, #tpu.memory_space<vmem>>, vector<32x1xf32>
    %54 = arith.mulf %49, %53 : vector<32x1xf32>
    %cst_22 = arith.constant dense<0.000000e+00> : vector<32xf32>
    %55 = vector.multi_reduction <add>, %52, %cst_22 [1] : vector<32x16xf32> to vector<32xf32>
    %56 = vector.shape_cast %55 : vector<32xf32> to vector<32x1xf32>
    %57 = arith.addf %54, %56 : vector<32x1xf32>
    %c0_23 = arith.constant 0 : index
    %c0_24 = arith.constant 0 : index
    %58 = vector.load %arg9[%c0_23, %c0_24] : memref<32x1xf32, #tpu.memory_space<vmem>>, vector<32x1xf32>
    tpu.vector_store %arg9[%c0_23, %c0_24], %57 {strides = array<i32>} : memref<32x1xf32, #tpu.memory_space<vmem>>, vector<32x1xf32>,
    %c0_25 = arith.constant 0 : index
    %c0_26 = arith.constant 0 : index
    %59 = vector.load %arg10[%c0_25, %c0_26] : memref<32x64xf32, #tpu.memory_space<vmem>>, vector<32x64xf32>
    %60 = vector.broadcast %49 : vector<32x1xf32> to vector<32x64xf32>
    %61 = arith.mulf %60, %59 : vector<32x64xf32>
    %62 = arith.truncf %52 : vector<32x16xf32> to vector<32x16xbf16>
    %cst_27 = arith.constant dense<0.000000e+00> : vector<32x64xf32>
    %63 = tpu.matmul %62, %8, %cst_27 {dimension_numbers = #tpu.dot_dimension_numbers<[1], [0], [0], [1], [0, 0, 1, 1], [], []>} : vector<32x16xbf16>, vector<16x64xbf16>, vector<32x64xf32> -> vector<32x64xf32>
    %64 = arith.addf %61, %63 : vector<32x64xf32>
    %c0_28 = arith.constant 0 : index
    %c0_29 = arith.constant 0 : index
    %65 = vector.load %arg10[%c0_28, %c0_29] : memref<32x64xf32, #tpu.memory_space<vmem>>, vector<32x64xf32>
    tpu.vector_store %arg10[%c0_28, %c0_29], %64 {strides = array<i32>} : memref<32x64xf32, #tpu.memory_space<vmem>>, vector<32x64xf32>,
    %c0_30 = arith.constant 0 : index
    %c0_31 = arith.constant 0 : index
    %66 = vector.load %arg8[%c0_30, %c0_31] : memref<32x1xf32, #tpu.memory_space<vmem>>, vector<32x1xf32>
    tpu.vector_store %arg8[%c0_30, %c0_31], %47 {strides = array<i32>} : memref<32x1xf32, #tpu.memory_space<vmem>>, vector<32x1xf32>,
    %c0_i32_32 = arith.constant 0 : i32
    %67 = arith.cmpi eq, %arg2, %c0_i32_32 : i32
    %68 = arith.extui %67 : i1 to i32
    %c0_i32_33 = arith.constant 0 : i32
    %69 = arith.cmpi ne, %68, %c0_i32_33 : i32
    scf.if %69 {
      %c0_34 = arith.constant 0 : index
      %c0_35 = arith.constant 0 : index
      %70 = vector.load %arg10[%c0_34, %c0_35] : memref<32x64xf32, #tpu.memory_space<vmem>>, vector<32x64xf32>
      %c0_36 = arith.constant 0 : index
      %c0_37 = arith.constant 0 : index
      %71 = vector.load %arg9[%c0_36, %c0_37] : memref<32x1xf32, #tpu.memory_space<vmem>>, vector<32x1xf32>
      %72 = tpu.reciprocal %71 {approx = true} : vector<32x1xf32> -> vector<32x1xf32>
      %73 = vector.broadcast %72 : vector<32x1xf32> to vector<32x64xf32>
      %74 = arith.mulf %70, %73 : vector<32x64xf32>
      %75 = arith.truncf %74 : vector<32x64xf32> to vector<32x64xbf16>
      %c0_38 = arith.constant 0 : index
      %c0_39 = arith.constant 0 : index
      %c0_40 = arith.constant 0 : index
      %76 = vector.load %arg7[%c0_38, %c0_39, %c0_40] : memref<1x32x64xbf16, #tpu.memory_space<vmem>>, vector<1x32x64xbf16>
      %77 = vector.shape_cast %76 : vector<1x32x64xbf16> to vector<32x64xbf16>
      %78 = vector.shape_cast %75 : vector<32x64xbf16> to vector<1x32x64xbf16>
      tpu.vector_store %arg7[%c0_38, %c0_39, %c0_40], %78 {strides = array<i32>} : memref<1x32x64xbf16, #tpu.memory_space<vmem>>, vector<1x32x64xbf16>,
    } else {
    }
    return
  }
  func.func @transform_0(%arg0: i32, %arg1: i32, %arg2: i32, %arg3: memref<1xi32, #tpu.memory_space<smem>>) -> (i32, i32, i32) {
    %c0_i32 = arith.constant 0 : i32
    %c0_i32_0 = arith.constant 0 : i32
    return %arg0, %arg1, %c0_i32 : i32, i32, i32
  }
  func.func @transform_1(%arg0: i32, %arg1: i32, %arg2: i32, %arg3: memref<1xi32, #tpu.memory_space<smem>>) -> (i32, i32, i32) {
    %c0_i32 = arith.constant 0 : i32
    %c0_i32_0 = arith.constant 0 : i32
    return %arg0, %arg2, %c0_i32 : i32, i32, i32
  }
  func.func @transform_2(%arg0: i32, %arg1: i32, %arg2: i32, %arg3: memref<1xi32, #tpu.memory_space<smem>>) -> (i32, i32, i32) {
    %c0_i32 = arith.constant 0 : i32
    %c0_i32_0 = arith.constant 0 : i32
    return %arg0, %arg2, %c0_i32 : i32, i32, i32
  }
  func.func @transform_3(%arg0: i32, %arg1: i32, %arg2: i32, %arg3: memref<1xi32, #tpu.memory_space<smem>>) -> (i32, i32, i32) {
    %c0_i32 = arith.constant 0 : i32
    %c0_i32_0 = arith.constant 0 : i32
    return %arg0, %arg1, %c0_i32 : i32, i32, i32
  }
}

module attributes {stable_mosaic.version = 11 : i64} {
  func.func @_matmul_res_kernel(%arg0: i32, %arg1: i32, %arg2: i32, %arg3: memref<32x256xbf16, #tpu.memory_space<vmem>>, %arg4: memref<256x256xbf16, #tpu.memory_space<vmem>>, %arg5: memref<32x256xbf16, #tpu.memory_space<vmem>>, %arg6: memref<32x256xbf16, #tpu.memory_space<vmem>>, %arg7: memref<32x256xf32, #tpu.memory_space<vmem>>) attributes {dimension_semantics = [#tpu.dimension_semantics<parallel>, #tpu.dimension_semantics<parallel>, #tpu.dimension_semantics<arbitrary>], iteration_bounds = array<i64: 1, 1, 1>, scalar_prefetch = 0 : i64, scratch_operands = 1 : i64, tpu.core_type = #tpu.core_type<tc>, window_params = [{transform_indices = @transform_0, window_bounds = array<i64: 32, 256>}, {transform_indices = @transform_1, window_bounds = array<i64: 256, 256>}, {transform_indices = @transform_2, window_bounds = array<i64: 32, 256>}, {transform_indices = @transform_3, window_bounds = array<i64: 32, 256>}]} {
    %c0_i32 = arith.constant 0 : i32
    %0 = arith.cmpi eq, %arg2, %c0_i32 : i32
    %1 = arith.extui %0 : i1 to i32
    %c0_i32_0 = arith.constant 0 : i32
    %2 = arith.cmpi ne, %1, %c0_i32_0 : i32
    scf.if %2 {
      %cst_10 = arith.constant 0.000000e+00 : f32
      %12 = vector.broadcast %cst_10 : f32 to vector<32x256xf32>
      %c0_11 = arith.constant 0 : index
      %c0_12 = arith.constant 0 : index
      %13 = vector.load %arg7[%c0_11, %c0_12] : memref<32x256xf32, #tpu.memory_space<vmem>>, vector<32x256xf32>
      tpu.vector_store %arg7[%c0_11, %c0_12], %12 {strides = array<i32>} : memref<32x256xf32, #tpu.memory_space<vmem>>, vector<32x256xf32>,
    } else {
    }
    %c0 = arith.constant 0 : index
    %c0_1 = arith.constant 0 : index
    %3 = vector.load %arg7[%c0, %c0_1] : memref<32x256xf32, #tpu.memory_space<vmem>>, vector<32x256xf32>
    %c0_2 = arith.constant 0 : index
    %c0_3 = arith.constant 0 : index
    %4 = vector.load %arg3[%c0_2, %c0_3] : memref<32x256xbf16, #tpu.memory_space<vmem>>, vector<32x256xbf16>
    %c0_4 = arith.constant 0 : index
    %c0_5 = arith.constant 0 : index
    %5 = vector.load %arg4[%c0_4, %c0_5] : memref<256x256xbf16, #tpu.memory_space<vmem>>, vector<256x256xbf16>
    %cst = arith.constant dense<0.000000e+00> : vector<32x256xf32>
    %6 = tpu.matmul %4, %5, %cst {dimension_numbers = #tpu.dot_dimension_numbers<[1], [0], [0], [1], [0, 0, 1, 1], [], []>} : vector<32x256xbf16>, vector<256x256xbf16>, vector<32x256xf32> -> vector<32x256xf32>
    %7 = arith.addf %3, %6 : vector<32x256xf32>
    %c0_6 = arith.constant 0 : index
    %c0_7 = arith.constant 0 : index
    %8 = vector.load %arg7[%c0_6, %c0_7] : memref<32x256xf32, #tpu.memory_space<vmem>>, vector<32x256xf32>
    tpu.vector_store %arg7[%c0_6, %c0_7], %7 {strides = array<i32>} : memref<32x256xf32, #tpu.memory_space<vmem>>, vector<32x256xf32>,
    %c0_i32_8 = arith.constant 0 : i32
    %9 = arith.cmpi eq, %arg2, %c0_i32_8 : i32
    %10 = arith.extui %9 : i1 to i32
    %c0_i32_9 = arith.constant 0 : i32
    %11 = arith.cmpi ne, %10, %c0_i32_9 : i32
    scf.if %11 {
      %c0_10 = arith.constant 0 : index
      %c0_11 = arith.constant 0 : index
      %12 = vector.load %arg7[%c0_10, %c0_11] : memref<32x256xf32, #tpu.memory_space<vmem>>, vector<32x256xf32>
      %c0_12 = arith.constant 0 : index
      %c0_13 = arith.constant 0 : index
      %13 = vector.load %arg5[%c0_12, %c0_13] : memref<32x256xbf16, #tpu.memory_space<vmem>>, vector<32x256xbf16>
      %14 = arith.extf %13 : vector<32x256xbf16> to vector<32x256xf32>
      %15 = arith.addf %12, %14 : vector<32x256xf32>
      %16 = arith.truncf %15 : vector<32x256xf32> to vector<32x256xbf16>
      %c0_14 = arith.constant 0 : index
      %c0_15 = arith.constant 0 : index
      %17 = vector.load %arg6[%c0_14, %c0_15] : memref<32x256xbf16, #tpu.memory_space<vmem>>, vector<32x256xbf16>
      tpu.vector_store %arg6[%c0_14, %c0_15], %16 {strides = array<i32>} : memref<32x256xbf16, #tpu.memory_space<vmem>>, vector<32x256xbf16>,
    } else {
    }
    return
  }
  func.func @transform_0(%arg0: i32, %arg1: i32, %arg2: i32) -> (i32, i32) {
    %c0_i32 = arith.constant 0 : i32
    return %arg0, %arg2 : i32, i32
  }
  func.func @transform_1(%arg0: i32, %arg1: i32, %arg2: i32) -> (i32, i32) {
    %c0_i32 = arith.constant 0 : i32
    return %arg2, %arg1 : i32, i32
  }
  func.func @transform_2(%arg0: i32, %arg1: i32, %arg2: i32) -> (i32, i32) {
    %c0_i32 = arith.constant 0 : i32
    return %arg0, %arg1 : i32, i32
  }
  func.func @transform_3(%arg0: i32, %arg1: i32, %arg2: i32) -> (i32, i32) {
    %c0_i32 = arith.constant 0 : i32
    return %arg0, %arg1 : i32, i32
  }
}

module attributes {stable_mosaic.version = 11 : i64} {
  func.func @_ffn_kernel(%arg0: i32, %arg1: i32, %arg2: memref<32x256xbf16, #tpu.memory_space<vmem>>, %arg3: memref<1x256xf32, #tpu.memory_space<vmem>>, %arg4: memref<256x704xbf16, #tpu.memory_space<vmem>>, %arg5: memref<256x704xbf16, #tpu.memory_space<vmem>>, %arg6: memref<704x256xbf16, #tpu.memory_space<vmem>>, %arg7: memref<32x256xbf16, #tpu.memory_space<vmem>>, %arg8: memref<32x256xbf16, #tpu.memory_space<vmem>>, %arg9: memref<32x256xf32, #tpu.memory_space<vmem>>) attributes {dimension_semantics = [#tpu.dimension_semantics<parallel>, #tpu.dimension_semantics<arbitrary>], iteration_bounds = array<i64: 1, 1>, scalar_prefetch = 0 : i64, scratch_operands = 2 : i64, tpu.core_type = #tpu.core_type<tc>, window_params = [{transform_indices = @transform_0, window_bounds = array<i64: 32, 256>}, {pipeline_mode = #tpu.pipeline_mode<synchronous>, transform_indices = @transform_1, window_bounds = array<i64: 1, 256>}, {transform_indices = @transform_2, window_bounds = array<i64: 256, 704>}, {transform_indices = @transform_3, window_bounds = array<i64: 256, 704>}, {transform_indices = @transform_4, window_bounds = array<i64: 704, 256>}, {transform_indices = @transform_5, window_bounds = array<i64: 32, 256>}]} {
    %c0_i32 = arith.constant 0 : i32
    %0 = arith.cmpi eq, %arg1, %c0_i32 : i32
    %1 = arith.extui %0 : i1 to i32
    %c0_i32_0 = arith.constant 0 : i32
    %2 = arith.cmpi ne, %1, %c0_i32_0 : i32
    scf.if %2 {
      %c0_17 = arith.constant 0 : index
      %c0_18 = arith.constant 0 : index
      %24 = vector.load %arg2[%c0_17, %c0_18] : memref<32x256xbf16, #tpu.memory_space<vmem>>, vector<32x256xbf16>
      %25 = arith.extf %24 : vector<32x256xbf16> to vector<32x256xf32>
      %26 = arith.mulf %25, %25 : vector<32x256xf32>
      %cst_19 = arith.constant dense<0.000000e+00> : vector<32xf32>
      %27 = vector.multi_reduction <add>, %26, %cst_19 [1] : vector<32x256xf32> to vector<32xf32>
      %28 = vector.shape_cast %27 : vector<32xf32> to vector<32x1xf32>
      %cst_20 = arith.constant 2.560000e+02 : f32
      %29 = vector.broadcast %cst_20 : f32 to vector<32x1xf32>
      %30 = arith.divf %28, %29 : vector<32x1xf32>
      %cst_21 = arith.constant 9.99999974E-6 : f32
      %31 = vector.broadcast %cst_21 : f32 to vector<32x1xf32>
      %32 = arith.addf %30, %31 : vector<32x1xf32>
      %33 = math.rsqrt %32 : vector<32x1xf32>
      %34 = vector.broadcast %33 : vector<32x1xf32> to vector<32x256xf32>
      %35 = arith.mulf %25, %34 : vector<32x256xf32>
      %c0_22 = arith.constant 0 : index
      %c0_23 = arith.constant 0 : index
      %36 = vector.load %arg3[%c0_22, %c0_23] : memref<1x256xf32, #tpu.memory_space<vmem>>, vector<1x256xf32>
      %37 = vector.broadcast %36 : vector<1x256xf32> to vector<32x256xf32>
      %38 = arith.mulf %35, %37 : vector<32x256xf32>
      %39 = arith.truncf %38 : vector<32x256xf32> to vector<32x256xbf16>
      %c0_24 = arith.constant 0 : index
      %c0_25 = arith.constant 0 : index
      %40 = vector.load %arg8[%c0_24, %c0_25] : memref<32x256xbf16, #tpu.memory_space<vmem>>, vector<32x256xbf16>
      tpu.vector_store %arg8[%c0_24, %c0_25], %39 {strides = array<i32>} : memref<32x256xbf16, #tpu.memory_space<vmem>>, vector<32x256xbf16>,
      %cst_26 = arith.constant 0.000000e+00 : f32
      %41 = vector.broadcast %cst_26 : f32 to vector<32x256xf32>
      %c0_27 = arith.constant 0 : index
      %c0_28 = arith.constant 0 : index
      %42 = vector.load %arg9[%c0_27, %c0_28] : memref<32x256xf32, #tpu.memory_space<vmem>>, vector<32x256xf32>
      tpu.vector_store %arg9[%c0_27, %c0_28], %41 {strides = array<i32>} : memref<32x256xf32, #tpu.memory_space<vmem>>, vector<32x256xf32>,
    } else {
    }
    %c0 = arith.constant 0 : index
    %c0_1 = arith.constant 0 : index
    %3 = vector.load %arg8[%c0, %c0_1] : memref<32x256xbf16, #tpu.memory_space<vmem>>, vector<32x256xbf16>
    %c0_2 = arith.constant 0 : index
    %c0_3 = arith.constant 0 : index
    %4 = vector.load %arg4[%c0_2, %c0_3] : memref<256x704xbf16, #tpu.memory_space<vmem>>, vector<256x704xbf16>
    %cst = arith.constant dense<0.000000e+00> : vector<32x704xf32>
    %5 = tpu.matmul %3, %4, %cst {dimension_numbers = #tpu.dot_dimension_numbers<[1], [0], [0], [1], [0, 0, 1, 1], [], []>} : vector<32x256xbf16>, vector<256x704xbf16>, vector<32x704xf32> -> vector<32x704xf32>
    %c0_4 = arith.constant 0 : index
    %c0_5 = arith.constant 0 : index
    %6 = vector.load %arg5[%c0_4, %c0_5] : memref<256x704xbf16, #tpu.memory_space<vmem>>, vector<256x704xbf16>
    %cst_6 = arith.constant dense<0.000000e+00> : vector<32x704xf32>
    %7 = tpu.matmul %3, %6, %cst_6 {dimension_numbers = #tpu.dot_dimension_numbers<[1], [0], [0], [1], [0, 0, 1, 1], [], []>} : vector<32x256xbf16>, vector<256x704xbf16>, vector<32x704xf32> -> vector<32x704xf32>
    %8 = arith.negf %5 : vector<32x704xf32>
    %9 = math.exp %8 : vector<32x704xf32>
    %cst_7 = arith.constant 1.000000e+00 : f32
    %10 = vector.broadcast %cst_7 : f32 to vector<32x704xf32>
    %11 = arith.addf %10, %9 : vector<32x704xf32>
    %12 = arith.divf %10, %11 : vector<32x704xf32>
    %13 = arith.mulf %5, %12 : vector<32x704xf32>
    %14 = arith.mulf %13, %7 : vector<32x704xf32>
    %c0_8 = arith.constant 0 : index
    %c0_9 = arith.constant 0 : index
    %15 = vector.load %arg9[%c0_8, %c0_9] : memref<32x256xf32, #tpu.memory_space<vmem>>, vector<32x256xf32>
    %16 = arith.truncf %14 : vector<32x704xf32> to vector<32x704xbf16>
    %c0_10 = arith.constant 0 : index
    %c0_11 = arith.constant 0 : index
    %17 = vector.load %arg6[%c0_10, %c0_11] : memref<704x256xbf16, #tpu.memory_space<vmem>>, vector<704x256xbf16>
    %cst_12 = arith.constant dense<0.000000e+00> : vector<32x256xf32>
    %18 = tpu.matmul %16, %17, %cst_12 {dimension_numbers = #tpu.dot_dimension_numbers<[1], [0], [0], [1], [0, 0, 1, 1], [], []>} : vector<32x704xbf16>, vector<704x256xbf16>, vector<32x256xf32> -> vector<32x256xf32>
    %19 = arith.addf %15, %18 : vector<32x256xf32>
    %c0_13 = arith.constant 0 : index
    %c0_14 = arith.constant 0 : index
    %20 = vector.load %arg9[%c0_13, %c0_14] : memref<32x256xf32, #tpu.memory_space<vmem>>, vector<32x256xf32>
    tpu.vector_store %arg9[%c0_13, %c0_14], %19 {strides = array<i32>} : memref<32x256xf32, #tpu.memory_space<vmem>>, vector<32x256xf32>,
    %c0_i32_15 = arith.constant 0 : i32
    %21 = arith.cmpi eq, %arg1, %c0_i32_15 : i32
    %22 = arith.extui %21 : i1 to i32
    %c0_i32_16 = arith.constant 0 : i32
    %23 = arith.cmpi ne, %22, %c0_i32_16 : i32
    scf.if %23 {
      %c0_17 = arith.constant 0 : index
      %c0_18 = arith.constant 0 : index
      %24 = vector.load %arg9[%c0_17, %c0_18] : memref<32x256xf32, #tpu.memory_space<vmem>>, vector<32x256xf32>
      %c0_19 = arith.constant 0 : index
      %c0_20 = arith.constant 0 : index
      %25 = vector.load %arg2[%c0_19, %c0_20] : memref<32x256xbf16, #tpu.memory_space<vmem>>, vector<32x256xbf16>
      %26 = arith.extf %25 : vector<32x256xbf16> to vector<32x256xf32>
      %27 = arith.addf %24, %26 : vector<32x256xf32>
      %28 = arith.truncf %27 : vector<32x256xf32> to vector<32x256xbf16>
      %c0_21 = arith.constant 0 : index
      %c0_22 = arith.constant 0 : index
      %29 = vector.load %arg7[%c0_21, %c0_22] : memref<32x256xbf16, #tpu.memory_space<vmem>>, vector<32x256xbf16>
      tpu.vector_store %arg7[%c0_21, %c0_22], %28 {strides = array<i32>} : memref<32x256xbf16, #tpu.memory_space<vmem>>, vector<32x256xbf16>,
    } else {
    }
    return
  }
  func.func @transform_0(%arg0: i32, %arg1: i32) -> (i32, i32) {
    %c0_i32 = arith.constant 0 : i32
    %c0_i32_0 = arith.constant 0 : i32
    return %arg0, %c0_i32 : i32, i32
  }
  func.func @transform_1(%arg0: i32, %arg1: i32) -> (i32, i32) {
    %c0_i32 = arith.constant 0 : i32
    %c0_i32_0 = arith.constant 0 : i32
    %c0_i32_1 = arith.constant 0 : i32
    return %c0_i32, %c0_i32_0 : i32, i32
  }
  func.func @transform_2(%arg0: i32, %arg1: i32) -> (i32, i32) {
    %c0_i32 = arith.constant 0 : i32
    %c0_i32_0 = arith.constant 0 : i32
    return %c0_i32, %arg1 : i32, i32
  }
  func.func @transform_3(%arg0: i32, %arg1: i32) -> (i32, i32) {
    %c0_i32 = arith.constant 0 : i32
    %c0_i32_0 = arith.constant 0 : i32
    return %c0_i32, %arg1 : i32, i32
  }
  func.func @transform_4(%arg0: i32, %arg1: i32) -> (i32, i32) {
    %c0_i32 = arith.constant 0 : i32
    %c0_i32_0 = arith.constant 0 : i32
    return %arg1, %c0_i32 : i32, i32
  }
  func.func @transform_5(%arg0: i32, %arg1: i32) -> (i32, i32) {
    %c0_i32 = arith.constant 0 : i32
    %c0_i32_0 = arith.constant 0 : i32
    return %arg0, %c0_i32 : i32, i32
  }
}

module attributes {stable_mosaic.version = 11 : i64} {
  func.func @_rmsnorm_matmul_kernel(%arg0: i32, %arg1: i32, %arg2: memref<32x256xbf16, #tpu.memory_space<vmem>>, %arg3: memref<1x256xf32, #tpu.memory_space<vmem>>, %arg4: memref<256x512xbf16, #tpu.memory_space<vmem>>, %arg5: memref<32x512xf32, #tpu.memory_space<vmem>>, %arg6: memref<32x256xbf16, #tpu.memory_space<vmem>>) attributes {dimension_semantics = [#tpu.dimension_semantics<parallel>, #tpu.dimension_semantics<arbitrary>], iteration_bounds = array<i64: 1, 1>, scalar_prefetch = 0 : i64, scratch_operands = 1 : i64, tpu.core_type = #tpu.core_type<tc>, window_params = [{transform_indices = @transform_0, window_bounds = array<i64: 32, 256>}, {pipeline_mode = #tpu.pipeline_mode<synchronous>, transform_indices = @transform_1, window_bounds = array<i64: 1, 256>}, {transform_indices = @transform_2, window_bounds = array<i64: 256, 512>}, {transform_indices = @transform_3, window_bounds = array<i64: 32, 512>}]} {
    %c0_i32 = arith.constant 0 : i32
    %0 = arith.cmpi eq, %arg1, %c0_i32 : i32
    %1 = arith.extui %0 : i1 to i32
    %c0_i32_0 = arith.constant 0 : i32
    %2 = arith.cmpi ne, %1, %c0_i32_0 : i32
    scf.if %2 {
      %c0_6 = arith.constant 0 : index
      %c0_7 = arith.constant 0 : index
      %7 = vector.load %arg2[%c0_6, %c0_7] : memref<32x256xbf16, #tpu.memory_space<vmem>>, vector<32x256xbf16>
      %8 = arith.extf %7 : vector<32x256xbf16> to vector<32x256xf32>
      %9 = arith.mulf %8, %8 : vector<32x256xf32>
      %cst_8 = arith.constant dense<0.000000e+00> : vector<32xf32>
      %10 = vector.multi_reduction <add>, %9, %cst_8 [1] : vector<32x256xf32> to vector<32xf32>
      %11 = vector.shape_cast %10 : vector<32xf32> to vector<32x1xf32>
      %cst_9 = arith.constant 2.560000e+02 : f32
      %12 = vector.broadcast %cst_9 : f32 to vector<32x1xf32>
      %13 = arith.divf %11, %12 : vector<32x1xf32>
      %cst_10 = arith.constant 9.99999974E-6 : f32
      %14 = vector.broadcast %cst_10 : f32 to vector<32x1xf32>
      %15 = arith.addf %13, %14 : vector<32x1xf32>
      %16 = math.rsqrt %15 : vector<32x1xf32>
      %17 = vector.broadcast %16 : vector<32x1xf32> to vector<32x256xf32>
      %18 = arith.mulf %8, %17 : vector<32x256xf32>
      %c0_11 = arith.constant 0 : index
      %c0_12 = arith.constant 0 : index
      %19 = vector.load %arg3[%c0_11, %c0_12] : memref<1x256xf32, #tpu.memory_space<vmem>>, vector<1x256xf32>
      %20 = vector.broadcast %19 : vector<1x256xf32> to vector<32x256xf32>
      %21 = arith.mulf %18, %20 : vector<32x256xf32>
      %22 = arith.truncf %21 : vector<32x256xf32> to vector<32x256xbf16>
      %c0_13 = arith.constant 0 : index
      %c0_14 = arith.constant 0 : index
      %23 = vector.load %arg6[%c0_13, %c0_14] : memref<32x256xbf16, #tpu.memory_space<vmem>>, vector<32x256xbf16>
      tpu.vector_store %arg6[%c0_13, %c0_14], %22 {strides = array<i32>} : memref<32x256xbf16, #tpu.memory_space<vmem>>, vector<32x256xbf16>,
    } else {
    }
    %c0 = arith.constant 0 : index
    %c0_1 = arith.constant 0 : index
    %3 = vector.load %arg6[%c0, %c0_1] : memref<32x256xbf16, #tpu.memory_space<vmem>>, vector<32x256xbf16>
    %c0_2 = arith.constant 0 : index
    %c0_3 = arith.constant 0 : index
    %4 = vector.load %arg4[%c0_2, %c0_3] : memref<256x512xbf16, #tpu.memory_space<vmem>>, vector<256x512xbf16>
    %cst = arith.constant dense<0.000000e+00> : vector<32x512xf32>
    %5 = tpu.matmul %3, %4, %cst {dimension_numbers = #tpu.dot_dimension_numbers<[1], [0], [0], [1], [0, 0, 1, 1], [], []>} : vector<32x256xbf16>, vector<256x512xbf16>, vector<32x512xf32> -> vector<32x512xf32>
    %c0_4 = arith.constant 0 : index
    %c0_5 = arith.constant 0 : index
    %6 = vector.load %arg5[%c0_4, %c0_5] : memref<32x512xf32, #tpu.memory_space<vmem>>, vector<32x512xf32>
    tpu.vector_store %arg5[%c0_4, %c0_5], %5 {strides = array<i32>} : memref<32x512xf32, #tpu.memory_space<vmem>>, vector<32x512xf32>,
    return
  }
  func.func @transform_0(%arg0: i32, %arg1: i32) -> (i32, i32) {
    %c0_i32 = arith.constant 0 : i32
    %c0_i32_0 = arith.constant 0 : i32
    return %arg0, %c0_i32 : i32, i32
  }
  func.func @transform_1(%arg0: i32, %arg1: i32) -> (i32, i32) {
    %c0_i32 = arith.constant 0 : i32
    %c0_i32_0 = arith.constant 0 : i32
    %c0_i32_1 = arith.constant 0 : i32
    return %c0_i32, %c0_i32_0 : i32, i32
  }
  func.func @transform_2(%arg0: i32, %arg1: i32) -> (i32, i32) {
    %c0_i32 = arith.constant 0 : i32
    %c0_i32_0 = arith.constant 0 : i32
    return %c0_i32, %arg1 : i32, i32
  }
  func.func @transform_3(%arg0: i32, %arg1: i32) -> (i32, i32) {
    %c0_i32 = arith.constant 0 : i32
    return %arg0, %arg1 : i32, i32
  }
}

</mosaic_0001>

<llo_original>
// kernel: transformer_forward.9
$region0: #{transformer_forward.9}
  #allocation0 [shape = 'u32[]', space=smem, size = 0x4, offset = 0x4, fixed_abs, tag = 'smem constant byte address 0x4 - core index']
  #allocation1 [shape = 'u32[144,128]{1,0:T(1,128)}', space=vmem, size = 0x12000, scoped, tag = 'internal scratch']
  #allocation2 [shape = 'bf16[32,256]{1,0:T(8,128)(2,1)}', space=vmem, size = 0x4000, scoped, tag = 'scratch operand']
  %s0 = inlined_call_operand.vmem [shape: bf16[32,256], index: 0, kind: input, shape index: {}]
  %s1 = inlined_call_operand.vmem [shape: f32[1,256], index: 1, kind: input, shape index: {}]
  %s2 = inlined_call_operand.vmem [shape: bf16[256,512], index: 2, kind: input, shape index: {}]
  %s3 = inlined_call_operand.vmem [shape: bf16[32,512], index: 3, kind: output, shape index: {}]
  %s4 = sld [smem:[#allocation0]]
  $region26: #{transformer_forward.9} parent=0
    _
  %s6 = ssub.s32 1, %s4
  %s7 = scalar_select 0, %s6, %s4
  // Predicated region
  $region2: #{transformer_forward.9} parent=0 // pred_check
    _
  $region3: #{transformer_forward.9} parent=0 // pred_check_branch
    %9 = sbr.rel (0) target = $region5
  $region4: #{transformer_forward.9} parent=0 // pred_region
    _
  $region5: #{transformer_forward.9} parent=0 // pred_fallthru
    _
  // Predicated region
  $region6: #{transformer_forward.9} parent=0 // pred_check
    _
  $region7: #{transformer_forward.9} parent=0 // pred_check_branch
    %11 = sbr.rel (0) target = $region9
  $region8: #{transformer_forward.9} parent=0 // pred_region
    _
  $region9: #{transformer_forward.9} parent=0 // pred_fallthru
    _
  // Predicated region
  $region10: #{transformer_forward.9} parent=0 // pred_check
    _
  $region11: #{transformer_forward.9} parent=0 // pred_check_branch
    %13 = sbr.rel (0) target = $region13
  $region12: #{transformer_forward.9} parent=0 // pred_region
    _
  $region13: #{transformer_forward.9} parent=0 // pred_fallthru
    _
  %p14 = scmp.eq.s32.totalorder 0, 0
  // Predicated region
  $region14: #{transformer_forward.9} parent=0 // pred_check
    %p15 = pneg %p14
  $region15: #{transformer_forward.9} parent=0 // pred_check_branch
    %17 = sbr.rel (%p15) target = $region17
  $region16: #{transformer_forward.9} parent=0 // pred_region
    %v18 = vld [vmem:[%s0] sm:$0xff]
    %v19 = vld [vmem:[%s0 + $0x8] sm:$0xff]
    %v20 = vld [vmem:[%s0 + $0x10] sm:$0xff]
    %v21 = vld [vmem:[%s0 + $0x18] sm:$0xff]
    %v22 = vunpack.c.l.bf16 %v18
    %v23 = vunpack.c.h.bf16 %v18
    %v24 = vunpack.c.l.bf16 %v19
    %v25 = vunpack.c.h.bf16 %v19
    %v26 = vunpack.c.l.bf16 %v20
    %v27 = vunpack.c.h.bf16 %v20
    %v28 = vunpack.c.l.bf16 %v21
    %v29 = vunpack.c.h.bf16 %v21
    %v30 = vmul.f32 %v22, %v22
    %v31 = vmul.f32 %v23, %v23
    %v32 = vmul.f32 %v24, %v24
    %v33 = vmul.f32 %v25, %v25
    %v34 = vmul.f32 %v26, %v26
    %v35 = vmul.f32 %v27, %v27
    %v36 = vmul.f32 %v28, %v28
    %v37 = vmul.f32 %v29, %v29
    %v38 = vadd.f32 %v30, %v31
    %39 = vadd.xlane.f32.xlu0 %v38
    %v40 = vpop.xlane.xlu0 %39
    %v41 = vadd.f32 %v32, %v33
    %42 = vadd.xlane.f32.xlu0 %v41
    %v43 = vpop.xlane.xlu0 %42
    %v44 = vadd.f32 %v34, %v35
    %45 = vadd.xlane.f32.xlu0 %v44
    %v46 = vpop.xlane.xlu0 %45
    %v47 = vadd.f32 %v36, %v37
    %48 = vadd.xlane.f32.xlu0 %v47
    %v49 = vpop.xlane.xlu0 %48
    %v50 = vrcp.pop 256.0
    %v51 = vmul.f32 %v40, %v50
    %v52 = vmul.f32 %v43, %v50
    %v53 = vmul.f32 %v46, %v50
    %v54 = vmul.f32 %v49, %v50
    %v55 = vadd.f32 %v51, 1e-05
    %v56 = vadd.f32 %v52, 1e-05
    %v57 = vadd.f32 %v53, 1e-05
    %v58 = vadd.f32 %v54, 1e-05
    %v59 = vrsqrt.pop %v55
    %v60 = vrsqrt.pop %v56
    %v61 = vrsqrt.pop %v57
    %v62 = vrsqrt.pop %v58
    %v63 = vmul.f32 %v22, %v59
    %v64 = vmul.f32 %v23, %v59
    %v65 = vmul.f32 %v24, %v60
    %v66 = vmul.f32 %v25, %v60
    %v67 = vmul.f32 %v26, %v61
    %v68 = vmul.f32 %v27, %v61
    %v69 = vmul.f32 %v28, %v62
    %v70 = vmul.f32 %v29, %v62
    %v71 = vld [vmem:[%s1] sm:$0x3]
    %v73 = vlaneseq
    %v74 = vshrl.u32 %v73, 7
    %v75 = vsub.s32 0, %v74
    %v76 = vrot.slane %v71, %v75
    %v77 = vlaneseq
    %v78 = vshrl.u32 %v77, 7
    %v79 = vsub.s32 1, %v78
    %v80 = vrot.slane %v71, %v79
    %v83 = vmul.f32 %v63, %v76
    %v84 = vmul.f32 %v64, %v80
    %v85 = vmul.f32 %v65, %v76
    %v86 = vmul.f32 %v66, %v80
    %v87 = vmul.f32 %v67, %v76
    %v88 = vmul.f32 %v68, %v80
    %v89 = vmul.f32 %v69, %v76
    %v90 = vmul.f32 %v70, %v80
    %v91 = vpack.c.bf16 %v85, %v83
    %v92 = vpack.c.bf16 %v86, %v84
    %v93 = vpack.c.bf16 %v89, %v87
    %v94 = vpack.c.bf16 %v90, %v88
    %v99 = vunpack.c.l.b16 %v91
    %v100 = vunpack.c.l.b16 %v92
    %v101 = vunpack.c.h.b16 %v91
    %v102 = vunpack.c.h.b16 %v92
    %v103 = vunpack.c.l.b16 %v93
    %v104 = vunpack.c.l.b16 %v94
    %v105 = vunpack.c.h.b16 %v93
    %v106 = vunpack.c.h.b16 %v94
    %v107 = vpack.c.b16 %v100, %v99
    %v108 = vpack.c.b16 %v102, %v101
    %v109 = vpack.c.b16 %v104, %v103
    %v110 = vpack.c.b16 %v106, %v105
    %115 = vst [vmem:[#allocation2] sm:$0xff] %v107
    %116 = vst [vmem:[#allocation2 + $0x8] sm:$0xff] %v108
    %117 = vst [vmem:[#allocation2 + $0x10] sm:$0xff] %v109
    %118 = vst [vmem:[#allocation2 + $0x18] sm:$0xff] %v110
  $region17: #{transformer_forward.9} parent=0 // pred_fallthru
    _
  %v119 = vld [vmem:[#allocation2] sm:$0xff]
  %v120 = vld [vmem:[#allocation2 + $0x8] sm:$0xff]
  %v121 = vld [vmem:[#allocation2 + $0x10] sm:$0xff]
  %v122 = vld [vmem:[#allocation2 + $0x18] sm:$0xff]
  %v123 = vld [vmem:[%s2] sm:$0xff]
  %v124 = vld [vmem:[%s2 + $0x8] sm:$0xff]
  %v125 = vld [vmem:[%s2 + $0x10] sm:$0xff]
  %v126 = vld [vmem:[%s2 + $0x18] sm:$0xff]
  %v127 = vld [vmem:[%s2 + $0x20] sm:$0xff]
  %v128 = vld [vmem:[%s2 + $0x28] sm:$0xff]
  %v129 = vld [vmem:[%s2 + $0x30] sm:$0xff]
  %v130 = vld [vmem:[%s2 + $0x38] sm:$0xff]
  %v131 = vld [vmem:[%s2 + $0x40] sm:$0xff]
  %v132 = vld [vmem:[%s2 + $0x48] sm:$0xff]
  %v133 = vld [vmem:[%s2 + $0x50] sm:$0xff]
  %v134 = vld [vmem:[%s2 + $0x58] sm:$0xff]
  %v135 = vld [vmem:[%s2 + $0x60] sm:$0xff]
  %v136 = vld [vmem:[%s2 + $0x68] sm:$0xff]
  %v137 = vld [vmem:[%s2 + $0x70] sm:$0xff]
  %v138 = vld [vmem:[%s2 + $0x78] sm:$0xff]
  %v139 = vld [vmem:[%s2 + $0x80] sm:$0xff]
  %v140 = vld [vmem:[%s2 + $0x88] sm:$0xff]
  %v141 = vld [vmem:[%s2 + $0x90] sm:$0xff]
  %v142 = vld [vmem:[%s2 + $0x98] sm:$0xff]
  %v143 = vld [vmem:[%s2 + $0xa0] sm:$0xff]
  %v144 = vld [vmem:[%s2 + $0xa8] sm:$0xff]
  %v145 = vld [vmem:[%s2 + $0xb0] sm:$0xff]
  %v146 = vld [vmem:[%s2 + $0xb8] sm:$0xff]
  %v147 = vld [vmem:[%s2 + $0xc0] sm:$0xff]
  %v148 = vld [vmem:[%s2 + $0xc8] sm:$0xff]
  %v149 = vld [vmem:[%s2 + $0xd0] sm:$0xff]
  %v150 = vld [vmem:[%s2 + $0xd8] sm:$0xff]
  %v151 = vld [vmem:[%s2 + $0xe0] sm:$0xff]
  %v152 = vld [vmem:[%s2 + $0xe8] sm:$0xff]
  %v153 = vld [vmem:[%s2 + $0xf0] sm:$0xff]
  %v154 = vld [vmem:[%s2 + $0xf8] sm:$0xff]
  %v155 = vld [vmem:[%s2 + $0x100] sm:$0xff]
  %v156 = vld [vmem:[%s2 + $0x108] sm:$0xff]
  %v157 = vld [vmem:[%s2 + $0x110] sm:$0xff]
  %v158 = vld [vmem:[%s2 + $0x118] sm:$0xff]
  %v159 = vld [vmem:[%s2 + $0x120] sm:$0xff]
  %v160 = vld [vmem:[%s2 + $0x128] sm:$0xff]
  %v161 = vld [vmem:[%s2 + $0x130] sm:$0xff]
  %v162 = vld [vmem:[%s2 + $0x138] sm:$0xff]
  %v163 = vld [vmem:[%s2 + $0x140] sm:$0xff]
  %v164 = vld [vmem:[%s2 + $0x148] sm:$0xff]
  %v165 = vld [vmem:[%s2 + $0x150] sm:$0xff]
  %v166 = vld [vmem:[%s2 + $0x158] sm:$0xff]
  %v167 = vld [vmem:[%s2 + $0x160] sm:$0xff]
  %v168 = vld [vmem:[%s2 + $0x168] sm:$0xff]
  %v169 = vld [vmem:[%s2 + $0x170] sm:$0xff]
  %v170 = vld [vmem:[%s2 + $0x178] sm:$0xff]
  %v171 = vld [vmem:[%s2 + $0x180] sm:$0xff]
  %v172 = vld [vmem:[%s2 + $0x188] sm:$0xff]
  %v173 = vld [vmem:[%s2 + $0x190] sm:$0xff]
  %v174 = vld [vmem:[%s2 + $0x198] sm:$0xff]
  %v175 = vld [vmem:[%s2 + $0x1a0] sm:$0xff]
  %v176 = vld [vmem:[%s2 + $0x1a8] sm:$0xff]
  %v177 = vld [vmem:[%s2 + $0x1b0] sm:$0xff]
  %v178 = vld [vmem:[%s2 + $0x1b8] sm:$0xff]
  %v179 = vld [vmem:[%s2 + $0x1c0] sm:$0xff]
  %v180 = vld [vmem:[%s2 + $0x1c8] sm:$0xff]
  %v181 = vld [vmem:[%s2 + $0x1d0] sm:$0xff]
  %v182 = vld [vmem:[%s2 + $0x1d8] sm:$0xff]
  %v183 = vld [vmem:[%s2 + $0x1e0] sm:$0xff]
  %v184 = vld [vmem:[%s2 + $0x1e8] sm:$0xff]
  %v185 = vld [vmem:[%s2 + $0x1f0] sm:$0xff]
  %v186 = vld [vmem:[%s2 + $0x1f8] sm:$0xff]
  %v191 = vunpack.c.l.b16 %v119
  %v192 = vunpack.c.h.b16 %v119
  %v193 = vunpack.c.l.b16 %v120
  %v194 = vunpack.c.h.b16 %v120
  %v195 = vunpack.c.l.b16 %v121
  %v196 = vunpack.c.h.b16 %v121
  %v197 = vunpack.c.l.b16 %v122
  %v198 = vunpack.c.h.b16 %v122
  %v199 = vpack.c.b16 %v193, %v191
  %v200 = vpack.c.b16 %v194, %v192
  %v201 = vpack.c.b16 %v197, %v195
  %v202 = vpack.c.b16 %v198, %v196
  %v271 = vunpack.c.l.b16 %v123
  %v272 = vunpack.c.h.b16 %v123
  %v273 = vunpack.c.l.b16 %v124
  %v274 = vunpack.c.h.b16 %v124
  %v275 = vunpack.c.l.b16 %v125
  %v276 = vunpack.c.h.b16 %v125
  %v277 = vunpack.c.l.b16 %v126
  %v278 = vunpack.c.h.b16 %v126
  %v279 = vunpack.c.l.b16 %v127
  %v280 = vunpack.c.h.b16 %v127
  %v281 = vunpack.c.l.b16 %v128
  %v282 = vunpack.c.h.b16 %v128
  %v283 = vunpack.c.l.b16 %v129
  %v284 = vunpack.c.h.b16 %v129
  %v285 = vunpack.c.l.b16 %v130
  %v286 = vunpack.c.h.b16 %v130
  %v287 = vunpack.c.l.b16 %v131
  %v288 = vunpack.c.h.b16 %v131
  %v289 = vunpack.c.l.b16 %v132
  %v290 = vunpack.c.h.b16 %v132
  %v291 = vunpack.c.l.b16 %v133
  %v292 = vunpack.c.h.b16 %v133
  %v293 = vunpack.c.l.b16 %v134
  %v294 = vunpack.c.h.b16 %v134
  %v295 = vunpack.c.l.b16 %v135
  %v296 = vunpack.c.h.b16 %v135
  %v297 = vunpack.c.l.b16 %v136
  %v298 = vunpack.c.h.b16 %v136
  %v299 = vunpack.c.l.b16 %v137
  %v300 = vunpack.c.h.b16 %v137
  %v301 = vunpack.c.l.b16 %v138
  %v302 = vunpack.c.h.b16 %v138
  %v303 = vunpack.c.l.b16 %v139
  %v304 = vunpack.c.h.b16 %v139
  %v305 = vunpack.c.l.b16 %v140
  %v306 = vunpack.c.h.b16 %v140
  %v307 = vunpack.c.l.b16 %v141
  %v308 = vunpack.c.h.b16 %v141
  %v309 = vunpack.c.l.b16 %v142
  %v310 = vunpack.c.h.b16 %v142
  %v311 = vunpack.c.l.b16 %v143
  %v312 = vunpack.c.h.b16 %v143
  %v313 = vunpack.c.l.b16 %v144
  %v314 = vunpack.c.h.b16 %v144
  %v315 = vunpack.c.l.b16 %v145
  %v316 = vunpack.c.h.b16 %v145
  %v317 = vunpack.c.l.b16 %v146
  %v318 = vunpack.c.h.b16 %v146
  %v319 = vunpack.c.l.b16 %v147
  %v320 = vunpack.c.h.b16 %v147
  %v321 = vunpack.c.l.b16 %v148
  %v322 = vunpack.c.h.b16 %v148
  %v323 = vunpack.c.l.b16 %v149
  %v324 = vunpack.c.h.b16 %v149
  %v325 = vunpack.c.l.b16 %v150
  %v326 = vunpack.c.h.b16 %v150
  %v327 = vunpack.c.l.b16 %v151
  %v328 = vunpack.c.h.b16 %v151
  %v329 = vunpack.c.l.b16 %v152
  %v330 = vunpack.c.h.b16 %v152
  %v331 = vunpack.c.l.b16 %v153
  %v332 = vunpack.c.h.b16 %v153
  %v333 = vunpack.c.l.b16 %v154
  %v334 = vunpack.c.h.b16 %v154
  %v335 = vunpack.c.l.b16 %v155
  %v336 = vunpack.c.h.b16 %v155
  %v337 = vunpack.c.l.b16 %v156
  %v338 = vunpack.c.h.b16 %v156
  %v339 = vunpack.c.l.b16 %v157
  %v340 = vunpack.c.h.b16 %v157
  %v341 = vunpack.c.l.b16 %v158
  %v342 = vunpack.c.h.b16 %v158
  %v343 = vunpack.c.l.b16 %v159
  %v344 = vunpack.c.h.b16 %v159
  %v345 = vunpack.c.l.b16 %v160
  %v346 = vunpack.c.h.b16 %v160
  %v347 = vunpack.c.l.b16 %v161
  %v348 = vunpack.c.h.b16 %v161
  %v349 = vunpack.c.l.b16 %v162
  %v350 = vunpack.c.h.b16 %v162
  %v351 = vunpack.c.l.b16 %v163
  %v352 = vunpack.c.h.b16 %v163
  %v353 = vunpack.c.l.b16 %v164
  %v354 = vunpack.c.h.b16 %v164
  %v355 = vunpack.c.l.b16 %v165
  %v356 = vunpack.c.h.b16 %v165
  %v357 = vunpack.c.l.b16 %v166
  %v358 = vunpack.c.h.b16 %v166
  %v359 = vunpack.c.l.b16 %v167
  %v360 = vunpack.c.h.b16 %v167
  %v361 = vunpack.c.l.b16 %v168
  %v362 = vunpack.c.h.b16 %v168
  %v363 = vunpack.c.l.b16 %v169
  %v364 = vunpack.c.h.b16 %v169
  %v365 = vunpack.c.l.b16 %v170
  %v366 = vunpack.c.h.b16 %v170
  %v367 = vunpack.c.l.b16 %v171
  %v368 = vunpack.c.h.b16 %v171
  %v369 = vunpack.c.l.b16 %v172
  %v370 = vunpack.c.h.b16 %v172
  %v371 = vunpack.c.l.b16 %v173
  %v372 = vunpack.c.h.b16 %v173
  %v373 = vunpack.c.l.b16 %v174
  %v374 = vunpack.c.h.b16 %v174
  %v375 = vunpack.c.l.b16 %v175
  %v376 = vunpack.c.h.b16 %v175
  %v377 = vunpack.c.l.b16 %v176
  %v378 = vunpack.c.h.b16 %v176
  %v379 = vunpack.c.l.b16 %v177
  %v380 = vunpack.c.h.b16 %v177
  %v381 = vunpack.c.l.b16 %v178
  %v382 = vunpack.c.h.b16 %v178
  %v383 = vunpack.c.l.b16 %v179
  %v384 = vunpack.c.h.b16 %v179
  %v385 = vunpack.c.l.b16 %v180
  %v386 = vunpack.c.h.b16 %v180
  %v387 = vunpack.c.l.b16 %v181
  %v388 = vunpack.c.h.b16 %v181
  %v389 = vunpack.c.l.b16 %v182
  %v390 = vunpack.c.h.b16 %v182
  %v391 = vunpack.c.l.b16 %v183
  %v392 = vunpack.c.h.b16 %v183
  %v393 = vunpack.c.l.b16 %v184
  %v394 = vunpack.c.h.b16 %v184
  %v395 = vunpack.c.l.b16 %v185
  %v396 = vunpack.c.h.b16 %v185
  %v397 = vunpack.c.l.b16 %v186
  %v398 = vunpack.c.h.b16 %v186
  %v399 = vpack.c.b16 %v275, %v271
  %v400 = vpack.c.b16 %v276, %v272
  %v401 = vpack.c.b16 %v277, %v273
  %v402 = vpack.c.b16 %v278, %v274
  %v403 = vpack.c.b16 %v283, %v279
  %v404 = vpack.c.b16 %v284, %v280
  %v405 = vpack.c.b16 %v285, %v281
  %v406 = vpack.c.b16 %v286, %v282
  %v407 = vpack.c.b16 %v291, %v287
  %v408 = vpack.c.b16 %v292, %v288
  %v409 = vpack.c.b16 %v293, %v289
  %v410 = vpack.c.b16 %v294, %v290
  %v411 = vpack.c.b16 %v299, %v295
  %v412 = vpack.c.b16 %v300, %v296
  %v413 = vpack.c.b16 %v301, %v297
  %v414 = vpack.c.b16 %v302, %v298
  %v415 = vpack.c.b16 %v307, %v303
  %v416 = vpack.c.b16 %v308, %v304
  %v417 = vpack.c.b16 %v309, %v305
  %v418 = vpack.c.b16 %v310, %v306
  %v419 = vpack.c.b16 %v315, %v311
  %v420 = vpack.c.b16 %v316, %v312
  %v421 = vpack.c.b16 %v317, %v313
  %v422 = vpack.c.b16 %v318, %v314
  %v423 = vpack.c.b16 %v323, %v319
  %v424 = vpack.c.b16 %v324, %v320
  %v425 = vpack.c.b16 %v325, %v321
  %v426 = vpack.c.b16 %v326, %v322
  %v427 = vpack.c.b16 %v331, %v327
  %v428 = vpack.c.b16 %v332, %v328
  %v429 = vpack.c.b16 %v333, %v329
  %v430 = vpack.c.b16 %v334, %v330
  %v431 = vpack.c.b16 %v339, %v335
  %v432 = vpack.c.b16 %v340, %v336
  %v433 = vpack.c.b16 %v341, %v337
  %v434 = vpack.c.b16 %v342, %v338
  %v435 = vpack.c.b16 %v347, %v343
  %v436 = vpack.c.b16 %v348, %v344
  %v437 = vpack.c.b16 %v349, %v345
  %v438 = vpack.c.b16 %v350, %v346
  %v439 = vpack.c.b16 %v355, %v351
  %v440 = vpack.c.b16 %v356, %v352
  %v441 = vpack.c.b16 %v357, %v353
  %v442 = vpack.c.b16 %v358, %v354
  %v443 = vpack.c.b16 %v363, %v359
  %v444 = vpack.c.b16 %v364, %v360
  %v445 = vpack.c.b16 %v365, %v361
  %v446 = vpack.c.b16 %v366, %v362
  %v447 = vpack.c.b16 %v371, %v367
  %v448 = vpack.c.b16 %v372, %v368
  %v449 = vpack.c.b16 %v373, %v369
  %v450 = vpack.c.b16 %v374, %v370
  %v451 = vpack.c.b16 %v379, %v375
  %v452 = vpack.c.b16 %v380, %v376
  %v453 = vpack.c.b16 %v381, %v377
  %v454 = vpack.c.b16 %v382, %v378
  %v455 = vpack.c.b16 %v387, %v383
  %v456 = vpack.c.b16 %v388, %v384
  %v457 = vpack.c.b16 %v389, %v385
  %v458 = vpack.c.b16 %v390, %v386
  %v459 = vpack.c.b16 %v395, %v391
  %v460 = vpack.c.b16 %v396, %v392
  %v461 = vpack.c.b16 %v397, %v393
  %v462 = vpack.c.b16 %v398, %v394
  %527 = vmatprep.subr.bf16.mxu0 %v428
  %528 = vmatpush1.bf16.msra.mxu0 %v427
  %529 = vmatprep.subr.bf16.mxu0 %v424
  %530 = vmatpush1.bf16.msra.mxu0 %v423
  %531 = vmatprep.subr.bf16.mxu0 %v420
  %532 = vmatpush1.bf16.msra.mxu0 %v419
  %533 = vmatprep.subr.bf16.mxu0 %v416
  %534 = vmatpush1.bf16.msra.mxu0 %v415
  %535 = vmatprep.subr.bf16.mxu0 %v412
  %536 = vmatpush1.bf16.msra.mxu0 %v411
  %537 = vmatprep.subr.bf16.mxu0 %v408
  %538 = vmatpush1.bf16.msra.mxu0 %v407
  %539 = vmatprep.subr.bf16.mxu0 %v404
  %540 = vmatpush1.bf16.msra.mxu0 %v403
  %541 = vmatprep.subr.bf16.mxu0 %v400
  %542 = vmatpush1.bf16.msra.mxu0 %v399
  %543 = vmatprep.subr.bf16.mxu0 %v460
  %544 = vmatpush2.bf16.msra.mxu0 %v459
  %545 = vmatprep.subr.bf16.mxu0 %v456
  %546 = vmatpush2.bf16.msra.mxu0 %v455
  %547 = vmatprep.subr.bf16.mxu0 %v452
  %548 = vmatpush2.bf16.msra.mxu0 %v451
  %549 = vmatprep.subr.bf16.mxu0 %v448
  %550 = vmatpush2.bf16.msra.mxu0 %v447
  %551 = vmatprep.subr.bf16.mxu0 %v444
  %552 = vmatpush2.bf16.msra.mxu0 %v443
  %553 = vmatprep.subr.bf16.mxu0 %v440
  %554 = vmatpush2.bf16.msra.mxu0 %v439
  %555 = vmatprep.subr.bf16.mxu0 %v436
  %556 = vmatpush2.bf16.msra.mxu0 %v435
  %557 = vmatprep.subr.bf16.mxu0 %v432
  %558 = vmatpush2.bf16.msra.mxu0 %v431
  %559 = vmatprep.mubr.bf16.mxu0 %v200
  %560 = vmatmul.mubr.bf16.gmra.mxu0 %v199
  %v561 = vpop.f32.mrf.mxu0
  %v562 = vadd.f32 0.0, %v561
  %v563 = vpop.f32.mrf.mxu0
  %v564 = vadd.f32 0.0, %v563
  %v565 = vpop.f32.mrf.mxu0
  %v566 = vadd.f32 0.0, %v565
  %v567 = vpop.f32.mrf.mxu0
  %v568 = vadd.f32 0.0, %v567
  %569 = vmatprep.mubr.bf16.mxu0 %v202
  %570 = vmatmul.mubr.bf16.gmra.mxu0 %v201
  %v571 = vpop.f32.mrf.mxu0
  %v572 = vadd.f32 0.0, %v571
  %v573 = vpop.f32.mrf.mxu0
  %v574 = vadd.f32 0.0, %v573
  %v575 = vpop.f32.mrf.mxu0
  %v576 = vadd.f32 0.0, %v575
  %v577 = vpop.f32.mrf.mxu0
  %v578 = vadd.f32 0.0, %v577
  %579 = vdwg.mxu0
  %580 = vmatprep.subr.bf16.mxu0 %v430
  %581 = vmatpush1.bf16.msra.mxu0 %v429
  %582 = vmatprep.subr.bf16.mxu0 %v426
  %583 = vmatpush1.bf16.msra.mxu0 %v425
  %584 = vmatprep.subr.bf16.mxu0 %v422
  %585 = vmatpush1.bf16.msra.mxu0 %v421
  %586 = vmatprep.subr.bf16.mxu0 %v418
  %587 = vmatpush1.bf16.msra.mxu0 %v417
  %588 = vmatprep.subr.bf16.mxu0 %v414
  %589 = vmatpush1.bf16.msra.mxu0 %v413
  %590 = vmatprep.subr.bf16.mxu0 %v410
  %591 = vmatpush1.bf16.msra.mxu0 %v409
  %592 = vmatprep.subr.bf16.mxu0 %v406
  %593 = vmatpush1.bf16.msra.mxu0 %v405
  %594 = vmatprep.subr.bf16.mxu0 %v402
  %595 = vmatpush1.bf16.msra.mxu0 %v401
  %596 = vmatprep.subr.bf16.mxu0 %v462
  %597 = vmatpush2.bf16.msra.mxu0 %v461
  %598 = vmatprep.subr.bf16.mxu0 %v458
  %599 = vmatpush2.bf16.msra.mxu0 %v457
  %600 = vmatprep.subr.bf16.mxu0 %v454
  %601 = vmatpush2.bf16.msra.mxu0 %v453
  %602 = vmatprep.subr.bf16.mxu0 %v450
  %603 = vmatpush2.bf16.msra.mxu0 %v449
  %604 = vmatprep.subr.bf16.mxu0 %v446
  %605 = vmatpush2.bf16.msra.mxu0 %v445
  %606 = vmatprep.subr.bf16.mxu0 %v442
  %607 = vmatpush2.bf16.msra.mxu0 %v441
  %608 = vmatprep.subr.bf16.mxu0 %v438
  %609 = vmatpush2.bf16.msra.mxu0 %v437
  %610 = vmatprep.subr.bf16.mxu0 %v434
  %611 = vmatpush2.bf16.msra.mxu0 %v433
  %612 = vmatprep.mubr.bf16.mxu0 %v200
  %613 = vmatmul.mubr.bf16.gmra.mxu0 %v199
  %v614 = vpop.f32.mrf.mxu0
  %v615 = vadd.f32 0.0, %v614
  %v616 = vpop.f32.mrf.mxu0
  %v617 = vadd.f32 0.0, %v616
  %v618 = vpop.f32.mrf.mxu0
  %v619 = vadd.f32 0.0, %v618
  %v620 = vpop.f32.mrf.mxu0
  %v621 = vadd.f32 0.0, %v620
  %622 = vmatprep.mubr.bf16.mxu0 %v202
  %623 = vmatmul.mubr.bf16.gmra.mxu0 %v201
  %v624 = vpop.f32.mrf.mxu0
  %v625 = vadd.f32 0.0, %v624
  %v626 = vpop.f32.mrf.mxu0
  %v627 = vadd.f32 0.0, %v626
  %v628 = vpop.f32.mrf.mxu0
  %v629 = vadd.f32 0.0, %v628
  %v630 = vpop.f32.mrf.mxu0
  %v631 = vadd.f32 0.0, %v630
  %632 = vdwg.mxu0
  %v633 = vpack.c.bf16 %v566, %v562
  %v634 = vpack.c.bf16 %v568, %v564
  %v635 = vpack.c.bf16 %v619, %v615
  %v636 = vpack.c.bf16 %v621, %v617
  %v637 = vpack.c.bf16 %v576, %v572
  %v638 = vpack.c.bf16 %v578, %v574
  %v639 = vpack.c.bf16 %v629, %v625
  %v640 = vpack.c.bf16 %v631, %v627
  %v649 = vunpack.c.l.b16 %v633
  %v650 = vunpack.c.l.b16 %v634
  %v651 = vunpack.c.l.b16 %v635
  %v652 = vunpack.c.l.b16 %v636
  %v653 = vunpack.c.h.b16 %v633
  %v654 = vunpack.c.h.b16 %v634
  %v655 = vunpack.c.h.b16 %v635
  %v656 = vunpack.c.h.b16 %v636
  %v657 = vunpack.c.l.b16 %v637
  %v658 = vunpack.c.l.b16 %v638
  %v659 = vunpack.c.l.b16 %v639
  %v660 = vunpack.c.l.b16 %v640
  %v661 = vunpack.c.h.b16 %v637
  %v662 = vunpack.c.h.b16 %v638
  %v663 = vunpack.c.h.b16 %v639
  %v664 = vunpack.c.h.b16 %v640
  %v665 = vpack.c.b16 %v650, %v649
  %v666 = vpack.c.b16 %v652, %v651
  %v667 = vpack.c.b16 %v654, %v653
  %v668 = vpack.c.b16 %v656, %v655
  %v669 = vpack.c.b16 %v658, %v657
  %v670 = vpack.c.b16 %v660, %v659
  %v671 = vpack.c.b16 %v662, %v661
  %v672 = vpack.c.b16 %v664, %v663
  %681 = vst [vmem:[%s3] sm:$0xff] %v665
  %682 = vst [vmem:[%s3 + $0x8] sm:$0xff] %v666
  %683 = vst [vmem:[%s3 + $0x10] sm:$0xff] %v667
  %684 = vst [vmem:[%s3 + $0x18] sm:$0xff] %v668
  %685 = vst [vmem:[%s3 + $0x20] sm:$0xff] %v669
  %686 = vst [vmem:[%s3 + $0x28] sm:$0xff] %v670
  %687 = vst [vmem:[%s3 + $0x30] sm:$0xff] %v671
  %688 = vst [vmem:[%s3 + $0x38] sm:$0xff] %v672
  // Predicated region
  $region18: #{transformer_forward.9} parent=0 // pred_check
    _
  $region19: #{transformer_forward.9} parent=0 // pred_check_branch
    %690 = sbr.rel (0) target = $region21
  $region20: #{transformer_forward.9} parent=0 // pred_region
    _
  $region21: #{transformer_forward.9} parent=0 // pred_fallthru
    _
  // Predicated region
  $region22: #{transformer_forward.9} parent=0 // pred_check
    _
  $region23: #{transformer_forward.9} parent=0 // pred_check_branch
    %692 = sbr.rel (0) target = $region25
  $region24: #{transformer_forward.9} parent=0 // pred_region
    _
  $region25: #{transformer_forward.9} parent=0 // pred_fallthru
    _

// kernel: transformer_forward.10
$region0: #{transformer_forward.10}
  #allocation0 [shape = 'u32[]', space=smem, size = 0x4, offset = 0x4, fixed_abs, tag = 'smem constant byte address 0x4 - core index']
  #allocation1 [shape = 'u32[144,128]{1,0:T(1,128)}', space=vmem, size = 0x12000, scoped, tag = 'internal scratch']
  #allocation2 [shape = 'f32[32,1]{1,0:T(8,128)}', space=vmem, size = 0x4000, scoped, tag = 'scratch operand']
  #allocation3 [shape = 'f32[32,1]{1,0:T(8,128)}', space=vmem, size = 0x4000, scoped, tag = 'scratch operand']
  #allocation4 [shape = 'f32[32,64]{1,0:T(8,128)}', space=vmem, size = 0x4000, scoped, tag = 'scratch operand']
  #allocation5 [shape = 's32[1]{0}', space=sflag, size = 0x4, scoped, tag = 'scoped memory for transformer_forward.10']
  #allocation6 [shape = 's32[1]{0:T(128)S(6)}', space=smem, size = 0x200, scoped, tag = 'prefetched SMEM operand 0']
  %s0 = inlined_call_operand.<no memory space> [shape: s32[1], index: 0, kind: input, shape index: {}]
  %s1 = inlined_call_operand.vmem [shape: bf16[4,32,64], index: 1, kind: input, shape index: {}]
  %s2 = inlined_call_operand.vmem [shape: bf16[4,16,64], index: 2, kind: input, shape index: {}]
  %s3 = inlined_call_operand.vmem [shape: bf16[4,16,64], index: 3, kind: input, shape index: {}]
  %s4 = inlined_call_operand.vmem [shape: bf16[4,32,64], index: 4, kind: output, shape index: {}]
  %s5 = sld [smem:[#allocation0]]
  $region53: #{transformer_forward.10} parent=0
    _
  %s7 = ssub.s32 1, %s5
  %s8 = scalar_select 0, %s7, %s5
  %9 = sst [smem:[#allocation6]] %s0
  loop: start=0, step=1, limit=6
  $region2: #{transformer_forward.10} parent=0 // loop_pre_header
    _
  $region3: #{transformer_forward.10} parent=0 // loop_header
    %s11 = sphi 0, %s15
    %p12 = scmp.ge.s32.totalorder %s11, 6
    %s18 = sphi 0, %s37
    %s19 = sphi 0, %s33
    %s20 = sphi 0, %s29
    %s21 = sphi 0, %s18
    %s22 = sphi 0, %s19
    %s23 = sphi 0, %s20
    %s24 = sphi 0, %s21
    %s25 = sphi 0, %s22
    %s26 = sphi 0, %s23
    %s42 = sphi 0, %s44
    %s45 = sphi 0, %s42
    %s46 = sphi 0, %s45
    %s62 = sphi 0, %s46
    %s70 = sphi 0, %s72
    %s73 = sphi 0, %s70
    %s74 = sphi 0, %s73
    %s90 = sphi 0, %s74
    %s98 = sphi 0, %s100
    %s101 = sphi 0, %s98
    %s102 = sphi 0, %s101
    %s118 = sphi 0, %s102
    %s126 = sphi 0, %s128
    %s129 = sphi 0, %s126
    %s130 = sphi 0, %s129
    %s146 = sphi 0, %s130
  $region4: #{transformer_forward.10} parent=0 // loop_header_branch
    %14 = sbr.rel (%p12) target = $region8
  $region5: #{transformer_forward.10} parent=0 // loop_body
    %s16 = ssub.s32 %s11, 1
    %s17 = ssub.s32 %s11, 2
    %s27 = sadd.s32 1, %s20
    %p28 = scmp.ge.s32.totalorder %s27, 1
    %s29 = scalar_select %p28, 0, %s27
    %s30 = sadd.s32 1, %s19
    %s31 = scalar_select %p28, %s30, %s19
    %p32 = scmp.ge.s32.totalorder %s31, 1
    %s33 = scalar_select %p32, 0, %s31
    %s34 = sadd.s32 1, %s18
    %s35 = scalar_select %p32, %s34, %s18
    %p36 = scmp.ge.s32.totalorder %s35, 4
    %s37 = scalar_select %p36, 0, %s35
    %s38 = ssub.s32 %s18, %s37
    %s39 = ssub.s32 %s19, %s33
    %s40 = sor.u32 %s38, %s39
    %p41 = scmp.eq.s32.totalorder %s40, 0
    %s43 = sadd.s32 %s42, 1
    %s44 = scalar_select %p41, %s42, %s43
    %p47 = pneg %p41
    %p48 = scmp.eq.s32.totalorder %s11, 3
    %p49 = por %p47, %p48
    %p50 = scmp.ne.s32.totalorder %s42, %s45
    %p51 = scmp.eq.s32.totalorder %s11, 0
    %p52 = por %p50, %p51
    %p53 = scmp.ne.s32.totalorder %s42, %s45
    %p54 = scmp.eq.s32.totalorder %s16, 3
    %p55 = por %p53, %p54
    %p56 = scmp.ne.s32.totalorder %s45, %s46
    %p57 = scmp.eq.s32.totalorder %s16, 0
    %p58 = por %p56, %p57
    %p59 = scmp.ne.s32.totalorder %s45, %s46
    %p60 = scmp.eq.s32.totalorder %s17, 3
    %p61 = por %p59, %p60
    %p63 = scmp.ne.s32.totalorder %s46, %s62
    %p64 = scmp.eq.s32.totalorder %s17, 0
    %p65 = por %p63, %p64
    %s66 = ssub.s32 %s18, %s37
    %s67 = ssub.s32 %s20, %s29
    %s68 = sor.u32 %s66, %s67
    %p69 = scmp.eq.s32.totalorder %s68, 0
    %s71 = sadd.s32 %s70, 1
    %s72 = scalar_select %p69, %s70, %s71
    %p75 = pneg %p69
    %p76 = scmp.eq.s32.totalorder %s11, 3
    %p77 = por %p75, %p76
    %p78 = scmp.ne.s32.totalorder %s70, %s73
    %p79 = scmp.eq.s32.totalorder %s11, 0
    %p80 = por %p78, %p79
    %p81 = scmp.ne.s32.totalorder %s70, %s73
    %p82 = scmp.eq.s32.totalorder %s16, 3
    %p83 = por %p81, %p82
    %p84 = scmp.ne.s32.totalorder %s73, %s74
    %p85 = scmp.eq.s32.totalorder %s16, 0
    %p86 = por %p84, %p85
    %p87 = scmp.ne.s32.totalorder %s73, %s74
    %p88 = scmp.eq.s32.totalorder %s17, 3
    %p89 = por %p87, %p88
    %p91 = scmp.ne.s32.totalorder %s74, %s90
    %p92 = scmp.eq.s32.totalorder %s17, 0
    %p93 = por %p91, %p92
    %s94 = ssub.s32 %s18, %s37
    %s95 = ssub.s32 %s20, %s29
    %s96 = sor.u32 %s94, %s95
    %p97 = scmp.eq.s32.totalorder %s96, 0
    %s99 = sadd.s32 %s98, 1
    %s100 = scalar_select %p97, %s98, %s99
    %p103 = pneg %p97
    %p104 = scmp.eq.s32.totalorder %s11, 3
    %p105 = por %p103, %p104
    %p106 = scmp.ne.s32.totalorder %s98, %s101
    %p107 = scmp.eq.s32.totalorder %s11, 0
    %p108 = por %p106, %p107
    %p109 = scmp.ne.s32.totalorder %s98, %s101
    %p110 = scmp.eq.s32.totalorder %s16, 3
    %p111 = por %p109, %p110
    %p112 = scmp.ne.s32.totalorder %s101, %s102
    %p113 = scmp.eq.s32.totalorder %s16, 0
    %p114 = por %p112, %p113
    %p115 = scmp.ne.s32.totalorder %s101, %s102
    %p116 = scmp.eq.s32.totalorder %s17, 3
    %p117 = por %p115, %p116
    %p119 = scmp.ne.s32.totalorder %s102, %s118
    %p120 = scmp.eq.s32.totalorder %s17, 0
    %p121 = por %p119, %p120
    %s122 = ssub.s32 %s18, %s37
    %s123 = ssub.s32 %s19, %s33
    %s124 = sor.u32 %s122, %s123
    %p125 = scmp.eq.s32.totalorder %s124, 0
    %s127 = sadd.s32 %s126, 1
    %s128 = scalar_select %p125, %s126, %s127
    %p131 = pneg %p125
    %p132 = scmp.eq.s32.totalorder %s11, 3
    %p133 = por %p131, %p132
    %p134 = scmp.ne.s32.totalorder %s126, %s129
    %p135 = scmp.eq.s32.totalorder %s11, 0
    %p136 = por %p134, %p135
    %p137 = scmp.ne.s32.totalorder %s126, %s129
    %p138 = scmp.eq.s32.totalorder %s16, 3
    %p139 = por %p137, %p138
    %p140 = scmp.ne.s32.totalorder %s129, %s130
    %p141 = scmp.eq.s32.totalorder %s16, 0
    %p142 = por %p140, %p141
    %p143 = scmp.ne.s32.totalorder %s129, %s130
    %p144 = scmp.eq.s32.totalorder %s17, 3
    %p145 = por %p143, %p144
    %p147 = scmp.ne.s32.totalorder %s130, %s146
    %p148 = scmp.eq.s32.totalorder %s17, 0
    %p149 = por %p147, %p148
    %p150 = scmp.le.s32.totalorder 1, %s11
    %p151 = scmp.lt.s32.totalorder %s11, 5
    %p152 = pnand %p150, %p151
    %p153 = pneg %p152
    // Predicated region
    $region9: #{transformer_forward.10} parent=5 // pred_check
      _
    $region10: #{transformer_forward.10} parent=5 // pred_check_branch
      %155 = sbr.rel (%p152) target = $region12
    $region11: #{transformer_forward.10} parent=5 // pred_region
      %s156 = ssub.s32 %s11, 1
    $region12: #{transformer_forward.10} parent=5 // pred_fallthru
      _
    %p157 = scmp.lt.s32.totalorder %s11, 4
    // Predicated region
    $region13: #{transformer_forward.10} parent=5 // pred_check
      %p158 = pneg %p157
    $region14: #{transformer_forward.10} parent=5 // pred_check_branch
      %160 = sbr.rel (%p158) target = $region16
    $region15: #{transformer_forward.10} parent=5 // pred_region
      // Predicated region
      $region17: #{transformer_forward.10} parent=15 // pred_check
        %p161 = pneg %p52
      $region18: #{transformer_forward.10} parent=15 // pred_check_branch
        %163 = sbr.rel (%p161) target = $region20
      $region19: #{transformer_forward.10} parent=15 // pred_region
        %s164 = smul.u32 4, %s19
        %p165 = scmp.lt.s32.totalorder %s18, 3
        %s166 = scalar_select %p165, %s18, 3
        %p167 = scmp.lt.s32.totalorder %s164, 3
        %s168 = scalar_select %p167, %s164, 3
        %s169 = smul.addr %s166, 4
        %s170 = sadd.s32 %s168, %s169
        %s171 = smul.addr %s170, 4
        %s172 = scalar_lea.vmem %s1, %s171
        %s173 = smul.u32 4, %s19
      $region20: #{transformer_forward.10} parent=15 // pred_fallthru
        _
      // Predicated region
      $region21: #{transformer_forward.10} parent=15 // pred_check
        %p174 = pneg %p80
      $region22: #{transformer_forward.10} parent=15 // pred_check_branch
        %176 = sbr.rel (%p174) target = $region24
      $region23: #{transformer_forward.10} parent=15 // pred_region
        %s177 = smul.u32 2, %s20
        %p178 = scmp.lt.s32.totalorder %s18, 3
        %s179 = scalar_select %p178, %s18, 3
        %p180 = scmp.lt.s32.totalorder %s177, 1
        %s181 = scalar_select %p180, %s177, 1
        %s182 = smul.addr %s179, 2
        %s183 = sadd.s32 %s181, %s182
        %s184 = smul.addr %s183, 4
        %s185 = scalar_lea.vmem %s2, %s184
        %s186 = smul.u32 2, %s20
      $region24: #{transformer_forward.10} parent=15 // pred_fallthru
        _
      // Predicated region
      $region25: #{transformer_forward.10} parent=15 // pred_check
        %p187 = pneg %p108
      $region26: #{transformer_forward.10} parent=15 // pred_check_branch
        %189 = sbr.rel (%p187) target = $region28
      $region27: #{transformer_forward.10} parent=15 // pred_region
        %s190 = smul.u32 2, %s20
        %p191 = scmp.lt.s32.totalorder %s18, 3
        %s192 = scalar_select %p191, %s18, 3
        %p193 = scmp.lt.s32.totalorder %s190, 1
        %s194 = scalar_select %p193, %s190, 1
        %s195 = smul.addr %s192, 2
        %s196 = sadd.s32 %s194, %s195
        %s197 = smul.addr %s196, 4
        %s198 = scalar_lea.vmem %s3, %s197
        %s199 = smul.u32 2, %s20
      $region28: #{transformer_forward.10} parent=15 // pred_fallthru
        _
    $region16: #{transformer_forward.10} parent=5 // pred_fallthru
      _
    %p200 = scmp.le.s32.totalorder 1, %s11
    %p201 = scmp.lt.s32.totalorder %s11, 5
    %p202 = pnand %p200, %p201
    %p203 = pneg %p202
    // Predicated region
    $region29: #{transformer_forward.10} parent=5 // pred_check
      _
    $region30: #{transformer_forward.10} parent=5 // pred_check_branch
      %205 = sbr.rel (%p202) target = $region32
    $region31: #{transformer_forward.10} parent=5 // pred_region
      %s206 = ssub.s32 %s11, 1
      %s207 = smul.u32 4, %s22
      %p208 = scmp.lt.s32.totalorder %s21, 3
      %s209 = scalar_select %p208, %s21, 3
      %p210 = scmp.lt.s32.totalorder %s207, 3
      %s211 = scalar_select %p210, %s207, 3
      %s212 = smul.addr %s209, 4
      %s213 = sadd.s32 %s211, %s212
      %s214 = smul.addr %s213, 4
      %s215 = scalar_lea.vmem %s1, %s214
      %p216 = pneg %p58
      %p217 = pneg %p55
      %s218 = smul.u32 2, %s23
      %p219 = scmp.lt.s32.totalorder %s21, 3
      %s220 = scalar_select %p219, %s21, 3
      %p221 = scmp.lt.s32.totalorder %s218, 1
      %s222 = scalar_select %p221, %s218, 1
      %s223 = smul.addr %s220, 2
      %s224 = sadd.s32 %s222, %s223
      %s225 = smul.addr %s224, 4
      %s226 = scalar_lea.vmem %s2, %s225
      %p227 = pneg %p86
      %p228 = pneg %p83
      %s229 = smul.u32 2, %s23
      %p230 = scmp.lt.s32.totalorder %s21, 3
      %s231 = scalar_select %p230, %s21, 3
      %p232 = scmp.lt.s32.totalorder %s229, 1
      %s233 = scalar_select %p232, %s229, 1
      %s234 = smul.addr %s231, 2
      %s235 = sadd.s32 %s233, %s234
      %s236 = smul.addr %s235, 4
      %s237 = scalar_lea.vmem %s3, %s236
      %p238 = pneg %p114
      %p239 = pneg %p111
      %p240 = pneg %p142
      %p241 = pneg %p139
      %s242 = smul.u32 4, %s22
      %p243 = scmp.lt.s32.totalorder %s21, 3
      %s244 = scalar_select %p243, %s21, 3
      %p245 = scmp.lt.s32.totalorder %s242, 3
      %s246 = scalar_select %p245, %s242, 3
      %s247 = smul.addr %s244, 4
      %s248 = sadd.s32 %s246, %s247
      %s249 = smul.addr %s248, 4
      %s250 = scalar_lea.vmem %s4, %s249
      %s251 = smul.u32 4, %s22
      %p252 = scmp.lt.s32.totalorder %s21, 3
      %s253 = scalar_select %p252, %s21, 3
      %p254 = scmp.lt.s32.totalorder %s251, 3
      %s255 = scalar_select %p254, %s251, 3
      %s256 = smul.addr %s253, 4
      %s257 = sadd.s32 %s255, %s256
      %s258 = smul.addr %s257, 4
      %s259 = scalar_lea.vmem %s1, %s258
      %s260 = smul.u32 4, %s22
      %s261 = smul.u32 2, %s23
      %p262 = scmp.lt.s32.totalorder %s21, 3
      %s263 = scalar_select %p262, %s21, 3
      %p264 = scmp.lt.s32.totalorder %s261, 1
      %s265 = scalar_select %p264, %s261, 1
      %s266 = smul.addr %s263, 2
      %s267 = sadd.s32 %s265, %s266
      %s268 = smul.addr %s267, 4
      %s269 = scalar_lea.vmem %s2, %s268
      %s270 = smul.u32 2, %s23
      %s271 = smul.u32 2, %s23
      %p272 = scmp.lt.s32.totalorder %s21, 3
      %s273 = scalar_select %p272, %s21, 3
      %p274 = scmp.lt.s32.totalorder %s271, 1
      %s275 = scalar_select %p274, %s271, 1
      %s276 = smul.addr %s273, 2
      %s277 = sadd.s32 %s275, %s276
      %s278 = smul.addr %s277, 4
      %s279 = scalar_lea.vmem %s3, %s278
      %s280 = smul.u32 2, %s23
      %s281 = smul.u32 4, %s22
      %p282 = scmp.lt.s32.totalorder %s21, 3
      %s283 = scalar_select %p282, %s21, 3
      %p284 = scmp.lt.s32.totalorder %s281, 3
      %s285 = scalar_select %p284, %s281, 3
      %s286 = smul.addr %s283, 4
      %s287 = sadd.s32 %s285, %s286
      %s288 = smul.addr %s287, 4
      %s289 = scalar_lea.vmem %s4, %s288
      %s290 = smul.u32 4, %s22
      %p292 = scmp.eq.s32.totalorder %s23, 0
      // Predicated region
      $region33: #{transformer_forward.10} parent=31 // pred_check
        %p293 = pneg %p292
      $region34: #{transformer_forward.10} parent=31 // pred_check_branch
        %295 = sbr.rel (%p293) target = $region36
      $region35: #{transformer_forward.10} parent=31 // pred_region
        %vm296 = vcmask 7168
        %297 = vst.msk [vmem:[#allocation2] sm:$0xff] %vm296, -inf
        %298 = vst.msk [vmem:[#allocation2 + $0x8] sm:$0xff] %vm296, -inf
        %299 = vst.msk [vmem:[#allocation2 + $0x10] sm:$0xff] %vm296, -inf
        %300 = vst.msk [vmem:[#allocation2 + $0x18] sm:$0xff] %vm296, -inf
        %301 = vst.msk [vmem:[#allocation3] sm:$0xff] %vm296, 0.0
        %302 = vst.msk [vmem:[#allocation3 + $0x8] sm:$0xff] %vm296, 0.0
        %303 = vst.msk [vmem:[#allocation3 + $0x10] sm:$0xff] %vm296, 0.0
        %304 = vst.msk [vmem:[#allocation3 + $0x18] sm:$0xff] %vm296, 0.0
        %vm305 = vcmask 523264
        %306 = vst.msk [vmem:[#allocation4] sm:$0xff] %vm305, 0.0
        %307 = vst.msk [vmem:[#allocation4 + $0x8] sm:$0xff] %vm305, 0.0
        %308 = vst.msk [vmem:[#allocation4 + $0x10] sm:$0xff] %vm305, 0.0
        %309 = vst.msk [vmem:[#allocation4 + $0x18] sm:$0xff] %vm305, 0.0
      $region36: #{transformer_forward.10} parent=31 // pred_fallthru
        _
      %v310 = vld [vmem:[%s259] sm:$0xf]
      %v311 = vld [vmem:[%s259 + $0x4] sm:$0xf]
      %v312 = vld [vmem:[%s259 + $0x8] sm:$0xf]
      %v313 = vld [vmem:[%s259 + $0xc] sm:$0xf]
      %v314 = vld [vmem:[%s269] sm:$0xf]
      %v315 = vld [vmem:[%s269 + $0x4] sm:$0xf]
      %v316 = vld [vmem:[%s279] sm:$0xf]
      %v317 = vld [vmem:[%s279 + $0x4] sm:$0xf]
      %v322 = vunpack.c.l.b16 %v310
      %v323 = vunpack.c.l.b16 %v311
      %v324 = vunpack.c.l.b16 %v312
      %v325 = vunpack.c.l.b16 %v313
      %v326 = vpack.c.b16 %v323, %v322
      %v327 = vpack.c.b16 %v325, %v324
      %v330 = vunpack.c.l.b16 %v314
      %v331 = vunpack.c.l.b16 %v315
      %v332 = vpack.c.b16 %v331, %v330
      %vm333 = vcmask 523264
      %v335 = vsel %vm333, %v326, 0
      %v338 = vsel %vm333, %v327, 0
      %v341 = vsel %vm333, %v332, 0
      %343 = vmatprep.subr.bf16.mxu0 0
      %344 = vmatpush1.bf16.xpose.msra.mxu0 0
      %345 = vmatprep.subr.bf16.mxu0 0
      %346 = vmatpush1.bf16.xpose.msra.mxu0 0
      %347 = vmatprep.subr.bf16.mxu0 0
      %348 = vmatpush1.bf16.xpose.msra.mxu0 0
      %349 = vmatprep.subr.bf16.mxu0 0
      %350 = vmatpush1.bf16.xpose.msra.mxu0 0
      %351 = vmatprep.subr.bf16.mxu0 0
      %352 = vmatpush1.bf16.xpose.msra.mxu0 0
      %353 = vmatprep.subr.bf16.mxu0 0
      %354 = vmatpush1.bf16.xpose.msra.mxu0 0
      %355 = vmatprep.subr.bf16.mxu0 0
      %356 = vmatpush1.bf16.xpose.msra.mxu0 0
      %357 = vmatprep.subr.bf16.mxu0 0
      %358 = vmatpush1.bf16.xpose.msra.mxu0 %v341
      %359 = vmatprep.subr.bf16.mxu0 0
      %360 = vmatpush2.bf16.xpose.msra.mxu0 0
      %361 = vmatprep.subr.bf16.mxu0 0
      %362 = vmatpush2.bf16.xpose.msra.mxu0 0
      %363 = vmatprep.subr.bf16.mxu0 0
      %364 = vmatpush2.bf16.xpose.msra.mxu0 0
      %365 = vmatprep.subr.bf16.mxu0 0
      %366 = vmatpush2.bf16.xpose.msra.mxu0 0
      %367 = vmatprep.subr.bf16.mxu0 0
      %368 = vmatpush2.bf16.xpose.msra.mxu0 0
      %369 = vmatprep.subr.bf16.mxu0 0
      %370 = vmatpush2.bf16.xpose.msra.mxu0 0
      %371 = vmatprep.subr.bf16.mxu0 0
      %372 = vmatpush2.bf16.xpose.msra.mxu0 0
      %373 = vmatprep.subr.bf16.mxu0 0
      %374 = vmatpush2.bf16.xpose.msra.mxu0 0
      %375 = vmatprep.mubr.bf16.mxu0 0
      %376 = vmatmul.mubr.bf16.gmra.mxu0 %v335
      %v377 = vpop.f32.mrf.mxu0
      %v378 = vadd.f32 0.0, %v377
      %v379 = vpop.f32.mrf.mxu0
      %v380 = vpop.f32.mrf.mxu0
      %v381 = vadd.f32 0.0, %v380
      %v382 = vpop.f32.mrf.mxu0
      %383 = vmatprep.mubr.bf16.mxu0 0
      %384 = vmatmul.mubr.bf16.gmra.mxu0 %v338
      %v385 = vpop.f32.mrf.mxu0
      %v386 = vadd.f32 0.0, %v385
      %v387 = vpop.f32.mrf.mxu0
      %v388 = vpop.f32.mrf.mxu0
      %v389 = vadd.f32 0.0, %v388
      %v390 = vpop.f32.mrf.mxu0
      %391 = vdwg.mxu0
      %v392 = vmul.f32 %v378, 0.125
      %v393 = vmul.f32 %v381, 0.125
      %v394 = vmul.f32 %v386, 0.125
      %v395 = vmul.f32 %v389, 0.125
      %s396 = sld [smem:[#allocation6]]
      %v397 = vlaneseq
      %v398 = vshrl.u32 %v397, 7
      %v399 = vadd.s32 %v398, 8
      %v400 = vadd.s32 %v398, 16
      %v401 = vadd.s32 %v398, 24
      %s402 = smul.u32 %s22, 32
      %v403 = vstv %s402
      %v404 = vadd.s32 %v398, %v403
      %v405 = vadd.s32 %v399, %v403
      %v406 = vadd.s32 %v400, %v403
      %v407 = vadd.s32 %v401, %v403
      %vm408 = vcmp.lt.s32.totalorder %v404, 0
      %v409 = vsub.s32 0, %v404
      %v410 = vsel %vm408, %v409, %v404
      %v411 = vshrl.u32 %v410, 4
      %v412 = vand.u32 %v410, 15
      %v413 = vsub.s32 0, %v412
      %v414 = vsel %vm408, %v413, %v412
      %vm415 = vcmp.lt.s32.totalorder %v405, 0
      %v416 = vsub.s32 0, %v405
      %v417 = vsel %vm415, %v416, %v405
      %v418 = vshrl.u32 %v417, 4
      %v419 = vand.u32 %v417, 15
      %v420 = vsub.s32 0, %v419
      %v421 = vsel %vm415, %v420, %v419
      %vm422 = vcmp.lt.s32.totalorder %v406, 0
      %v423 = vsub.s32 0, %v406
      %v424 = vsel %vm422, %v423, %v406
      %v425 = vshrl.u32 %v424, 4
      %v426 = vand.u32 %v424, 15
      %v427 = vsub.s32 0, %v426
      %v428 = vsel %vm422, %v427, %v426
      %vm429 = vcmp.lt.s32.totalorder %v407, 0
      %v430 = vsub.s32 0, %v407
      %v431 = vsel %vm429, %v430, %v407
      %v432 = vshrl.u32 %v431, 4
      %v433 = vand.u32 %v431, 15
      %v434 = vsub.s32 0, %v433
      %v435 = vsel %vm429, %v434, %v433
      %vm436 = vcmp.ne.s32.totalorder %v414, 0
      %vm437 = vcmp.ne.s32.totalorder %v421, 0
      %vm438 = vcmp.ne.s32.totalorder %v428, 0
      %vm439 = vcmp.ne.s32.totalorder %v435, 0
      %vm440 = vcmp.lt.s32.totalorder %v414, 0
      %vm441 = vcmp.lt.s32.totalorder %v421, 0
      %vm442 = vcmp.lt.s32.totalorder %v428, 0
      %vm443 = vcmp.lt.s32.totalorder %v435, 0
      %vm444 = vmand %vm440, %vm436
      %vm445 = vmand %vm441, %vm437
      %vm446 = vmand %vm442, %vm438
      %vm447 = vmand %vm443, %vm439
      %v448 = vadd.s32 %v414, 16
      %v449 = vadd.s32 %v421, 16
      %v450 = vadd.s32 %v428, 16
      %v451 = vadd.s32 %v435, 16
      %v452 = vsel %vm444, %v448, %v414
      %v453 = vsel %vm445, %v449, %v421
      %v454 = vsel %vm446, %v450, %v428
      %v455 = vsel %vm447, %v451, %v435
      %v456 = vstv %s396
      %v457 = vadd.s32 %v452, %v456
      %v458 = vadd.s32 %v453, %v456
      %v459 = vadd.s32 %v454, %v456
      %v460 = vadd.s32 %v455, %v456
      %v461 = vlaneseq
      %v462 = vand.u32 %v461, 127
      %s463 = smul.u32 %s23, 16
      %v464 = vstv %s463
      %v465 = vadd.s32 %v462, %v464
      %v466 = vadd.s32 %v465, %v456
      %vm467 = vcmp.le.s32.totalorder %v466, %v457
      %vm468 = vcmp.le.s32.totalorder %v466, %v458
      %vm469 = vcmp.le.s32.totalorder %v466, %v459
      %vm470 = vcmp.le.s32.totalorder %v466, %v460
      %v471 = vsel %vm467, %v392, -1e+30
      %v472 = vsel %vm468, %v393, -1e+30
      %v473 = vsel %vm469, %v394, -1e+30
      %v474 = vsel %vm470, %v395, -1e+30
      %v475 = vld [vmem:[#allocation2] sm:$0xff]
      %v476 = vld [vmem:[#allocation2 + $0x8] sm:$0xff]
      %v477 = vld [vmem:[#allocation2 + $0x10] sm:$0xff]
      %v478 = vld [vmem:[#allocation2 + $0x18] sm:$0xff]
      %vm479 = vcmask 130048
      %v480 = vsel %vm479, %v471, -inf
      %481 = vmax.xlane.f32.xlu0 %v480
      %v482 = vpop.xlane.xlu0 %481
      %v483 = vsel %vm479, %v472, -inf
      %484 = vmax.xlane.f32.xlu0 %v483
      %v485 = vpop.xlane.xlu0 %484
      %v486 = vsel %vm479, %v473, -inf
      %487 = vmax.xlane.f32.xlu0 %v486
      %v488 = vpop.xlane.xlu0 %487
      %v489 = vsel %vm479, %v474, -inf
      %490 = vmax.xlane.f32.xlu0 %v489
      %v491 = vpop.xlane.xlu0 %490
      %v492 = vmax.f32 %v475, %v482
      %v493 = vmax.f32 %v476, %v485
      %v494 = vmax.f32 %v477, %v488
      %v495 = vmax.f32 %v478, %v491
      %v496 = vsub.f32 %v475, %v492
      %v497 = vsub.f32 %v476, %v493
      %v498 = vsub.f32 %v477, %v494
      %v499 = vsub.f32 %v478, %v495
      %v500 = vmul.f32 %v496, 1.442695
      %v501 = vpow.pop %v500
      %v502 = vmul.f32 %v497, 1.442695
      %v503 = vpow.pop %v502
      %v504 = vmul.f32 %v498, 1.442695
      %v505 = vpow.pop %v504
      %v506 = vmul.f32 %v499, 1.442695
      %v507 = vpow.pop %v506
      %509 = vset.pattern.permute.xlu0 0
      %510 = vperm.xlu0 %509, %v492
      %v511 = vpop.permute.xlu0 %510
      %514 = vset.pattern.permute.xlu0 0
      %515 = vperm.xlu0 %514, %v493
      %v516 = vpop.permute.xlu0 %515
      %519 = vset.pattern.permute.xlu0 0
      %520 = vperm.xlu0 %519, %v494
      %v521 = vpop.permute.xlu0 %520
      %524 = vset.pattern.permute.xlu0 0
      %525 = vperm.xlu0 %524, %v495
      %v526 = vpop.permute.xlu0 %525
      %v528 = vsub.f32 %v471, %v511
      %v529 = vsub.f32 %v472, %v516
      %v530 = vsub.f32 %v473, %v521
      %v531 = vsub.f32 %v474, %v526
      %v532 = vmul.f32 %v528, 1.442695
      %v533 = vpow.pop %v532
      %v534 = vmul.f32 %v529, 1.442695
      %v535 = vpow.pop %v534
      %v536 = vmul.f32 %v530, 1.442695
      %v537 = vpow.pop %v536
      %v538 = vmul.f32 %v531, 1.442695
      %v539 = vpow.pop %v538
      %v540 = vld [vmem:[#allocation3] sm:$0xff]
      %v541 = vld [vmem:[#allocation3 + $0x8] sm:$0xff]
      %v542 = vld [vmem:[#allocation3 + $0x10] sm:$0xff]
      %v543 = vld [vmem:[#allocation3 + $0x18] sm:$0xff]
      %v544 = vmul.f32 %v501, %v540
      %v545 = vmul.f32 %v503, %v541
      %v546 = vmul.f32 %v505, %v542
      %v547 = vmul.f32 %v507, %v543
      %v548 = vsel %vm479, %v533, 0.0
      %549 = vadd.xlane.f32.xlu0 %v548
      %v550 = vpop.xlane.xlu0 %549
      %v551 = vsel %vm479, %v535, 0.0
      %552 = vadd.xlane.f32.xlu0 %v551
      %v553 = vpop.xlane.xlu0 %552
      %v554 = vsel %vm479, %v537, 0.0
      %555 = vadd.xlane.f32.xlu0 %v554
      %v556 = vpop.xlane.xlu0 %555
      %v557 = vsel %vm479, %v539, 0.0
      %558 = vadd.xlane.f32.xlu0 %v557
      %v559 = vpop.xlane.xlu0 %558
      %v560 = vadd.f32 %v544, %v550
      %v561 = vadd.f32 %v545, %v553
      %v562 = vadd.f32 %v546, %v556
      %v563 = vadd.f32 %v547, %v559
      %vm564 = vcmask 7168
      %565 = vst.msk [vmem:[#allocation3] sm:$0xff] %vm564, %v560
      %566 = vst.msk [vmem:[#allocation3 + $0x8] sm:$0xff] %vm564, %v561
      %567 = vst.msk [vmem:[#allocation3 + $0x10] sm:$0xff] %vm564, %v562
      %568 = vst.msk [vmem:[#allocation3 + $0x18] sm:$0xff] %vm564, %v563
      %v569 = vld [vmem:[#allocation4] sm:$0xff]
      %v570 = vld [vmem:[#allocation4 + $0x8] sm:$0xff]
      %v571 = vld [vmem:[#allocation4 + $0x10] sm:$0xff]
      %v572 = vld [vmem:[#allocation4 + $0x18] sm:$0xff]
      %574 = vset.pattern.permute.xlu0 0
      %575 = vperm.xlu0 %574, %v501
      %v576 = vpop.permute.xlu0 %575
      %579 = vset.pattern.permute.xlu0 0
      %580 = vperm.xlu0 %579, %v503
      %v581 = vpop.permute.xlu0 %580
      %584 = vset.pattern.permute.xlu0 0
      %585 = vperm.xlu0 %584, %v505
      %v586 = vpop.permute.xlu0 %585
      %589 = vset.pattern.permute.xlu0 0
      %590 = vperm.xlu0 %589, %v507
      %v591 = vpop.permute.xlu0 %590
      %v593 = vmul.f32 %v576, %v569
      %v594 = vmul.f32 %v581, %v570
      %v595 = vmul.f32 %v586, %v571
      %v596 = vmul.f32 %v591, %v572
      %v597 = vpack.c.bf16 %v535, %v533
      %v598 = vpack.c.bf16 %v539, %v537
      %v601 = vunpack.c.l.b16 %v316
      %v602 = vunpack.c.l.b16 %v317
      %v603 = vpack.c.b16 %v602, %v601
      %v606 = vsel %vm479, %v597, 0
      %v609 = vsel %vm479, %v598, 0
      %611 = vmatprep.subr.bf16.mxu0 0
      %612 = vmatpush1.bf16.msra.mxu0 0
      %613 = vmatprep.subr.bf16.mxu0 0
      %614 = vmatpush1.bf16.msra.mxu0 0
      %615 = vmatprep.subr.bf16.mxu0 0
      %616 = vmatpush1.bf16.msra.mxu0 0
      %617 = vmatprep.subr.bf16.mxu0 0
      %618 = vmatpush1.bf16.msra.mxu0 0
      %619 = vmatprep.subr.bf16.mxu0 0
      %620 = vmatpush1.bf16.msra.mxu0 0
      %621 = vmatprep.subr.bf16.mxu0 0
      %622 = vmatpush1.bf16.msra.mxu0 0
      %623 = vmatprep.subr.bf16.mxu0 0
      %624 = vmatpush1.bf16.msra.mxu0 0
      %625 = vmatprep.subr.bf16.mxu0 0
      %626 = vmatpush1.bf16.msra.mxu0 %v603
      %627 = vmatprep.subr.bf16.mxu0 0
      %628 = vmatpush2.bf16.msra.mxu0 0
      %629 = vmatprep.subr.bf16.mxu0 0
      %630 = vmatpush2.bf16.msra.mxu0 0
      %631 = vmatprep.subr.bf16.mxu0 0
      %632 = vmatpush2.bf16.msra.mxu0 0
      %633 = vmatprep.subr.bf16.mxu0 0
      %634 = vmatpush2.bf16.msra.mxu0 0
      %635 = vmatprep.subr.bf16.mxu0 0
      %636 = vmatpush2.bf16.msra.mxu0 0
      %637 = vmatprep.subr.bf16.mxu0 0
      %638 = vmatpush2.bf16.msra.mxu0 0
      %639 = vmatprep.subr.bf16.mxu0 0
      %640 = vmatpush2.bf16.msra.mxu0 0
      %641 = vmatprep.subr.bf16.mxu0 0
      %642 = vmatpush2.bf16.msra.mxu0 0
      %643 = vmatprep.mubr.bf16.mxu0 0
      %644 = vmatmul.mubr.bf16.gmra.mxu0 %v606
      %v645 = vpop.f32.mrf.mxu0
      %v646 = vadd.f32 0.0, %v645
      %v647 = vpop.f32.mrf.mxu0
      %v648 = vpop.f32.mrf.mxu0
      %v649 = vadd.f32 0.0, %v648
      %v650 = vpop.f32.mrf.mxu0
      %651 = vmatprep.mubr.bf16.mxu0 0
      %652 = vmatmul.mubr.bf16.gmra.mxu0 %v609
      %v653 = vpop.f32.mrf.mxu0
      %v654 = vadd.f32 0.0, %v653
      %v655 = vpop.f32.mrf.mxu0
      %v656 = vpop.f32.mrf.mxu0
      %v657 = vadd.f32 0.0, %v656
      %v658 = vpop.f32.mrf.mxu0
      %659 = vdwg.mxu0
      %v660 = vadd.f32 %v593, %v646
      %v661 = vadd.f32 %v594, %v649
      %v662 = vadd.f32 %v595, %v654
      %v663 = vadd.f32 %v596, %v657
      %664 = vst.msk [vmem:[#allocation4] sm:$0xff] %vm333, %v660
      %665 = vst.msk [vmem:[#allocation4 + $0x8] sm:$0xff] %vm333, %v661
      %666 = vst.msk [vmem:[#allocation4 + $0x10] sm:$0xff] %vm333, %v662
      %667 = vst.msk [vmem:[#allocation4 + $0x18] sm:$0xff] %vm333, %v663
      %668 = vst.msk [vmem:[#allocation2] sm:$0xff] %vm564, %v492
      %669 = vst.msk [vmem:[#allocation2 + $0x8] sm:$0xff] %vm564, %v493
      %670 = vst.msk [vmem:[#allocation2 + $0x10] sm:$0xff] %vm564, %v494
      %671 = vst.msk [vmem:[#allocation2 + $0x18] sm:$0xff] %vm564, %v495
      // Predicated region
      $region37: #{transformer_forward.10} parent=31 // pred_check
        %p672 = pneg %p292
      $region38: #{transformer_forward.10} parent=31 // pred_check_branch
        %674 = sbr.rel (%p672) target = $region40
      $region39: #{transformer_forward.10} parent=31 // pred_region
        %v675 = vld [vmem:[#allocation4] sm:$0xff]
        %v676 = vld [vmem:[#allocation4 + $0x8] sm:$0xff]
        %v677 = vld [vmem:[#allocation4 + $0x10] sm:$0xff]
        %v678 = vld [vmem:[#allocation4 + $0x18] sm:$0xff]
        %v679 = vld [vmem:[#allocation3] sm:$0xff]
        %v680 = vld [vmem:[#allocation3 + $0x8] sm:$0xff]
        %v681 = vld [vmem:[#allocation3 + $0x10] sm:$0xff]
        %v682 = vld [vmem:[#allocation3 + $0x18] sm:$0xff]
        %v683 = vrcp.pop %v679
        %v684 = vrcp.pop %v680
        %v685 = vrcp.pop %v681
        %v686 = vrcp.pop %v682
        %688 = vset.pattern.permute.xlu0 0
        %689 = vperm.xlu0 %688, %v683
        %v690 = vpop.permute.xlu0 %689
        %693 = vset.pattern.permute.xlu0 0
        %694 = vperm.xlu0 %693, %v684
        %v695 = vpop.permute.xlu0 %694
        %698 = vset.pattern.permute.xlu0 0
        %699 = vperm.xlu0 %698, %v685
        %v700 = vpop.permute.xlu0 %699
        %703 = vset.pattern.permute.xlu0 0
        %704 = vperm.xlu0 %703, %v686
        %v705 = vpop.permute.xlu0 %704
        %v707 = vmul.f32 %v675, %v690
        %v708 = vmul.f32 %v676, %v695
        %v709 = vmul.f32 %v677, %v700
        %v710 = vmul.f32 %v678, %v705
        %v711 = vpack.c.bf16 %v708, %v707
        %v712 = vpack.c.bf16 %v710, %v709
        %v715 = vunpack.c.l.b16 %v711
        %v716 = vunpack.c.h.b16 %v711
        %v717 = vunpack.c.l.b16 %v712
        %v718 = vunpack.c.h.b16 %v712
        %v719 = vpack.c.b16 %v715, %v715
        %v720 = vpack.c.b16 %v716, %v716
        %v721 = vpack.c.b16 %v717, %v717
        %v722 = vpack.c.b16 %v718, %v718
        %vm727 = vcmask 519168
        %728 = vst.msk [vmem:[%s289] sm:$0xf] %vm727, %v719
        %729 = vst.msk [vmem:[%s289 + $0x4] sm:$0xf] %vm727, %v720
        %730 = vst.msk [vmem:[%s289 + $0x8] sm:$0xf] %vm727, %v721
        %731 = vst.msk [vmem:[%s289 + $0xc] sm:$0xf] %vm727, %v722
      $region40: #{transformer_forward.10} parent=31 // pred_fallthru
        _
      %s732 = smul.u32 4, %s22
      %p733 = scmp.lt.s32.totalorder %s21, 3
      %s734 = scalar_select %p733, %s21, 3
      %p735 = scmp.lt.s32.totalorder %s732, 3
      %s736 = scalar_select %p735, %s732, 3
      %s737 = smul.addr %s734, 4
      %s738 = sadd.s32 %s736, %s737
      %s739 = smul.addr %s738, 4
      %s740 = scalar_lea.vmem %s4, %s739
      // Predicated region
      $region41: #{transformer_forward.10} parent=31 // pred_check
        %p741 = pneg %p139
      $region42: #{transformer_forward.10} parent=31 // pred_check_branch
        %743 = sbr.rel (%p741) target = $region44
      $region43: #{transformer_forward.10} parent=31 // pred_region
        %s744 = smul.u32 4, %s22
      $region44: #{transformer_forward.10} parent=31 // pred_fallthru
        _
    $region32: #{transformer_forward.10} parent=5 // pred_fallthru
      _
    %p745 = scmp.le.s32.totalorder 2, %s11
    // Predicated region
    $region45: #{transformer_forward.10} parent=5 // pred_check
      %p746 = pneg %p745
    $region46: #{transformer_forward.10} parent=5 // pred_check_branch
      %748 = sbr.rel (%p746) target = $region48
    $region47: #{transformer_forward.10} parent=5 // pred_region
      %s749 = ssub.s32 %s11, 2
      // Predicated region
      $region49: #{transformer_forward.10} parent=47 // pred_check
        %p750 = pneg %p145
      $region50: #{transformer_forward.10} parent=47 // pred_check_branch
        %752 = sbr.rel (%p750) target = $region52
      $region51: #{transformer_forward.10} parent=47 // pred_region
        %s753 = smul.u32 4, %s25
        %p754 = scmp.lt.s32.totalorder %s24, 3
        %s755 = scalar_select %p754, %s24, 3
        %p756 = scmp.lt.s32.totalorder %s753, 3
        %s757 = scalar_select %p756, %s753, 3
        %s758 = smul.addr %s755, 4
        %s759 = sadd.s32 %s757, %s758
        %s760 = smul.addr %s759, 4
        %s761 = scalar_lea.vmem %s4, %s760
      $region52: #{transformer_forward.10} parent=47 // pred_fallthru
        _
    $region48: #{transformer_forward.10} parent=5 // pred_fallthru
      _
  $region6: #{transformer_forward.10} parent=0 // loop_footer
    %s15 = sadd.s32 1, %s11
  $region7: #{transformer_forward.10} parent=0 // loop_footer_branch
    %10 = sbr.rel target = $region3
  $region8: #{transformer_forward.10} parent=0 // loop_exit
    _

// kernel: transformer_forward.11
$region0: #{transformer_forward.11}
  #allocation0 [shape = 'u32[]', space=smem, size = 0x4, offset = 0x4, fixed_abs, tag = 'smem constant byte address 0x4 - core index']
  #allocation1 [shape = 'u32[144,128]{1,0:T(1,128)}', space=vmem, size = 0x12000, scoped, tag = 'internal scratch']
  #allocation2 [shape = 'f32[32,256]{1,0:T(8,128)}', space=vmem, size = 0x8000, scoped, tag = 'scratch operand']
  %s0 = inlined_call_operand.vmem [shape: bf16[32,256], index: 0, kind: input, shape index: {}]
  %s1 = inlined_call_operand.vmem [shape: bf16[256,256], index: 1, kind: input, shape index: {}]
  %s2 = inlined_call_operand.vmem [shape: bf16[32,256], index: 2, kind: input, shape index: {}]
  %s3 = inlined_call_operand.vmem [shape: bf16[32,256], index: 3, kind: output, shape index: {}]
  %s4 = sld [smem:[#allocation0]]
  $region30: #{transformer_forward.11} parent=0
    _
  %s6 = ssub.s32 1, %s4
  %s7 = scalar_select 0, %s6, %s4
  // Predicated region
  $region2: #{transformer_forward.11} parent=0 // pred_check
    _
  $region3: #{transformer_forward.11} parent=0 // pred_check_branch
    %9 = sbr.rel (0) target = $region5
  $region4: #{transformer_forward.11} parent=0 // pred_region
    _
  $region5: #{transformer_forward.11} parent=0 // pred_fallthru
    _
  // Predicated region
  $region6: #{transformer_forward.11} parent=0 // pred_check
    _
  $region7: #{transformer_forward.11} parent=0 // pred_check_branch
    %11 = sbr.rel (0) target = $region9
  $region8: #{transformer_forward.11} parent=0 // pred_region
    _
  $region9: #{transformer_forward.11} parent=0 // pred_fallthru
    _
  // Predicated region
  $region10: #{transformer_forward.11} parent=0 // pred_check
    _
  $region11: #{transformer_forward.11} parent=0 // pred_check_branch
    %13 = sbr.rel (0) target = $region13
  $region12: #{transformer_forward.11} parent=0 // pred_region
    _
  $region13: #{transformer_forward.11} parent=0 // pred_fallthru
    _
  %p14 = scmp.eq.s32.totalorder 0, 0
  // Predicated region
  $region14: #{transformer_forward.11} parent=0 // pred_check
    %p15 = pneg %p14
  $region15: #{transformer_forward.11} parent=0 // pred_check_branch
    %17 = sbr.rel (%p15) target = $region17
  $region16: #{transformer_forward.11} parent=0 // pred_region
    %18 = vst [vmem:[#allocation2] sm:$0xff] 0.0
    %19 = vst [vmem:[#allocation2 + $0x8] sm:$0xff] 0.0
    %20 = vst [vmem:[#allocation2 + $0x10] sm:$0xff] 0.0
    %21 = vst [vmem:[#allocation2 + $0x18] sm:$0xff] 0.0
    %22 = vst [vmem:[#allocation2 + $0x20] sm:$0xff] 0.0
    %23 = vst [vmem:[#allocation2 + $0x28] sm:$0xff] 0.0
    %24 = vst [vmem:[#allocation2 + $0x30] sm:$0xff] 0.0
    %25 = vst [vmem:[#allocation2 + $0x38] sm:$0xff] 0.0
  $region17: #{transformer_forward.11} parent=0 // pred_fallthru
    _
  %v26 = vld [vmem:[#allocation2] sm:$0xff]
  %v27 = vld [vmem:[#allocation2 + $0x8] sm:$0xff]
  %v28 = vld [vmem:[#allocation2 + $0x10] sm:$0xff]
  %v29 = vld [vmem:[#allocation2 + $0x18] sm:$0xff]
  %v30 = vld [vmem:[#allocation2 + $0x20] sm:$0xff]
  %v31 = vld [vmem:[#allocation2 + $0x28] sm:$0xff]
  %v32 = vld [vmem:[#allocation2 + $0x30] sm:$0xff]
  %v33 = vld [vmem:[#allocation2 + $0x38] sm:$0xff]
  %v34 = vld [vmem:[%s0] sm:$0xff]
  %v35 = vld [vmem:[%s0 + $0x8] sm:$0xff]
  %v36 = vld [vmem:[%s0 + $0x10] sm:$0xff]
  %v37 = vld [vmem:[%s0 + $0x18] sm:$0xff]
  %v38 = vld [vmem:[%s1] sm:$0xff]
  %v39 = vld [vmem:[%s1 + $0x8] sm:$0xff]
  %v40 = vld [vmem:[%s1 + $0x10] sm:$0xff]
  %v41 = vld [vmem:[%s1 + $0x18] sm:$0xff]
  %v42 = vld [vmem:[%s1 + $0x20] sm:$0xff]
  %v43 = vld [vmem:[%s1 + $0x28] sm:$0xff]
  %v44 = vld [vmem:[%s1 + $0x30] sm:$0xff]
  %v45 = vld [vmem:[%s1 + $0x38] sm:$0xff]
  %v46 = vld [vmem:[%s1 + $0x40] sm:$0xff]
  %v47 = vld [vmem:[%s1 + $0x48] sm:$0xff]
  %v48 = vld [vmem:[%s1 + $0x50] sm:$0xff]
  %v49 = vld [vmem:[%s1 + $0x58] sm:$0xff]
  %v50 = vld [vmem:[%s1 + $0x60] sm:$0xff]
  %v51 = vld [vmem:[%s1 + $0x68] sm:$0xff]
  %v52 = vld [vmem:[%s1 + $0x70] sm:$0xff]
  %v53 = vld [vmem:[%s1 + $0x78] sm:$0xff]
  %v54 = vld [vmem:[%s1 + $0x80] sm:$0xff]
  %v55 = vld [vmem:[%s1 + $0x88] sm:$0xff]
  %v56 = vld [vmem:[%s1 + $0x90] sm:$0xff]
  %v57 = vld [vmem:[%s1 + $0x98] sm:$0xff]
  %v58 = vld [vmem:[%s1 + $0xa0] sm:$0xff]
  %v59 = vld [vmem:[%s1 + $0xa8] sm:$0xff]
  %v60 = vld [vmem:[%s1 + $0xb0] sm:$0xff]
  %v61 = vld [vmem:[%s1 + $0xb8] sm:$0xff]
  %v62 = vld [vmem:[%s1 + $0xc0] sm:$0xff]
  %v63 = vld [vmem:[%s1 + $0xc8] sm:$0xff]
  %v64 = vld [vmem:[%s1 + $0xd0] sm:$0xff]
  %v65 = vld [vmem:[%s1 + $0xd8] sm:$0xff]
  %v66 = vld [vmem:[%s1 + $0xe0] sm:$0xff]
  %v67 = vld [vmem:[%s1 + $0xe8] sm:$0xff]
  %v68 = vld [vmem:[%s1 + $0xf0] sm:$0xff]
  %v69 = vld [vmem:[%s1 + $0xf8] sm:$0xff]
  %v74 = vunpack.c.l.b16 %v34
  %v75 = vunpack.c.h.b16 %v34
  %v76 = vunpack.c.l.b16 %v35
  %v77 = vunpack.c.h.b16 %v35
  %v78 = vunpack.c.l.b16 %v36
  %v79 = vunpack.c.h.b16 %v36
  %v80 = vunpack.c.l.b16 %v37
  %v81 = vunpack.c.h.b16 %v37
  %v82 = vpack.c.b16 %v76, %v74
  %v83 = vpack.c.b16 %v77, %v75
  %v84 = vpack.c.b16 %v80, %v78
  %v85 = vpack.c.b16 %v81, %v79
  %v122 = vunpack.c.l.b16 %v38
  %v123 = vunpack.c.h.b16 %v38
  %v124 = vunpack.c.l.b16 %v39
  %v125 = vunpack.c.h.b16 %v39
  %v126 = vunpack.c.l.b16 %v40
  %v127 = vunpack.c.h.b16 %v40
  %v128 = vunpack.c.l.b16 %v41
  %v129 = vunpack.c.h.b16 %v41
  %v130 = vunpack.c.l.b16 %v42
  %v131 = vunpack.c.h.b16 %v42
  %v132 = vunpack.c.l.b16 %v43
  %v133 = vunpack.c.h.b16 %v43
  %v134 = vunpack.c.l.b16 %v44
  %v135 = vunpack.c.h.b16 %v44
  %v136 = vunpack.c.l.b16 %v45
  %v137 = vunpack.c.h.b16 %v45
  %v138 = vunpack.c.l.b16 %v46
  %v139 = vunpack.c.h.b16 %v46
  %v140 = vunpack.c.l.b16 %v47
  %v141 = vunpack.c.h.b16 %v47
  %v142 = vunpack.c.l.b16 %v48
  %v143 = vunpack.c.h.b16 %v48
  %v144 = vunpack.c.l.b16 %v49
  %v145 = vunpack.c.h.b16 %v49
  %v146 = vunpack.c.l.b16 %v50
  %v147 = vunpack.c.h.b16 %v50
  %v148 = vunpack.c.l.b16 %v51
  %v149 = vunpack.c.h.b16 %v51
  %v150 = vunpack.c.l.b16 %v52
  %v151 = vunpack.c.h.b16 %v52
  %v152 = vunpack.c.l.b16 %v53
  %v153 = vunpack.c.h.b16 %v53
  %v154 = vunpack.c.l.b16 %v54
  %v155 = vunpack.c.h.b16 %v54
  %v156 = vunpack.c.l.b16 %v55
  %v157 = vunpack.c.h.b16 %v55
  %v158 = vunpack.c.l.b16 %v56
  %v159 = vunpack.c.h.b16 %v56
  %v160 = vunpack.c.l.b16 %v57
  %v161 = vunpack.c.h.b16 %v57
  %v162 = vunpack.c.l.b16 %v58
  %v163 = vunpack.c.h.b16 %v58
  %v164 = vunpack.c.l.b16 %v59
  %v165 = vunpack.c.h.b16 %v59
  %v166 = vunpack.c.l.b16 %v60
  %v167 = vunpack.c.h.b16 %v60
  %v168 = vunpack.c.l.b16 %v61
  %v169 = vunpack.c.h.b16 %v61
  %v170 = vunpack.c.l.b16 %v62
  %v171 = vunpack.c.h.b16 %v62
  %v172 = vunpack.c.l.b16 %v63
  %v173 = vunpack.c.h.b16 %v63
  %v174 = vunpack.c.l.b16 %v64
  %v175 = vunpack.c.h.b16 %v64
  %v176 = vunpack.c.l.b16 %v65
  %v177 = vunpack.c.h.b16 %v65
  %v178 = vunpack.c.l.b16 %v66
  %v179 = vunpack.c.h.b16 %v66
  %v180 = vunpack.c.l.b16 %v67
  %v181 = vunpack.c.h.b16 %v67
  %v182 = vunpack.c.l.b16 %v68
  %v183 = vunpack.c.h.b16 %v68
  %v184 = vunpack.c.l.b16 %v69
  %v185 = vunpack.c.h.b16 %v69
  %v186 = vpack.c.b16 %v124, %v122
  %v187 = vpack.c.b16 %v125, %v123
  %v188 = vpack.c.b16 %v128, %v126
  %v189 = vpack.c.b16 %v129, %v127
  %v190 = vpack.c.b16 %v132, %v130
  %v191 = vpack.c.b16 %v133, %v131
  %v192 = vpack.c.b16 %v136, %v134
  %v193 = vpack.c.b16 %v137, %v135
  %v194 = vpack.c.b16 %v140, %v138
  %v195 = vpack.c.b16 %v141, %v139
  %v196 = vpack.c.b16 %v144, %v142
  %v197 = vpack.c.b16 %v145, %v143
  %v198 = vpack.c.b16 %v148, %v146
  %v199 = vpack.c.b16 %v149, %v147
  %v200 = vpack.c.b16 %v152, %v150
  %v201 = vpack.c.b16 %v153, %v151
  %v202 = vpack.c.b16 %v156, %v154
  %v203 = vpack.c.b16 %v157, %v155
  %v204 = vpack.c.b16 %v160, %v158
  %v205 = vpack.c.b16 %v161, %v159
  %v206 = vpack.c.b16 %v164, %v162
  %v207 = vpack.c.b16 %v165, %v163
  %v208 = vpack.c.b16 %v168, %v166
  %v209 = vpack.c.b16 %v169, %v167
  %v210 = vpack.c.b16 %v172, %v170
  %v211 = vpack.c.b16 %v173, %v171
  %v212 = vpack.c.b16 %v176, %v174
  %v213 = vpack.c.b16 %v177, %v175
  %v214 = vpack.c.b16 %v180, %v178
  %v215 = vpack.c.b16 %v181, %v179
  %v216 = vpack.c.b16 %v184, %v182
  %v217 = vpack.c.b16 %v185, %v183
  %250 = vmatprep.subr.bf16.mxu0 %v201
  %251 = vmatpush1.bf16.msra.mxu0 %v200
  %252 = vmatprep.subr.bf16.mxu0 %v199
  %253 = vmatpush1.bf16.msra.mxu0 %v198
  %254 = vmatprep.subr.bf16.mxu0 %v197
  %255 = vmatpush1.bf16.msra.mxu0 %v196
  %256 = vmatprep.subr.bf16.mxu0 %v195
  %257 = vmatpush1.bf16.msra.mxu0 %v194
  %258 = vmatprep.subr.bf16.mxu0 %v193
  %259 = vmatpush1.bf16.msra.mxu0 %v192
  %260 = vmatprep.subr.bf16.mxu0 %v191
  %261 = vmatpush1.bf16.msra.mxu0 %v190
  %262 = vmatprep.subr.bf16.mxu0 %v189
  %263 = vmatpush1.bf16.msra.mxu0 %v188
  %264 = vmatprep.subr.bf16.mxu0 %v187
  %265 = vmatpush1.bf16.msra.mxu0 %v186
  %266 = vmatprep.subr.bf16.mxu0 %v217
  %267 = vmatpush2.bf16.msra.mxu0 %v216
  %268 = vmatprep.subr.bf16.mxu0 %v215
  %269 = vmatpush2.bf16.msra.mxu0 %v214
  %270 = vmatprep.subr.bf16.mxu0 %v213
  %271 = vmatpush2.bf16.msra.mxu0 %v212
  %272 = vmatprep.subr.bf16.mxu0 %v211
  %273 = vmatpush2.bf16.msra.mxu0 %v210
  %274 = vmatprep.subr.bf16.mxu0 %v209
  %275 = vmatpush2.bf16.msra.mxu0 %v208
  %276 = vmatprep.subr.bf16.mxu0 %v207
  %277 = vmatpush2.bf16.msra.mxu0 %v206
  %278 = vmatprep.subr.bf16.mxu0 %v205
  %279 = vmatpush2.bf16.msra.mxu0 %v204
  %280 = vmatprep.subr.bf16.mxu0 %v203
  %281 = vmatpush2.bf16.msra.mxu0 %v202
  %282 = vmatprep.mubr.bf16.mxu0 %v83
  %283 = vmatmul.mubr.bf16.gmra.mxu0 %v82
  %v284 = vpop.f32.mrf.mxu0
  %v285 = vadd.f32 0.0, %v284
  %v286 = vpop.f32.mrf.mxu0
  %v287 = vadd.f32 0.0, %v286
  %v288 = vpop.f32.mrf.mxu0
  %v289 = vadd.f32 0.0, %v288
  %v290 = vpop.f32.mrf.mxu0
  %v291 = vadd.f32 0.0, %v290
  %292 = vmatprep.mubr.bf16.mxu0 %v85
  %293 = vmatmul.mubr.bf16.gmra.mxu0 %v84
  %v294 = vpop.f32.mrf.mxu0
  %v295 = vadd.f32 0.0, %v294
  %v296 = vpop.f32.mrf.mxu0
  %v297 = vadd.f32 0.0, %v296
  %v298 = vpop.f32.mrf.mxu0
  %v299 = vadd.f32 0.0, %v298
  %v300 = vpop.f32.mrf.mxu0
  %v301 = vadd.f32 0.0, %v300
  %302 = vdwg.mxu0
  %v303 = vadd.f32 %v26, %v285
  %v304 = vadd.f32 %v27, %v287
  %v305 = vadd.f32 %v28, %v289
  %v306 = vadd.f32 %v29, %v291
  %v307 = vadd.f32 %v30, %v295
  %v308 = vadd.f32 %v31, %v297
  %v309 = vadd.f32 %v32, %v299
  %v310 = vadd.f32 %v33, %v301
  %311 = vst [vmem:[#allocation2] sm:$0xff] %v303
  %312 = vst [vmem:[#allocation2 + $0x8] sm:$0xff] %v304
  %313 = vst [vmem:[#allocation2 + $0x10] sm:$0xff] %v305
  %314 = vst [vmem:[#allocation2 + $0x18] sm:$0xff] %v306
  %315 = vst [vmem:[#allocation2 + $0x20] sm:$0xff] %v307
  %316 = vst [vmem:[#allocation2 + $0x28] sm:$0xff] %v308
  %317 = vst [vmem:[#allocation2 + $0x30] sm:$0xff] %v309
  %318 = vst [vmem:[#allocation2 + $0x38] sm:$0xff] %v310
  // Predicated region
  $region18: #{transformer_forward.11} parent=0 // pred_check
    %p319 = pneg %p14
  $region19: #{transformer_forward.11} parent=0 // pred_check_branch
    %321 = sbr.rel (%p319) target = $region21
  $region20: #{transformer_forward.11} parent=0 // pred_region
    %v322 = vld [vmem:[#allocation2] sm:$0xff]
    %v323 = vld [vmem:[#allocation2 + $0x8] sm:$0xff]
    %v324 = vld [vmem:[#allocation2 + $0x10] sm:$0xff]
    %v325 = vld [vmem:[#allocation2 + $0x18] sm:$0xff]
    %v326 = vld [vmem:[#allocation2 + $0x20] sm:$0xff]
    %v327 = vld [vmem:[#allocation2 + $0x28] sm:$0xff]
    %v328 = vld [vmem:[#allocation2 + $0x30] sm:$0xff]
    %v329 = vld [vmem:[#allocation2 + $0x38] sm:$0xff]
    %v330 = vld [vmem:[%s2] sm:$0xff]
    %v331 = vld [vmem:[%s2 + $0x8] sm:$0xff]
    %v332 = vld [vmem:[%s2 + $0x10] sm:$0xff]
    %v333 = vld [vmem:[%s2 + $0x18] sm:$0xff]
    %v334 = vunpack.c.l.bf16 %v330
    %v335 = vunpack.c.h.bf16 %v330
    %v336 = vunpack.c.l.bf16 %v331
    %v337 = vunpack.c.h.bf16 %v331
    %v338 = vunpack.c.l.bf16 %v332
    %v339 = vunpack.c.h.bf16 %v332
    %v340 = vunpack.c.l.bf16 %v333
    %v341 = vunpack.c.h.bf16 %v333
    %v342 = vadd.f32 %v322, %v334
    %v343 = vadd.f32 %v323, %v335
    %v344 = vadd.f32 %v324, %v336
    %v345 = vadd.f32 %v325, %v337
    %v346 = vadd.f32 %v326, %v338
    %v347 = vadd.f32 %v327, %v339
    %v348 = vadd.f32 %v328, %v340
    %v349 = vadd.f32 %v329, %v341
    %v350 = vpack.c.bf16 %v344, %v342
    %v351 = vpack.c.bf16 %v345, %v343
    %v352 = vpack.c.bf16 %v348, %v346
    %v353 = vpack.c.bf16 %v349, %v347
    %v358 = vunpack.c.l.b16 %v350
    %v359 = vunpack.c.l.b16 %v351
    %v360 = vunpack.c.h.b16 %v350
    %v361 = vunpack.c.h.b16 %v351
    %v362 = vunpack.c.l.b16 %v352
    %v363 = vunpack.c.l.b16 %v353
    %v364 = vunpack.c.h.b16 %v352
    %v365 = vunpack.c.h.b16 %v353
    %v366 = vpack.c.b16 %v359, %v358
    %v367 = vpack.c.b16 %v361, %v360
    %v368 = vpack.c.b16 %v363, %v362
    %v369 = vpack.c.b16 %v365, %v364
    %374 = vst [vmem:[%s3] sm:$0xff] %v366
    %375 = vst [vmem:[%s3 + $0x8] sm:$0xff] %v367
    %376 = vst [vmem:[%s3 + $0x10] sm:$0xff] %v368
    %377 = vst [vmem:[%s3 + $0x18] sm:$0xff] %v369
  $region21: #{transformer_forward.11} parent=0 // pred_fallthru
    _
  // Predicated region
  $region22: #{transformer_forward.11} parent=0 // pred_check
    _
  $region23: #{transformer_forward.11} parent=0 // pred_check_branch
    %379 = sbr.rel (0) target = $region25
  $region24: #{transformer_forward.11} parent=0 // pred_region
    _
  $region25: #{transformer_forward.11} parent=0 // pred_fallthru
    _
  // Predicated region
  $region26: #{transformer_forward.11} parent=0 // pred_check
    _
  $region27: #{transformer_forward.11} parent=0 // pred_check_branch
    %381 = sbr.rel (0) target = $region29
  $region28: #{transformer_forward.11} parent=0 // pred_region
    _
  $region29: #{transformer_forward.11} parent=0 // pred_fallthru
    _

// kernel: transformer_forward.17
$region0: #{transformer_forward.17}
  #allocation0 [shape = 'u32[]', space=smem, size = 0x4, offset = 0x4, fixed_abs, tag = 'smem constant byte address 0x4 - core index']
  #allocation1 [shape = 'u32[144,128]{1,0:T(1,128)}', space=vmem, size = 0x12000, scoped, tag = 'internal scratch']
  #allocation2 [shape = 'bf16[32,256]{1,0:T(8,128)(2,1)}', space=vmem, size = 0x4000, scoped, tag = 'scratch operand']
  %s0 = inlined_call_operand.vmem [shape: bf16[32,256], index: 0, kind: input, shape index: {}]
  %s1 = inlined_call_operand.vmem [shape: f32[1,256], index: 1, kind: input, shape index: {}]
  %s2 = inlined_call_operand.vmem [shape: bf16[256,512], index: 2, kind: input, shape index: {}]
  %s3 = inlined_call_operand.hbm [shape: f32[32,512], index: 3, kind: output, shape index: {}]
  %s4 = sld [smem:[#allocation0]]
  $region26: #{transformer_forward.17} parent=0
    _
  %s6 = ssub.s32 1, %s4
  %s7 = scalar_select 0, %s6, %s4
  $region1: #{transformer_forward.17} parent=0
    #allocation3 [shape = 'u8[65536]{0}', space=vmem, size = 0x10000, scoped, tag = 'output window, operand 0, single buffered']
    #allocation4 [shape = 's32[1]{0}', space=sflag, size = 0x4, scoped, tag = 'scoped memory for transformer_forward.17']
    %8 = vsyncpa [#allocation4], 0
    // Predicated region
    $region2: #{transformer_forward.17} parent=1 // pred_check
      _
    $region3: #{transformer_forward.17} parent=1 // pred_check_branch
      %10 = sbr.rel (0) target = $region5
    $region4: #{transformer_forward.17} parent=1 // pred_region
      _
    $region5: #{transformer_forward.17} parent=1 // pred_fallthru
      _
    // Predicated region
    $region6: #{transformer_forward.17} parent=1 // pred_check
      _
    $region7: #{transformer_forward.17} parent=1 // pred_check_branch
      %12 = sbr.rel (0) target = $region9
    $region8: #{transformer_forward.17} parent=1 // pred_region
      _
    $region9: #{transformer_forward.17} parent=1 // pred_fallthru
      _
    // Predicated region
    $region10: #{transformer_forward.17} parent=1 // pred_check
      _
    $region11: #{transformer_forward.17} parent=1 // pred_check_branch
      %14 = sbr.rel (0) target = $region13
    $region12: #{transformer_forward.17} parent=1 // pred_region
      _
    $region13: #{transformer_forward.17} parent=1 // pred_fallthru
      _
    %p15 = scmp.eq.s32.totalorder 0, 0
    // Predicated region
    $region14: #{transformer_forward.17} parent=1 // pred_check
      %p16 = pneg %p15
    $region15: #{transformer_forward.17} parent=1 // pred_check_branch
      %18 = sbr.rel (%p16) target = $region17
    $region16: #{transformer_forward.17} parent=1 // pred_region
      %v19 = vld [vmem:[%s0] sm:$0xff]
      %v20 = vld [vmem:[%s0 + $0x8] sm:$0xff]
      %v21 = vld [vmem:[%s0 + $0x10] sm:$0xff]
      %v22 = vld [vmem:[%s0 + $0x18] sm:$0xff]
      %v23 = vunpack.c.l.bf16 %v19
      %v24 = vunpack.c.h.bf16 %v19
      %v25 = vunpack.c.l.bf16 %v20
      %v26 = vunpack.c.h.bf16 %v20
      %v27 = vunpack.c.l.bf16 %v21
      %v28 = vunpack.c.h.bf16 %v21
      %v29 = vunpack.c.l.bf16 %v22
      %v30 = vunpack.c.h.bf16 %v22
      %v31 = vmul.f32 %v23, %v23
      %v32 = vmul.f32 %v24, %v24
      %v33 = vmul.f32 %v25, %v25
      %v34 = vmul.f32 %v26, %v26
      %v35 = vmul.f32 %v27, %v27
      %v36 = vmul.f32 %v28, %v28
      %v37 = vmul.f32 %v29, %v29
      %v38 = vmul.f32 %v30, %v30
      %v39 = vadd.f32 %v31, %v32
      %40 = vadd.xlane.f32.xlu0 %v39
      %v41 = vpop.xlane.xlu0 %40
      %v42 = vadd.f32 %v33, %v34
      %43 = vadd.xlane.f32.xlu0 %v42
      %v44 = vpop.xlane.xlu0 %43
      %v45 = vadd.f32 %v35, %v36
      %46 = vadd.xlane.f32.xlu0 %v45
      %v47 = vpop.xlane.xlu0 %46
      %v48 = vadd.f32 %v37, %v38
      %49 = vadd.xlane.f32.xlu0 %v48
      %v50 = vpop.xlane.xlu0 %49
      %v51 = vrcp.pop 256.0
      %v52 = vmul.f32 %v41, %v51
      %v53 = vmul.f32 %v44, %v51
      %v54 = vmul.f32 %v47, %v51
      %v55 = vmul.f32 %v50, %v51
      %v56 = vadd.f32 %v52, 1e-05
      %v57 = vadd.f32 %v53, 1e-05
      %v58 = vadd.f32 %v54, 1e-05
      %v59 = vadd.f32 %v55, 1e-05
      %v60 = vrsqrt.pop %v56
      %v61 = vrsqrt.pop %v57
      %v62 = vrsqrt.pop %v58
      %v63 = vrsqrt.pop %v59
      %v64 = vmul.f32 %v23, %v60
      %v65 = vmul.f32 %v24, %v60
      %v66 = vmul.f32 %v25, %v61
      %v67 = vmul.f32 %v26, %v61
      %v68 = vmul.f32 %v27, %v62
      %v69 = vmul.f32 %v28, %v62
      %v70 = vmul.f32 %v29, %v63
      %v71 = vmul.f32 %v30, %v63
      %v72 = vld [vmem:[%s1] sm:$0x3]
      %v74 = vlaneseq
      %v75 = vshrl.u32 %v74, 7
      %v76 = vsub.s32 0, %v75
      %v77 = vrot.slane %v72, %v76
      %v78 = vlaneseq
      %v79 = vshrl.u32 %v78, 7
      %v80 = vsub.s32 1, %v79
      %v81 = vrot.slane %v72, %v80
      %v84 = vmul.f32 %v64, %v77
      %v85 = vmul.f32 %v65, %v81
      %v86 = vmul.f32 %v66, %v77
      %v87 = vmul.f32 %v67, %v81
      %v88 = vmul.f32 %v68, %v77
      %v89 = vmul.f32 %v69, %v81
      %v90 = vmul.f32 %v70, %v77
      %v91 = vmul.f32 %v71, %v81
      %v92 = vpack.c.bf16 %v86, %v84
      %v93 = vpack.c.bf16 %v87, %v85
      %v94 = vpack.c.bf16 %v90, %v88
      %v95 = vpack.c.bf16 %v91, %v89
      %v100 = vunpack.c.l.b16 %v92
      %v101 = vunpack.c.l.b16 %v93
      %v102 = vunpack.c.h.b16 %v92
      %v103 = vunpack.c.h.b16 %v93
      %v104 = vunpack.c.l.b16 %v94
      %v105 = vunpack.c.l.b16 %v95
      %v106 = vunpack.c.h.b16 %v94
      %v107 = vunpack.c.h.b16 %v95
      %v108 = vpack.c.b16 %v101, %v100
      %v109 = vpack.c.b16 %v103, %v102
      %v110 = vpack.c.b16 %v105, %v104
      %v111 = vpack.c.b16 %v107, %v106
      %116 = vst [vmem:[#allocation2] sm:$0xff] %v108
      %117 = vst [vmem:[#allocation2 + $0x8] sm:$0xff] %v109
      %118 = vst [vmem:[#allocation2 + $0x10] sm:$0xff] %v110
      %119 = vst [vmem:[#allocation2 + $0x18] sm:$0xff] %v111
    $region17: #{transformer_forward.17} parent=1 // pred_fallthru
      _
    %v120 = vld [vmem:[#allocation2] sm:$0xff]
    %v121 = vld [vmem:[#allocation2 + $0x8] sm:$0xff]
    %v122 = vld [vmem:[#allocation2 + $0x10] sm:$0xff]
    %v123 = vld [vmem:[#allocation2 + $0x18] sm:$0xff]
    %v124 = vld [vmem:[%s2] sm:$0xff]
    %v125 = vld [vmem:[%s2 + $0x8] sm:$0xff]
    %v126 = vld [vmem:[%s2 + $0x10] sm:$0xff]
    %v127 = vld [vmem:[%s2 + $0x18] sm:$0xff]
    %v128 = vld [vmem:[%s2 + $0x20] sm:$0xff]
    %v129 = vld [vmem:[%s2 + $0x28] sm:$0xff]
    %v130 = vld [vmem:[%s2 + $0x30] sm:$0xff]
    %v131 = vld [vmem:[%s2 + $0x38] sm:$0xff]
    %v132 = vld [vmem:[%s2 + $0x40] sm:$0xff]
    %v133 = vld [vmem:[%s2 + $0x48] sm:$0xff]
    %v134 = vld [vmem:[%s2 + $0x50] sm:$0xff]
    %v135 = vld [vmem:[%s2 + $0x58] sm:$0xff]
    %v136 = vld [vmem:[%s2 + $0x60] sm:$0xff]
    %v137 = vld [vmem:[%s2 + $0x68] sm:$0xff]
    %v138 = vld [vmem:[%s2 + $0x70] sm:$0xff]
    %v139 = vld [vmem:[%s2 + $0x78] sm:$0xff]
    %v140 = vld [vmem:[%s2 + $0x80] sm:$0xff]
    %v141 = vld [vmem:[%s2 + $0x88] sm:$0xff]
    %v142 = vld [vmem:[%s2 + $0x90] sm:$0xff]
    %v143 = vld [vmem:[%s2 + $0x98] sm:$0xff]
    %v144 = vld [vmem:[%s2 + $0xa0] sm:$0xff]
    %v145 = vld [vmem:[%s2 + $0xa8] sm:$0xff]
    %v146 = vld [vmem:[%s2 + $0xb0] sm:$0xff]
    %v147 = vld [vmem:[%s2 + $0xb8] sm:$0xff]
    %v148 = vld [vmem:[%s2 + $0xc0] sm:$0xff]
    %v149 = vld [vmem:[%s2 + $0xc8] sm:$0xff]
    %v150 = vld [vmem:[%s2 + $0xd0] sm:$0xff]
    %v151 = vld [vmem:[%s2 + $0xd8] sm:$0xff]
    %v152 = vld [vmem:[%s2 + $0xe0] sm:$0xff]
    %v153 = vld [vmem:[%s2 + $0xe8] sm:$0xff]
    %v154 = vld [vmem:[%s2 + $0xf0] sm:$0xff]
    %v155 = vld [vmem:[%s2 + $0xf8] sm:$0xff]
    %v156 = vld [vmem:[%s2 + $0x100] sm:$0xff]
    %v157 = vld [vmem:[%s2 + $0x108] sm:$0xff]
    %v158 = vld [vmem:[%s2 + $0x110] sm:$0xff]
    %v159 = vld [vmem:[%s2 + $0x118] sm:$0xff]
    %v160 = vld [vmem:[%s2 + $0x120] sm:$0xff]
    %v161 = vld [vmem:[%s2 + $0x128] sm:$0xff]
    %v162 = vld [vmem:[%s2 + $0x130] sm:$0xff]
    %v163 = vld [vmem:[%s2 + $0x138] sm:$0xff]
    %v164 = vld [vmem:[%s2 + $0x140] sm:$0xff]
    %v165 = vld [vmem:[%s2 + $0x148] sm:$0xff]
    %v166 = vld [vmem:[%s2 + $0x150] sm:$0xff]
    %v167 = vld [vmem:[%s2 + $0x158] sm:$0xff]
    %v168 = vld [vmem:[%s2 + $0x160] sm:$0xff]
    %v169 = vld [vmem:[%s2 + $0x168] sm:$0xff]
    %v170 = vld [vmem:[%s2 + $0x170] sm:$0xff]
    %v171 = vld [vmem:[%s2 + $0x178] sm:$0xff]
    %v172 = vld [vmem:[%s2 + $0x180] sm:$0xff]
    %v173 = vld [vmem:[%s2 + $0x188] sm:$0xff]
    %v174 = vld [vmem:[%s2 + $0x190] sm:$0xff]
    %v175 = vld [vmem:[%s2 + $0x198] sm:$0xff]
    %v176 = vld [vmem:[%s2 + $0x1a0] sm:$0xff]
    %v177 = vld [vmem:[%s2 + $0x1a8] sm:$0xff]
    %v178 = vld [vmem:[%s2 + $0x1b0] sm:$0xff]
    %v179 = vld [vmem:[%s2 + $0x1b8] sm:$0xff]
    %v180 = vld [vmem:[%s2 + $0x1c0] sm:$0xff]
    %v181 = vld [vmem:[%s2 + $0x1c8] sm:$0xff]
    %v182 = vld [vmem:[%s2 + $0x1d0] sm:$0xff]
    %v183 = vld [vmem:[%s2 + $0x1d8] sm:$0xff]
    %v184 = vld [vmem:[%s2 + $0x1e0] sm:$0xff]
    %v185 = vld [vmem:[%s2 + $0x1e8] sm:$0xff]
    %v186 = vld [vmem:[%s2 + $0x1f0] sm:$0xff]
    %v187 = vld [vmem:[%s2 + $0x1f8] sm:$0xff]
    %v192 = vunpack.c.l.b16 %v120
    %v193 = vunpack.c.h.b16 %v120
    %v194 = vunpack.c.l.b16 %v121
    %v195 = vunpack.c.h.b16 %v121
    %v196 = vunpack.c.l.b16 %v122
    %v197 = vunpack.c.h.b16 %v122
    %v198 = vunpack.c.l.b16 %v123
    %v199 = vunpack.c.h.b16 %v123
    %v200 = vpack.c.b16 %v194, %v192
    %v201 = vpack.c.b16 %v195, %v193
    %v202 = vpack.c.b16 %v198, %v196
    %v203 = vpack.c.b16 %v199, %v197
    %v272 = vunpack.c.l.b16 %v124
    %v273 = vunpack.c.h.b16 %v124
    %v274 = vunpack.c.l.b16 %v125
    %v275 = vunpack.c.h.b16 %v125
    %v276 = vunpack.c.l.b16 %v126
    %v277 = vunpack.c.h.b16 %v126
    %v278 = vunpack.c.l.b16 %v127
    %v279 = vunpack.c.h.b16 %v127
    %v280 = vunpack.c.l.b16 %v128
    %v281 = vunpack.c.h.b16 %v128
    %v282 = vunpack.c.l.b16 %v129
    %v283 = vunpack.c.h.b16 %v129
    %v284 = vunpack.c.l.b16 %v130
    %v285 = vunpack.c.h.b16 %v130
    %v286 = vunpack.c.l.b16 %v131
    %v287 = vunpack.c.h.b16 %v131
    %v288 = vunpack.c.l.b16 %v132
    %v289 = vunpack.c.h.b16 %v132
    %v290 = vunpack.c.l.b16 %v133
    %v291 = vunpack.c.h.b16 %v133
    %v292 = vunpack.c.l.b16 %v134
    %v293 = vunpack.c.h.b16 %v134
    %v294 = vunpack.c.l.b16 %v135
    %v295 = vunpack.c.h.b16 %v135
    %v296 = vunpack.c.l.b16 %v136
    %v297 = vunpack.c.h.b16 %v136
    %v298 = vunpack.c.l.b16 %v137
    %v299 = vunpack.c.h.b16 %v137
    %v300 = vunpack.c.l.b16 %v138
    %v301 = vunpack.c.h.b16 %v138
    %v302 = vunpack.c.l.b16 %v139
    %v303 = vunpack.c.h.b16 %v139
    %v304 = vunpack.c.l.b16 %v140
    %v305 = vunpack.c.h.b16 %v140
    %v306 = vunpack.c.l.b16 %v141
    %v307 = vunpack.c.h.b16 %v141
    %v308 = vunpack.c.l.b16 %v142
    %v309 = vunpack.c.h.b16 %v142
    %v310 = vunpack.c.l.b16 %v143
    %v311 = vunpack.c.h.b16 %v143
    %v312 = vunpack.c.l.b16 %v144
    %v313 = vunpack.c.h.b16 %v144
    %v314 = vunpack.c.l.b16 %v145
    %v315 = vunpack.c.h.b16 %v145
    %v316 = vunpack.c.l.b16 %v146
    %v317 = vunpack.c.h.b16 %v146
    %v318 = vunpack.c.l.b16 %v147
    %v319 = vunpack.c.h.b16 %v147
    %v320 = vunpack.c.l.b16 %v148
    %v321 = vunpack.c.h.b16 %v148
    %v322 = vunpack.c.l.b16 %v149
    %v323 = vunpack.c.h.b16 %v149
    %v324 = vunpack.c.l.b16 %v150
    %v325 = vunpack.c.h.b16 %v150
    %v326 = vunpack.c.l.b16 %v151
    %v327 = vunpack.c.h.b16 %v151
    %v328 = vunpack.c.l.b16 %v152
    %v329 = vunpack.c.h.b16 %v152
    %v330 = vunpack.c.l.b16 %v153
    %v331 = vunpack.c.h.b16 %v153
    %v332 = vunpack.c.l.b16 %v154
    %v333 = vunpack.c.h.b16 %v154
    %v334 = vunpack.c.l.b16 %v155
    %v335 = vunpack.c.h.b16 %v155
    %v336 = vunpack.c.l.b16 %v156
    %v337 = vunpack.c.h.b16 %v156
    %v338 = vunpack.c.l.b16 %v157
    %v339 = vunpack.c.h.b16 %v157
    %v340 = vunpack.c.l.b16 %v158
    %v341 = vunpack.c.h.b16 %v158
    %v342 = vunpack.c.l.b16 %v159
    %v343 = vunpack.c.h.b16 %v159
    %v344 = vunpack.c.l.b16 %v160
    %v345 = vunpack.c.h.b16 %v160
    %v346 = vunpack.c.l.b16 %v161
    %v347 = vunpack.c.h.b16 %v161
    %v348 = vunpack.c.l.b16 %v162
    %v349 = vunpack.c.h.b16 %v162
    %v350 = vunpack.c.l.b16 %v163
    %v351 = vunpack.c.h.b16 %v163
    %v352 = vunpack.c.l.b16 %v164
    %v353 = vunpack.c.h.b16 %v164
    %v354 = vunpack.c.l.b16 %v165
    %v355 = vunpack.c.h.b16 %v165
    %v356 = vunpack.c.l.b16 %v166
    %v357 = vunpack.c.h.b16 %v166
    %v358 = vunpack.c.l.b16 %v167
    %v359 = vunpack.c.h.b16 %v167
    %v360 = vunpack.c.l.b16 %v168
    %v361 = vunpack.c.h.b16 %v168
    %v362 = vunpack.c.l.b16 %v169
    %v363 = vunpack.c.h.b16 %v169
    %v364 = vunpack.c.l.b16 %v170
    %v365 = vunpack.c.h.b16 %v170
    %v366 = vunpack.c.l.b16 %v171
    %v367 = vunpack.c.h.b16 %v171
    %v368 = vunpack.c.l.b16 %v172
    %v369 = vunpack.c.h.b16 %v172
    %v370 = vunpack.c.l.b16 %v173
    %v371 = vunpack.c.h.b16 %v173
    %v372 = vunpack.c.l.b16 %v174
    %v373 = vunpack.c.h.b16 %v174
    %v374 = vunpack.c.l.b16 %v175
    %v375 = vunpack.c.h.b16 %v175
    %v376 = vunpack.c.l.b16 %v176
    %v377 = vunpack.c.h.b16 %v176
    %v378 = vunpack.c.l.b16 %v177
    %v379 = vunpack.c.h.b16 %v177
    %v380 = vunpack.c.l.b16 %v178
    %v381 = vunpack.c.h.b16 %v178
    %v382 = vunpack.c.l.b16 %v179
    %v383 = vunpack.c.h.b16 %v179
    %v384 = vunpack.c.l.b16 %v180
    %v385 = vunpack.c.h.b16 %v180
    %v386 = vunpack.c.l.b16 %v181
    %v387 = vunpack.c.h.b16 %v181
    %v388 = vunpack.c.l.b16 %v182
    %v389 = vunpack.c.h.b16 %v182
    %v390 = vunpack.c.l.b16 %v183
    %v391 = vunpack.c.h.b16 %v183
    %v392 = vunpack.c.l.b16 %v184
    %v393 = vunpack.c.h.b16 %v184
    %v394 = vunpack.c.l.b16 %v185
    %v395 = vunpack.c.h.b16 %v185
    %v396 = vunpack.c.l.b16 %v186
    %v397 = vunpack.c.h.b16 %v186
    %v398 = vunpack.c.l.b16 %v187
    %v399 = vunpack.c.h.b16 %v187
    %v400 = vpack.c.b16 %v276, %v272
    %v401 = vpack.c.b16 %v277, %v273
    %v402 = vpack.c.b16 %v278, %v274
    %v403 = vpack.c.b16 %v279, %v275
    %v404 = vpack.c.b16 %v284, %v280
    %v405 = vpack.c.b16 %v285, %v281
    %v406 = vpack.c.b16 %v286, %v282
    %v407 = vpack.c.b16 %v287, %v283
    %v408 = vpack.c.b16 %v292, %v288
    %v409 = vpack.c.b16 %v293, %v289
    %v410 = vpack.c.b16 %v294, %v290
    %v411 = vpack.c.b16 %v295, %v291
    %v412 = vpack.c.b16 %v300, %v296
    %v413 = vpack.c.b16 %v301, %v297
    %v414 = vpack.c.b16 %v302, %v298
    %v415 = vpack.c.b16 %v303, %v299
    %v416 = vpack.c.b16 %v308, %v304
    %v417 = vpack.c.b16 %v309, %v305
    %v418 = vpack.c.b16 %v310, %v306
    %v419 = vpack.c.b16 %v311, %v307
    %v420 = vpack.c.b16 %v316, %v312
    %v421 = vpack.c.b16 %v317, %v313
    %v422 = vpack.c.b16 %v318, %v314
    %v423 = vpack.c.b16 %v319, %v315
    %v424 = vpack.c.b16 %v324, %v320
    %v425 = vpack.c.b16 %v325, %v321
    %v426 = vpack.c.b16 %v326, %v322
    %v427 = vpack.c.b16 %v327, %v323
    %v428 = vpack.c.b16 %v332, %v328
    %v429 = vpack.c.b16 %v333, %v329
    %v430 = vpack.c.b16 %v334, %v330
    %v431 = vpack.c.b16 %v335, %v331
    %v432 = vpack.c.b16 %v340, %v336
    %v433 = vpack.c.b16 %v341, %v337
    %v434 = vpack.c.b16 %v342, %v338
    %v435 = vpack.c.b16 %v343, %v339
    %v436 = vpack.c.b16 %v348, %v344
    %v437 = vpack.c.b16 %v349, %v345
    %v438 = vpack.c.b16 %v350, %v346
    %v439 = vpack.c.b16 %v351, %v347
    %v440 = vpack.c.b16 %v356, %v352
    %v441 = vpack.c.b16 %v357, %v353
    %v442 = vpack.c.b16 %v358, %v354
    %v443 = vpack.c.b16 %v359, %v355
    %v444 = vpack.c.b16 %v364, %v360
    %v445 = vpack.c.b16 %v365, %v361
    %v446 = vpack.c.b16 %v366, %v362
    %v447 = vpack.c.b16 %v367, %v363
    %v448 = vpack.c.b16 %v372, %v368
    %v449 = vpack.c.b16 %v373, %v369
    %v450 = vpack.c.b16 %v374, %v370
    %v451 = vpack.c.b16 %v375, %v371
    %v452 = vpack.c.b16 %v380, %v376
    %v453 = vpack.c.b16 %v381, %v377
    %v454 = vpack.c.b16 %v382, %v378
    %v455 = vpack.c.b16 %v383, %v379
    %v456 = vpack.c.b16 %v388, %v384
    %v457 = vpack.c.b16 %v389, %v385
    %v458 = vpack.c.b16 %v390, %v386
    %v459 = vpack.c.b16 %v391, %v387
    %v460 = vpack.c.b16 %v396, %v392
    %v461 = vpack.c.b16 %v397, %v393
    %v462 = vpack.c.b16 %v398, %v394
    %v463 = vpack.c.b16 %v399, %v395
    %528 = vmatprep.subr.bf16.mxu0 %v429
    %529 = vmatpush1.bf16.msra.mxu0 %v428
    %530 = vmatprep.subr.bf16.mxu0 %v425
    %531 = vmatpush1.bf16.msra.mxu0 %v424
    %532 = vmatprep.subr.bf16.mxu0 %v421
    %533 = vmatpush1.bf16.msra.mxu0 %v420
    %534 = vmatprep.subr.bf16.mxu0 %v417
    %535 = vmatpush1.bf16.msra.mxu0 %v416
    %536 = vmatprep.subr.bf16.mxu0 %v413
    %537 = vmatpush1.bf16.msra.mxu0 %v412
    %538 = vmatprep.subr.bf16.mxu0 %v409
    %539 = vmatpush1.bf16.msra.mxu0 %v408
    %540 = vmatprep.subr.bf16.mxu0 %v405
    %541 = vmatpush1.bf16.msra.mxu0 %v404
    %542 = vmatprep.subr.bf16.mxu0 %v401
    %543 = vmatpush1.bf16.msra.mxu0 %v400
    %544 = vmatprep.subr.bf16.mxu0 %v461
    %545 = vmatpush2.bf16.msra.mxu0 %v460
    %546 = vmatprep.subr.bf16.mxu0 %v457
    %547 = vmatpush2.bf16.msra.mxu0 %v456
    %548 = vmatprep.subr.bf16.mxu0 %v453
    %549 = vmatpush2.bf16.msra.mxu0 %v452
    %550 = vmatprep.subr.bf16.mxu0 %v449
    %551 = vmatpush2.bf16.msra.mxu0 %v448
    %552 = vmatprep.subr.bf16.mxu0 %v445
    %553 = vmatpush2.bf16.msra.mxu0 %v444
    %554 = vmatprep.subr.bf16.mxu0 %v441
    %555 = vmatpush2.bf16.msra.mxu0 %v440
    %556 = vmatprep.subr.bf16.mxu0 %v437
    %557 = vmatpush2.bf16.msra.mxu0 %v436
    %558 = vmatprep.subr.bf16.mxu0 %v433
    %559 = vmatpush2.bf16.msra.mxu0 %v432
    %560 = vmatprep.mubr.bf16.mxu0 %v201
    %561 = vmatmul.mubr.bf16.gmra.mxu0 %v200
    %v562 = vpop.f32.mrf.mxu0
    %v563 = vadd.f32 0.0, %v562
    %v564 = vpop.f32.mrf.mxu0
    %v565 = vadd.f32 0.0, %v564
    %v566 = vpop.f32.mrf.mxu0
    %v567 = vadd.f32 0.0, %v566
    %v568 = vpop.f32.mrf.mxu0
    %v569 = vadd.f32 0.0, %v568
    %570 = vmatprep.mubr.bf16.mxu0 %v203
    %571 = vmatmul.mubr.bf16.gmra.mxu0 %v202
    %v572 = vpop.f32.mrf.mxu0
    %v573 = vadd.f32 0.0, %v572
    %v574 = vpop.f32.mrf.mxu0
    %v575 = vadd.f32 0.0, %v574
    %v576 = vpop.f32.mrf.mxu0
    %v577 = vadd.f32 0.0, %v576
    %v578 = vpop.f32.mrf.mxu0
    %v579 = vadd.f32 0.0, %v578
    %580 = vdwg.mxu0
    %581 = vmatprep.subr.bf16.mxu0 %v431
    %582 = vmatpush1.bf16.msra.mxu0 %v430
    %583 = vmatprep.subr.bf16.mxu0 %v427
    %584 = vmatpush1.bf16.msra.mxu0 %v426
    %585 = vmatprep.subr.bf16.mxu0 %v423
    %586 = vmatpush1.bf16.msra.mxu0 %v422
    %587 = vmatprep.subr.bf16.mxu0 %v419
    %588 = vmatpush1.bf16.msra.mxu0 %v418
    %589 = vmatprep.subr.bf16.mxu0 %v415
    %590 = vmatpush1.bf16.msra.mxu0 %v414
    %591 = vmatprep.subr.bf16.mxu0 %v411
    %592 = vmatpush1.bf16.msra.mxu0 %v410
    %593 = vmatprep.subr.bf16.mxu0 %v407
    %594 = vmatpush1.bf16.msra.mxu0 %v406
    %595 = vmatprep.subr.bf16.mxu0 %v403
    %596 = vmatpush1.bf16.msra.mxu0 %v402
    %597 = vmatprep.subr.bf16.mxu0 %v463
    %598 = vmatpush2.bf16.msra.mxu0 %v462
    %599 = vmatprep.subr.bf16.mxu0 %v459
    %600 = vmatpush2.bf16.msra.mxu0 %v458
    %601 = vmatprep.subr.bf16.mxu0 %v455
    %602 = vmatpush2.bf16.msra.mxu0 %v454
    %603 = vmatprep.subr.bf16.mxu0 %v451
    %604 = vmatpush2.bf16.msra.mxu0 %v450
    %605 = vmatprep.subr.bf16.mxu0 %v447
    %606 = vmatpush2.bf16.msra.mxu0 %v446
    %607 = vmatprep.subr.bf16.mxu0 %v443
    %608 = vmatpush2.bf16.msra.mxu0 %v442
    %609 = vmatprep.subr.bf16.mxu0 %v439
    %610 = vmatpush2.bf16.msra.mxu0 %v438
    %611 = vmatprep.subr.bf16.mxu0 %v435
    %612 = vmatpush2.bf16.msra.mxu0 %v434
    %613 = vmatprep.mubr.bf16.mxu0 %v201
    %614 = vmatmul.mubr.bf16.gmra.mxu0 %v200
    %v615 = vpop.f32.mrf.mxu0
    %v616 = vadd.f32 0.0, %v615
    %v617 = vpop.f32.mrf.mxu0
    %v618 = vadd.f32 0.0, %v617
    %v619 = vpop.f32.mrf.mxu0
    %v620 = vadd.f32 0.0, %v619
    %v621 = vpop.f32.mrf.mxu0
    %v622 = vadd.f32 0.0, %v621
    %623 = vmatprep.mubr.bf16.mxu0 %v203
    %624 = vmatmul.mubr.bf16.gmra.mxu0 %v202
    %v625 = vpop.f32.mrf.mxu0
    %v626 = vadd.f32 0.0, %v625
    %v627 = vpop.f32.mrf.mxu0
    %v628 = vadd.f32 0.0, %v627
    %v629 = vpop.f32.mrf.mxu0
    %v630 = vadd.f32 0.0, %v629
    %v631 = vpop.f32.mrf.mxu0
    %v632 = vadd.f32 0.0, %v631
    %633 = vdwg.mxu0
    %634 = vst [vmem:[#allocation3] sm:$0xff] %v563
    %635 = vst [vmem:[#allocation3 + $0x8] sm:$0xff] %v565
    %636 = vst [vmem:[#allocation3 + $0x10] sm:$0xff] %v616
    %637 = vst [vmem:[#allocation3 + $0x18] sm:$0xff] %v618
    %638 = vst [vmem:[#allocation3 + $0x20] sm:$0xff] %v567
    %639 = vst [vmem:[#allocation3 + $0x28] sm:$0xff] %v569
    %640 = vst [vmem:[#allocation3 + $0x30] sm:$0xff] %v620
    %641 = vst [vmem:[#allocation3 + $0x38] sm:$0xff] %v622
    %642 = vst [vmem:[#allocation3 + $0x40] sm:$0xff] %v573
    %643 = vst [vmem:[#allocation3 + $0x48] sm:$0xff] %v575
    %644 = vst [vmem:[#allocation3 + $0x50] sm:$0xff] %v626
    %645 = vst [vmem:[#allocation3 + $0x58] sm:$0xff] %v628
    %646 = vst [vmem:[#allocation3 + $0x60] sm:$0xff] %v577
    %647 = vst [vmem:[#allocation3 + $0x68] sm:$0xff] %v579
    %648 = vst [vmem:[#allocation3 + $0x70] sm:$0xff] %v630
    %649 = vst [vmem:[#allocation3 + $0x78] sm:$0xff] %v632
    // Predicated region
    $region18: #{transformer_forward.17} parent=1 // pred_check
      _
    $region19: #{transformer_forward.17} parent=1 // pred_check_branch
      %651 = sbr.rel (0) target = $region21
    $region20: #{transformer_forward.17} parent=1 // pred_region
      %s653 = ssub.s32 2048, 2048
      %654 = vsyncadd [#allocation4], %s653
      %s655 = sshll.u32 [#allocation3], 4
      %s656 = int_to_ptr.vmem [resolvable:$true] %s655
      %661 = dma.vmem_to_hbm [thread:$0]  %s656, 2048, %s3, [#allocation4], 512, 512, 32
    $region21: #{transformer_forward.17} parent=1 // pred_fallthru
      _
    // Predicated region
    $region22: #{transformer_forward.17} parent=1 // pred_check
      _
    $region23: #{transformer_forward.17} parent=1 // pred_check_branch
      %663 = sbr.rel (0) target = $region25
    $region24: #{transformer_forward.17} parent=1 // pred_region
      %664 = dma.done [#allocation4], 2048
    $region25: #{transformer_forward.17} parent=1 // pred_fallthru
      _
    %665 = vsyncpa [#allocation4], 1

// kernel: transformer_forward.12
$region0: #{transformer_forward.12}
  #allocation0 [shape = 'u32[]', space=smem, size = 0x4, offset = 0x4, fixed_abs, tag = 'smem constant byte address 0x4 - core index']
  #allocation1 [shape = 'u32[144,128]{1,0:T(1,128)}', space=vmem, size = 0x12000, scoped, tag = 'internal scratch']
  #allocation2 [shape = 'bf16[32,256]{1,0:T(8,128)(2,1)}', space=vmem, size = 0x4000, scoped, tag = 'scratch operand']
  #allocation3 [shape = 'f32[32,256]{1,0:T(8,128)}', space=vmem, size = 0x8000, scoped, tag = 'scratch operand']
  %s0 = inlined_call_operand.vmem [shape: bf16[32,256], index: 0, kind: input, shape index: {}]
  %s1 = inlined_call_operand.vmem [shape: f32[1,256], index: 1, kind: input, shape index: {}]
  %s2 = inlined_call_operand.vmem [shape: bf16[256,704], index: 2, kind: input, shape index: {}]
  %s3 = inlined_call_operand.vmem [shape: bf16[256,704], index: 3, kind: input, shape index: {}]
  %s4 = inlined_call_operand.vmem [shape: bf16[704,256], index: 4, kind: input, shape index: {}]
  %s5 = inlined_call_operand.vmem [shape: bf16[32,256], index: 5, kind: output, shape index: {}]
  %s6 = sld [smem:[#allocation0]]
  $region38: #{transformer_forward.12} parent=0
    _
  %s8 = ssub.s32 1, %s6
  %s9 = scalar_select 0, %s8, %s6
  // Predicated region
  $region2: #{transformer_forward.12} parent=0 // pred_check
    _
  $region3: #{transformer_forward.12} parent=0 // pred_check_branch
    %11 = sbr.rel (0) target = $region5
  $region4: #{transformer_forward.12} parent=0 // pred_region
    _
  $region5: #{transformer_forward.12} parent=0 // pred_fallthru
    _
  // Predicated region
  $region6: #{transformer_forward.12} parent=0 // pred_check
    _
  $region7: #{transformer_forward.12} parent=0 // pred_check_branch
    %13 = sbr.rel (0) target = $region9
  $region8: #{transformer_forward.12} parent=0 // pred_region
    _
  $region9: #{transformer_forward.12} parent=0 // pred_fallthru
    _
  // Predicated region
  $region10: #{transformer_forward.12} parent=0 // pred_check
    _
  $region11: #{transformer_forward.12} parent=0 // pred_check_branch
    %15 = sbr.rel (0) target = $region13
  $region12: #{transformer_forward.12} parent=0 // pred_region
    _
  $region13: #{transformer_forward.12} parent=0 // pred_fallthru
    _
  // Predicated region
  $region14: #{transformer_forward.12} parent=0 // pred_check
    _
  $region15: #{transformer_forward.12} parent=0 // pred_check_branch
    %17 = sbr.rel (0) target = $region17
  $region16: #{transformer_forward.12} parent=0 // pred_region
    _
  $region17: #{transformer_forward.12} parent=0 // pred_fallthru
    _
  // Predicated region
  $region18: #{transformer_forward.12} parent=0 // pred_check
    _
  $region19: #{transformer_forward.12} parent=0 // pred_check_branch
    %19 = sbr.rel (0) target = $region21
  $region20: #{transformer_forward.12} parent=0 // pred_region
    _
  $region21: #{transformer_forward.12} parent=0 // pred_fallthru
    _
  %p21 = scmp.eq.s32.totalorder 0, 0
  // Predicated region
  $region22: #{transformer_forward.12} parent=0 // pred_check
    %p22 = pneg %p21
  $region23: #{transformer_forward.12} parent=0 // pred_check_branch
    %24 = sbr.rel (%p22) target = $region25
  $region24: #{transformer_forward.12} parent=0 // pred_region
    %v25 = vld [vmem:[%s0] sm:$0xff]
    %v26 = vld [vmem:[%s0 + $0x8] sm:$0xff]
    %v27 = vld [vmem:[%s0 + $0x10] sm:$0xff]
    %v28 = vld [vmem:[%s0 + $0x18] sm:$0xff]
    %v29 = vunpack.c.l.bf16 %v25
    %v30 = vunpack.c.h.bf16 %v25
    %v31 = vunpack.c.l.bf16 %v26
    %v32 = vunpack.c.h.bf16 %v26
    %v33 = vunpack.c.l.bf16 %v27
    %v34 = vunpack.c.h.bf16 %v27
    %v35 = vunpack.c.l.bf16 %v28
    %v36 = vunpack.c.h.bf16 %v28
    %v37 = vmul.f32 %v29, %v29
    %v38 = vmul.f32 %v30, %v30
    %v39 = vmul.f32 %v31, %v31
    %v40 = vmul.f32 %v32, %v32
    %v41 = vmul.f32 %v33, %v33
    %v42 = vmul.f32 %v34, %v34
    %v43 = vmul.f32 %v35, %v35
    %v44 = vmul.f32 %v36, %v36
    %v45 = vadd.f32 %v37, %v38
    %46 = vadd.xlane.f32.xlu0 %v45
    %v47 = vpop.xlane.xlu0 %46
    %v48 = vadd.f32 %v39, %v40
    %49 = vadd.xlane.f32.xlu0 %v48
    %v50 = vpop.xlane.xlu0 %49
    %v51 = vadd.f32 %v41, %v42
    %52 = vadd.xlane.f32.xlu0 %v51
    %v53 = vpop.xlane.xlu0 %52
    %v54 = vadd.f32 %v43, %v44
    %55 = vadd.xlane.f32.xlu0 %v54
    %v56 = vpop.xlane.xlu0 %55
    %v57 = vrcp.pop 256.0
    %v58 = vmul.f32 %v47, %v57
    %v59 = vmul.f32 %v50, %v57
    %v60 = vmul.f32 %v53, %v57
    %v61 = vmul.f32 %v56, %v57
    %v62 = vadd.f32 %v58, 1e-05
    %v63 = vadd.f32 %v59, 1e-05
    %v64 = vadd.f32 %v60, 1e-05
    %v65 = vadd.f32 %v61, 1e-05
    %v66 = vrsqrt.pop %v62
    %v67 = vrsqrt.pop %v63
    %v68 = vrsqrt.pop %v64
    %v69 = vrsqrt.pop %v65
    %v70 = vmul.f32 %v29, %v66
    %v71 = vmul.f32 %v30, %v66
    %v72 = vmul.f32 %v31, %v67
    %v73 = vmul.f32 %v32, %v67
    %v74 = vmul.f32 %v33, %v68
    %v75 = vmul.f32 %v34, %v68
    %v76 = vmul.f32 %v35, %v69
    %v77 = vmul.f32 %v36, %v69
    %v78 = vld [vmem:[%s1] sm:$0x3]
    %v80 = vlaneseq
    %v81 = vshrl.u32 %v80, 7
    %v82 = vsub.s32 0, %v81
    %v83 = vrot.slane %v78, %v82
    %v84 = vlaneseq
    %v85 = vshrl.u32 %v84, 7
    %v86 = vsub.s32 1, %v85
    %v87 = vrot.slane %v78, %v86
    %v90 = vmul.f32 %v70, %v83
    %v91 = vmul.f32 %v71, %v87
    %v92 = vmul.f32 %v72, %v83
    %v93 = vmul.f32 %v73, %v87
    %v94 = vmul.f32 %v74, %v83
    %v95 = vmul.f32 %v75, %v87
    %v96 = vmul.f32 %v76, %v83
    %v97 = vmul.f32 %v77, %v87
    %v98 = vpack.c.bf16 %v92, %v90
    %v99 = vpack.c.bf16 %v93, %v91
    %v100 = vpack.c.bf16 %v96, %v94
    %v101 = vpack.c.bf16 %v97, %v95
    %v106 = vunpack.c.l.b16 %v98
    %v107 = vunpack.c.l.b16 %v99
    %v108 = vunpack.c.h.b16 %v98
    %v109 = vunpack.c.h.b16 %v99
    %v110 = vunpack.c.l.b16 %v100
    %v111 = vunpack.c.l.b16 %v101
    %v112 = vunpack.c.h.b16 %v100
    %v113 = vunpack.c.h.b16 %v101
    %v114 = vpack.c.b16 %v107, %v106
    %v115 = vpack.c.b16 %v109, %v108
    %v116 = vpack.c.b16 %v111, %v110
    %v117 = vpack.c.b16 %v113, %v112
    %122 = vst [vmem:[#allocation2] sm:$0xff] %v114
    %123 = vst [vmem:[#allocation2 + $0x8] sm:$0xff] %v115
    %124 = vst [vmem:[#allocation2 + $0x10] sm:$0xff] %v116
    %125 = vst [vmem:[#allocation2 + $0x18] sm:$0xff] %v117
    %126 = vst [vmem:[#allocation3] sm:$0xff] 0.0
    %127 = vst [vmem:[#allocation3 + $0x8] sm:$0xff] 0.0
    %128 = vst [vmem:[#allocation3 + $0x10] sm:$0xff] 0.0
    %129 = vst [vmem:[#allocation3 + $0x18] sm:$0xff] 0.0
    %130 = vst [vmem:[#allocation3 + $0x20] sm:$0xff] 0.0
    %131 = vst [vmem:[#allocation3 + $0x28] sm:$0xff] 0.0
    %132 = vst [vmem:[#allocation3 + $0x30] sm:$0xff] 0.0
    %133 = vst [vmem:[#allocation3 + $0x38] sm:$0xff] 0.0
  $region25: #{transformer_forward.12} parent=0 // pred_fallthru
    _
  %v134 = vld [vmem:[#allocation2] sm:$0xff]
  %v135 = vld [vmem:[#allocation2 + $0x8] sm:$0xff]
  %v136 = vld [vmem:[#allocation2 + $0x10] sm:$0xff]
  %v137 = vld [vmem:[#allocation2 + $0x18] sm:$0xff]
  %v138 = vld [vmem:[%s2] sm:$0xff]
  %v139 = vld [vmem:[%s2 + $0x8] sm:$0xff]
  %v140 = vld [vmem:[%s2 + $0x10] sm:$0xff]
  %v141 = vld [vmem:[%s2 + $0x18] sm:$0xff]
  %v142 = vld [vmem:[%s2 + $0x20] sm:$0xff]
  %v143 = vld [vmem:[%s2 + $0x28] sm:$0xff]
  %v144 = vld [vmem:[%s2 + $0x30] sm:$0xff]
  %v145 = vld [vmem:[%s2 + $0x38] sm:$0xff]
  %v146 = vld [vmem:[%s2 + $0x40] sm:$0xff]
  %v147 = vld [vmem:[%s2 + $0x48] sm:$0xff]
  %v148 = vld [vmem:[%s2 + $0x50] sm:$0xff]
  %v149 = vld [vmem:[%s2 + $0x58] sm:$0xff]
  %v150 = vld [vmem:[%s2 + $0x60] sm:$0xff]
  %v151 = vld [vmem:[%s2 + $0x68] sm:$0xff]
  %v152 = vld [vmem:[%s2 + $0x70] sm:$0xff]
  %v153 = vld [vmem:[%s2 + $0x78] sm:$0xff]
  %v154 = vld [vmem:[%s2 + $0x80] sm:$0xff]
  %v155 = vld [vmem:[%s2 + $0x88] sm:$0xff]
  %v156 = vld [vmem:[%s2 + $0x90] sm:$0xff]
  %v157 = vld [vmem:[%s2 + $0x98] sm:$0xff]
  %v158 = vld [vmem:[%s2 + $0xa0] sm:$0xff]
  %v159 = vld [vmem:[%s2 + $0xa8] sm:$0xff]
  %v160 = vld [vmem:[%s2 + $0xb0] sm:$0xff]
  %v161 = vld [vmem:[%s2 + $0xb8] sm:$0xff]
  %v162 = vld [vmem:[%s2 + $0xc0] sm:$0xff]
  %v163 = vld [vmem:[%s2 + $0xc8] sm:$0xff]
  %v164 = vld [vmem:[%s2 + $0xd0] sm:$0xff]
  %v165 = vld [vmem:[%s2 + $0xd8] sm:$0xff]
  %v166 = vld [vmem:[%s2 + $0xe0] sm:$0xff]
  %v167 = vld [vmem:[%s2 + $0xe8] sm:$0xff]
  %v168 = vld [vmem:[%s2 + $0xf0] sm:$0xff]
  %v169 = vld [vmem:[%s2 + $0xf8] sm:$0xff]
  %v170 = vld [vmem:[%s2 + $0x100] sm:$0xff]
  %v171 = vld [vmem:[%s2 + $0x108] sm:$0xff]
  %v172 = vld [vmem:[%s2 + $0x110] sm:$0xff]
  %v173 = vld [vmem:[%s2 + $0x118] sm:$0xff]
  %v174 = vld [vmem:[%s2 + $0x120] sm:$0xff]
  %v175 = vld [vmem:[%s2 + $0x128] sm:$0xff]
  %v176 = vld [vmem:[%s2 + $0x130] sm:$0xff]
  %v177 = vld [vmem:[%s2 + $0x138] sm:$0xff]
  %v178 = vld [vmem:[%s2 + $0x140] sm:$0xff]
  %v179 = vld [vmem:[%s2 + $0x148] sm:$0xff]
  %v180 = vld [vmem:[%s2 + $0x150] sm:$0xff]
  %v181 = vld [vmem:[%s2 + $0x158] sm:$0xff]
  %v182 = vld [vmem:[%s2 + $0x160] sm:$0xff]
  %v183 = vld [vmem:[%s2 + $0x168] sm:$0xff]
  %v184 = vld [vmem:[%s2 + $0x170] sm:$0xff]
  %v185 = vld [vmem:[%s2 + $0x178] sm:$0xff]
  %v186 = vld [vmem:[%s2 + $0x180] sm:$0xff]
  %v187 = vld [vmem:[%s2 + $0x188] sm:$0xff]
  %v188 = vld [vmem:[%s2 + $0x190] sm:$0xff]
  %v189 = vld [vmem:[%s2 + $0x198] sm:$0xff]
  %v190 = vld [vmem:[%s2 + $0x1a0] sm:$0xff]
  %v191 = vld [vmem:[%s2 + $0x1a8] sm:$0xff]
  %v192 = vld [vmem:[%s2 + $0x1b0] sm:$0xff]
  %v193 = vld [vmem:[%s2 + $0x1b8] sm:$0xff]
  %v194 = vld [vmem:[%s2 + $0x1c0] sm:$0xff]
  %v195 = vld [vmem:[%s2 + $0x1c8] sm:$0xff]
  %v196 = vld [vmem:[%s2 + $0x1d0] sm:$0xff]
  %v197 = vld [vmem:[%s2 + $0x1d8] sm:$0xff]
  %v198 = vld [vmem:[%s2 + $0x1e0] sm:$0xff]
  %v199 = vld [vmem:[%s2 + $0x1e8] sm:$0xff]
  %v200 = vld [vmem:[%s2 + $0x1f0] sm:$0xff]
  %v201 = vld [vmem:[%s2 + $0x1f8] sm:$0xff]
  %v202 = vld [vmem:[%s2 + $0x200] sm:$0xff]
  %v203 = vld [vmem:[%s2 + $0x208] sm:$0xff]
  %v204 = vld [vmem:[%s2 + $0x210] sm:$0xff]
  %v205 = vld [vmem:[%s2 + $0x218] sm:$0xff]
  %v206 = vld [vmem:[%s2 + $0x220] sm:$0xff]
  %v207 = vld [vmem:[%s2 + $0x228] sm:$0xff]
  %v208 = vld [vmem:[%s2 + $0x230] sm:$0xff]
  %v209 = vld [vmem:[%s2 + $0x238] sm:$0xff]
  %v210 = vld [vmem:[%s2 + $0x240] sm:$0xff]
  %v211 = vld [vmem:[%s2 + $0x248] sm:$0xff]
  %v212 = vld [vmem:[%s2 + $0x250] sm:$0xff]
  %v213 = vld [vmem:[%s2 + $0x258] sm:$0xff]
  %v214 = vld [vmem:[%s2 + $0x260] sm:$0xff]
  %v215 = vld [vmem:[%s2 + $0x268] sm:$0xff]
  %v216 = vld [vmem:[%s2 + $0x270] sm:$0xff]
  %v217 = vld [vmem:[%s2 + $0x278] sm:$0xff]
  %v218 = vld [vmem:[%s2 + $0x280] sm:$0xff]
  %v219 = vld [vmem:[%s2 + $0x288] sm:$0xff]
  %v220 = vld [vmem:[%s2 + $0x290] sm:$0xff]
  %v221 = vld [vmem:[%s2 + $0x298] sm:$0xff]
  %v222 = vld [vmem:[%s2 + $0x2a0] sm:$0xff]
  %v223 = vld [vmem:[%s2 + $0x2a8] sm:$0xff]
  %v224 = vld [vmem:[%s2 + $0x2b0] sm:$0xff]
  %v225 = vld [vmem:[%s2 + $0x2b8] sm:$0xff]
  %v226 = vld [vmem:[%s2 + $0x2c0] sm:$0xff]
  %v227 = vld [vmem:[%s2 + $0x2c8] sm:$0xff]
  %v228 = vld [vmem:[%s2 + $0x2d0] sm:$0xff]
  %v229 = vld [vmem:[%s2 + $0x2d8] sm:$0xff]
  %v230 = vld [vmem:[%s2 + $0x2e0] sm:$0xff]
  %v231 = vld [vmem:[%s2 + $0x2e8] sm:$0xff]
  %v232 = vld [vmem:[%s2 + $0x2f0] sm:$0xff]
  %v233 = vld [vmem:[%s2 + $0x2f8] sm:$0xff]
  %v238 = vunpack.c.l.b16 %v134
  %v239 = vunpack.c.h.b16 %v134
  %v240 = vunpack.c.l.b16 %v135
  %v241 = vunpack.c.h.b16 %v135
  %v242 = vunpack.c.l.b16 %v136
  %v243 = vunpack.c.h.b16 %v136
  %v244 = vunpack.c.l.b16 %v137
  %v245 = vunpack.c.h.b16 %v137
  %v246 = vpack.c.b16 %v240, %v238
  %v247 = vpack.c.b16 %v241, %v239
  %v248 = vpack.c.b16 %v244, %v242
  %v249 = vpack.c.b16 %v245, %v243
  %v350 = vunpack.c.l.b16 %v138
  %v351 = vunpack.c.h.b16 %v138
  %v352 = vunpack.c.l.b16 %v139
  %v353 = vunpack.c.h.b16 %v139
  %v354 = vunpack.c.l.b16 %v140
  %v355 = vunpack.c.h.b16 %v140
  %v356 = vunpack.c.l.b16 %v141
  %v357 = vunpack.c.h.b16 %v141
  %v358 = vunpack.c.l.b16 %v142
  %v359 = vunpack.c.h.b16 %v142
  %v360 = vunpack.c.l.b16 %v143
  %v361 = vunpack.c.h.b16 %v143
  %v362 = vunpack.c.l.b16 %v144
  %v363 = vunpack.c.h.b16 %v144
  %v364 = vunpack.c.l.b16 %v145
  %v365 = vunpack.c.h.b16 %v145
  %v366 = vunpack.c.l.b16 %v146
  %v367 = vunpack.c.h.b16 %v146
  %v368 = vunpack.c.l.b16 %v147
  %v369 = vunpack.c.h.b16 %v147
  %v370 = vunpack.c.l.b16 %v148
  %v371 = vunpack.c.h.b16 %v148
  %v372 = vunpack.c.l.b16 %v149
  %v373 = vunpack.c.h.b16 %v149
  %v374 = vunpack.c.l.b16 %v150
  %v375 = vunpack.c.h.b16 %v150
  %v376 = vunpack.c.l.b16 %v151
  %v377 = vunpack.c.h.b16 %v151
  %v378 = vunpack.c.l.b16 %v152
  %v379 = vunpack.c.h.b16 %v152
  %v380 = vunpack.c.l.b16 %v153
  %v381 = vunpack.c.h.b16 %v153
  %v382 = vunpack.c.l.b16 %v154
  %v383 = vunpack.c.h.b16 %v154
  %v384 = vunpack.c.l.b16 %v155
  %v385 = vunpack.c.h.b16 %v155
  %v386 = vunpack.c.l.b16 %v156
  %v387 = vunpack.c.h.b16 %v156
  %v388 = vunpack.c.l.b16 %v157
  %v389 = vunpack.c.h.b16 %v157
  %v390 = vunpack.c.l.b16 %v158
  %v391 = vunpack.c.h.b16 %v158
  %v392 = vunpack.c.l.b16 %v159
  %v393 = vunpack.c.h.b16 %v159
  %v394 = vunpack.c.l.b16 %v160
  %v395 = vunpack.c.h.b16 %v160
  %v396 = vunpack.c.l.b16 %v161
  %v397 = vunpack.c.h.b16 %v161
  %v398 = vunpack.c.l.b16 %v162
  %v399 = vunpack.c.h.b16 %v162
  %v400 = vunpack.c.l.b16 %v163
  %v401 = vunpack.c.h.b16 %v163
  %v402 = vunpack.c.l.b16 %v164
  %v403 = vunpack.c.h.b16 %v164
  %v404 = vunpack.c.l.b16 %v165
  %v405 = vunpack.c.h.b16 %v165
  %v406 = vunpack.c.l.b16 %v166
  %v407 = vunpack.c.h.b16 %v166
  %v408 = vunpack.c.l.b16 %v167
  %v409 = vunpack.c.h.b16 %v167
  %v410 = vunpack.c.l.b16 %v168
  %v411 = vunpack.c.h.b16 %v168
  %v412 = vunpack.c.l.b16 %v169
  %v413 = vunpack.c.h.b16 %v169
  %v414 = vunpack.c.l.b16 %v170
  %v415 = vunpack.c.h.b16 %v170
  %v416 = vunpack.c.l.b16 %v171
  %v417 = vunpack.c.h.b16 %v171
  %v418 = vunpack.c.l.b16 %v172
  %v419 = vunpack.c.h.b16 %v172
  %v420 = vunpack.c.l.b16 %v173
  %v421 = vunpack.c.h.b16 %v173
  %v422 = vunpack.c.l.b16 %v174
  %v423 = vunpack.c.h.b16 %v174
  %v424 = vunpack.c.l.b16 %v175
  %v425 = vunpack.c.h.b16 %v175
  %v426 = vunpack.c.l.b16 %v176
  %v427 = vunpack.c.h.b16 %v176
  %v428 = vunpack.c.l.b16 %v177
  %v429 = vunpack.c.h.b16 %v177
  %v430 = vunpack.c.l.b16 %v178
  %v431 = vunpack.c.h.b16 %v178
  %v432 = vunpack.c.l.b16 %v179
  %v433 = vunpack.c.h.b16 %v179
  %v434 = vunpack.c.l.b16 %v180
  %v435 = vunpack.c.h.b16 %v180
  %v436 = vunpack.c.l.b16 %v181
  %v437 = vunpack.c.h.b16 %v181
  %v438 = vunpack.c.l.b16 %v182
  %v439 = vunpack.c.h.b16 %v182
  %v440 = vunpack.c.l.b16 %v183
  %v441 = vunpack.c.h.b16 %v183
  %v442 = vunpack.c.l.b16 %v184
  %v443 = vunpack.c.h.b16 %v184
  %v444 = vunpack.c.l.b16 %v185
  %v445 = vunpack.c.h.b16 %v185
  %v446 = vunpack.c.l.b16 %v186
  %v447 = vunpack.c.h.b16 %v186
  %v448 = vunpack.c.l.b16 %v187
  %v449 = vunpack.c.h.b16 %v187
  %v450 = vunpack.c.l.b16 %v188
  %v451 = vunpack.c.h.b16 %v188
  %v452 = vunpack.c.l.b16 %v189
  %v453 = vunpack.c.h.b16 %v189
  %v454 = vunpack.c.l.b16 %v190
  %v455 = vunpack.c.h.b16 %v190
  %v456 = vunpack.c.l.b16 %v191
  %v457 = vunpack.c.h.b16 %v191
  %v458 = vunpack.c.l.b16 %v192
  %v459 = vunpack.c.h.b16 %v192
  %v460 = vunpack.c.l.b16 %v193
  %v461 = vunpack.c.h.b16 %v193
  %v462 = vunpack.c.l.b16 %v194
  %v463 = vunpack.c.h.b16 %v194
  %v464 = vunpack.c.l.b16 %v195
  %v465 = vunpack.c.h.b16 %v195
  %v466 = vunpack.c.l.b16 %v196
  %v467 = vunpack.c.h.b16 %v196
  %v468 = vunpack.c.l.b16 %v197
  %v469 = vunpack.c.h.b16 %v197
  %v470 = vunpack.c.l.b16 %v198
  %v471 = vunpack.c.h.b16 %v198
  %v472 = vunpack.c.l.b16 %v199
  %v473 = vunpack.c.h.b16 %v199
  %v474 = vunpack.c.l.b16 %v200
  %v475 = vunpack.c.h.b16 %v200
  %v476 = vunpack.c.l.b16 %v201
  %v477 = vunpack.c.h.b16 %v201
  %v478 = vunpack.c.l.b16 %v202
  %v479 = vunpack.c.h.b16 %v202
  %v480 = vunpack.c.l.b16 %v203
  %v481 = vunpack.c.h.b16 %v203
  %v482 = vunpack.c.l.b16 %v204
  %v483 = vunpack.c.h.b16 %v204
  %v484 = vunpack.c.l.b16 %v205
  %v485 = vunpack.c.h.b16 %v205
  %v486 = vunpack.c.l.b16 %v206
  %v487 = vunpack.c.h.b16 %v206
  %v488 = vunpack.c.l.b16 %v207
  %v489 = vunpack.c.h.b16 %v207
  %v490 = vunpack.c.l.b16 %v208
  %v491 = vunpack.c.h.b16 %v208
  %v492 = vunpack.c.l.b16 %v209
  %v493 = vunpack.c.h.b16 %v209
  %v494 = vunpack.c.l.b16 %v210
  %v495 = vunpack.c.h.b16 %v210
  %v496 = vunpack.c.l.b16 %v211
  %v497 = vunpack.c.h.b16 %v211
  %v498 = vunpack.c.l.b16 %v212
  %v499 = vunpack.c.h.b16 %v212
  %v500 = vunpack.c.l.b16 %v213
  %v501 = vunpack.c.h.b16 %v213
  %v502 = vunpack.c.l.b16 %v214
  %v503 = vunpack.c.h.b16 %v214
  %v504 = vunpack.c.l.b16 %v215
  %v505 = vunpack.c.h.b16 %v215
  %v506 = vunpack.c.l.b16 %v216
  %v507 = vunpack.c.h.b16 %v216
  %v508 = vunpack.c.l.b16 %v217
  %v509 = vunpack.c.h.b16 %v217
  %v510 = vunpack.c.l.b16 %v218
  %v511 = vunpack.c.h.b16 %v218
  %v512 = vunpack.c.l.b16 %v219
  %v513 = vunpack.c.h.b16 %v219
  %v514 = vunpack.c.l.b16 %v220
  %v515 = vunpack.c.h.b16 %v220
  %v516 = vunpack.c.l.b16 %v221
  %v517 = vunpack.c.h.b16 %v221
  %v518 = vunpack.c.l.b16 %v222
  %v519 = vunpack.c.h.b16 %v222
  %v520 = vunpack.c.l.b16 %v223
  %v521 = vunpack.c.h.b16 %v223
  %v522 = vunpack.c.l.b16 %v224
  %v523 = vunpack.c.h.b16 %v224
  %v524 = vunpack.c.l.b16 %v225
  %v525 = vunpack.c.h.b16 %v225
  %v526 = vunpack.c.l.b16 %v226
  %v527 = vunpack.c.h.b16 %v226
  %v528 = vunpack.c.l.b16 %v227
  %v529 = vunpack.c.h.b16 %v227
  %v530 = vunpack.c.l.b16 %v228
  %v531 = vunpack.c.h.b16 %v228
  %v532 = vunpack.c.l.b16 %v229
  %v533 = vunpack.c.h.b16 %v229
  %v534 = vunpack.c.l.b16 %v230
  %v535 = vunpack.c.h.b16 %v230
  %v536 = vunpack.c.l.b16 %v231
  %v537 = vunpack.c.h.b16 %v231
  %v538 = vunpack.c.l.b16 %v232
  %v539 = vunpack.c.h.b16 %v232
  %v540 = vunpack.c.l.b16 %v233
  %v541 = vunpack.c.h.b16 %v233
  %v542 = vpack.c.b16 %v356, %v350
  %v543 = vpack.c.b16 %v357, %v351
  %v544 = vpack.c.b16 %v358, %v352
  %v545 = vpack.c.b16 %v359, %v353
  %v546 = vpack.c.b16 %v360, %v354
  %v547 = vpack.c.b16 %v361, %v355
  %v548 = vpack.c.b16 %v368, %v362
  %v549 = vpack.c.b16 %v369, %v363
  %v550 = vpack.c.b16 %v370, %v364
  %v551 = vpack.c.b16 %v371, %v365
  %v552 = vpack.c.b16 %v372, %v366
  %v553 = vpack.c.b16 %v373, %v367
  %v554 = vpack.c.b16 %v380, %v374
  %v555 = vpack.c.b16 %v381, %v375
  %v556 = vpack.c.b16 %v382, %v376
  %v557 = vpack.c.b16 %v383, %v377
  %v558 = vpack.c.b16 %v384, %v378
  %v559 = vpack.c.b16 %v385, %v379
  %v560 = vpack.c.b16 %v392, %v386
  %v561 = vpack.c.b16 %v393, %v387
  %v562 = vpack.c.b16 %v394, %v388
  %v563 = vpack.c.b16 %v395, %v389
  %v564 = vpack.c.b16 %v396, %v390
  %v565 = vpack.c.b16 %v397, %v391
  %v566 = vpack.c.b16 %v404, %v398
  %v567 = vpack.c.b16 %v405, %v399
  %v568 = vpack.c.b16 %v406, %v400
  %v569 = vpack.c.b16 %v407, %v401
  %v570 = vpack.c.b16 %v408, %v402
  %v571 = vpack.c.b16 %v409, %v403
  %v572 = vpack.c.b16 %v416, %v410
  %v573 = vpack.c.b16 %v417, %v411
  %v574 = vpack.c.b16 %v418, %v412
  %v575 = vpack.c.b16 %v419, %v413
  %v576 = vpack.c.b16 %v420, %v414
  %v577 = vpack.c.b16 %v421, %v415
  %v578 = vpack.c.b16 %v428, %v422
  %v579 = vpack.c.b16 %v429, %v423
  %v580 = vpack.c.b16 %v430, %v424
  %v581 = vpack.c.b16 %v431, %v425
  %v582 = vpack.c.b16 %v432, %v426
  %v583 = vpack.c.b16 %v433, %v427
  %v584 = vpack.c.b16 %v440, %v434
  %v585 = vpack.c.b16 %v441, %v435
  %v586 = vpack.c.b16 %v442, %v436
  %v587 = vpack.c.b16 %v443, %v437
  %v588 = vpack.c.b16 %v444, %v438
  %v589 = vpack.c.b16 %v445, %v439
  %v590 = vpack.c.b16 %v452, %v446
  %v591 = vpack.c.b16 %v453, %v447
  %v592 = vpack.c.b16 %v454, %v448
  %v593 = vpack.c.b16 %v455, %v449
  %v594 = vpack.c.b16 %v456, %v450
  %v595 = vpack.c.b16 %v457, %v451
  %v596 = vpack.c.b16 %v464, %v458
  %v597 = vpack.c.b16 %v465, %v459
  %v598 = vpack.c.b16 %v466, %v460
  %v599 = vpack.c.b16 %v467, %v461
  %v600 = vpack.c.b16 %v468, %v462
  %v601 = vpack.c.b16 %v469, %v463
  %v602 = vpack.c.b16 %v476, %v470
  %v603 = vpack.c.b16 %v477, %v471
  %v604 = vpack.c.b16 %v478, %v472
  %v605 = vpack.c.b16 %v479, %v473
  %v606 = vpack.c.b16 %v480, %v474
  %v607 = vpack.c.b16 %v481, %v475
  %v608 = vpack.c.b16 %v488, %v482
  %v609 = vpack.c.b16 %v489, %v483
  %v610 = vpack.c.b16 %v490, %v484
  %v611 = vpack.c.b16 %v491, %v485
  %v612 = vpack.c.b16 %v492, %v486
  %v613 = vpack.c.b16 %v493, %v487
  %v614 = vpack.c.b16 %v500, %v494
  %v615 = vpack.c.b16 %v501, %v495
  %v616 = vpack.c.b16 %v502, %v496
  %v617 = vpack.c.b16 %v503, %v497
  %v618 = vpack.c.b16 %v504, %v498
  %v619 = vpack.c.b16 %v505, %v499
  %v620 = vpack.c.b16 %v512, %v506
  %v621 = vpack.c.b16 %v513, %v507
  %v622 = vpack.c.b16 %v514, %v508
  %v623 = vpack.c.b16 %v515, %v509
  %v624 = vpack.c.b16 %v516, %v510
  %v625 = vpack.c.b16 %v517, %v511
  %v626 = vpack.c.b16 %v524, %v518
  %v627 = vpack.c.b16 %v525, %v519
  %v628 = vpack.c.b16 %v526, %v520
  %v629 = vpack.c.b16 %v527, %v521
  %v630 = vpack.c.b16 %v528, %v522
  %v631 = vpack.c.b16 %v529, %v523
  %v632 = vpack.c.b16 %v536, %v530
  %v633 = vpack.c.b16 %v537, %v531
  %v634 = vpack.c.b16 %v538, %v532
  %v635 = vpack.c.b16 %v539, %v533
  %v636 = vpack.c.b16 %v540, %v534
  %v637 = vpack.c.b16 %v541, %v535
  %734 = vmatprep.subr.bf16.mxu0 %v585
  %735 = vmatpush1.bf16.msra.mxu0 %v584
  %736 = vmatprep.subr.bf16.mxu0 %v579
  %737 = vmatpush1.bf16.msra.mxu0 %v578
  %738 = vmatprep.subr.bf16.mxu0 %v573
  %739 = vmatpush1.bf16.msra.mxu0 %v572
  %740 = vmatprep.subr.bf16.mxu0 %v567
  %741 = vmatpush1.bf16.msra.mxu0 %v566
  %742 = vmatprep.subr.bf16.mxu0 %v561
  %743 = vmatpush1.bf16.msra.mxu0 %v560
  %744 = vmatprep.subr.bf16.mxu0 %v555
  %745 = vmatpush1.bf16.msra.mxu0 %v554
  %746 = vmatprep.subr.bf16.mxu0 %v549
  %747 = vmatpush1.bf16.msra.mxu0 %v548
  %748 = vmatprep.subr.bf16.mxu0 %v543
  %749 = vmatpush1.bf16.msra.mxu0 %v542
  %750 = vmatprep.subr.bf16.mxu0 %v633
  %751 = vmatpush2.bf16.msra.mxu0 %v632
  %752 = vmatprep.subr.bf16.mxu0 %v627
  %753 = vmatpush2.bf16.msra.mxu0 %v626
  %754 = vmatprep.subr.bf16.mxu0 %v621
  %755 = vmatpush2.bf16.msra.mxu0 %v620
  %756 = vmatprep.subr.bf16.mxu0 %v615
  %757 = vmatpush2.bf16.msra.mxu0 %v614
  %758 = vmatprep.subr.bf16.mxu0 %v609
  %759 = vmatpush2.bf16.msra.mxu0 %v608
  %760 = vmatprep.subr.bf16.mxu0 %v603
  %761 = vmatpush2.bf16.msra.mxu0 %v602
  %762 = vmatprep.subr.bf16.mxu0 %v597
  %763 = vmatpush2.bf16.msra.mxu0 %v596
  %764 = vmatprep.subr.bf16.mxu0 %v591
  %765 = vmatpush2.bf16.msra.mxu0 %v590
  %766 = vmatprep.mubr.bf16.mxu0 %v247
  %767 = vmatmul.mubr.bf16.gmra.mxu0 %v246
  %v768 = vpop.f32.mrf.mxu0
  %v769 = vadd.f32 0.0, %v768
  %v770 = vpop.f32.mrf.mxu0
  %v771 = vadd.f32 0.0, %v770
  %v772 = vpop.f32.mrf.mxu0
  %v773 = vadd.f32 0.0, %v772
  %v774 = vpop.f32.mrf.mxu0
  %v775 = vadd.f32 0.0, %v774
  %776 = vmatprep.mubr.bf16.mxu0 %v249
  %777 = vmatmul.mubr.bf16.gmra.mxu0 %v248
  %v778 = vpop.f32.mrf.mxu0
  %v779 = vadd.f32 0.0, %v778
  %v780 = vpop.f32.mrf.mxu0
  %v781 = vadd.f32 0.0, %v780
  %v782 = vpop.f32.mrf.mxu0
  %v783 = vadd.f32 0.0, %v782
  %v784 = vpop.f32.mrf.mxu0
  %v785 = vadd.f32 0.0, %v784
  %786 = vdwg.mxu0
  %787 = vmatprep.subr.bf16.mxu0 %v587
  %788 = vmatpush1.bf16.msra.mxu0 %v586
  %789 = vmatprep.subr.bf16.mxu0 %v581
  %790 = vmatpush1.bf16.msra.mxu0 %v580
  %791 = vmatprep.subr.bf16.mxu0 %v575
  %792 = vmatpush1.bf16.msra.mxu0 %v574
  %793 = vmatprep.subr.bf16.mxu0 %v569
  %794 = vmatpush1.bf16.msra.mxu0 %v568
  %795 = vmatprep.subr.bf16.mxu0 %v563
  %796 = vmatpush1.bf16.msra.mxu0 %v562
  %797 = vmatprep.subr.bf16.mxu0 %v557
  %798 = vmatpush1.bf16.msra.mxu0 %v556
  %799 = vmatprep.subr.bf16.mxu0 %v551
  %800 = vmatpush1.bf16.msra.mxu0 %v550
  %801 = vmatprep.subr.bf16.mxu0 %v545
  %802 = vmatpush1.bf16.msra.mxu0 %v544
  %803 = vmatprep.subr.bf16.mxu0 %v635
  %804 = vmatpush2.bf16.msra.mxu0 %v634
  %805 = vmatprep.subr.bf16.mxu0 %v629
  %806 = vmatpush2.bf16.msra.mxu0 %v628
  %807 = vmatprep.subr.bf16.mxu0 %v623
  %808 = vmatpush2.bf16.msra.mxu0 %v622
  %809 = vmatprep.subr.bf16.mxu0 %v617
  %810 = vmatpush2.bf16.msra.mxu0 %v616
  %811 = vmatprep.subr.bf16.mxu0 %v611
  %812 = vmatpush2.bf16.msra.mxu0 %v610
  %813 = vmatprep.subr.bf16.mxu0 %v605
  %814 = vmatpush2.bf16.msra.mxu0 %v604
  %815 = vmatprep.subr.bf16.mxu0 %v599
  %816 = vmatpush2.bf16.msra.mxu0 %v598
  %817 = vmatprep.subr.bf16.mxu0 %v593
  %818 = vmatpush2.bf16.msra.mxu0 %v592
  %819 = vmatprep.mubr.bf16.mxu0 %v247
  %820 = vmatmul.mubr.bf16.gmra.mxu0 %v246
  %v821 = vpop.f32.mrf.mxu0
  %v822 = vadd.f32 0.0, %v821
  %v823 = vpop.f32.mrf.mxu0
  %v824 = vadd.f32 0.0, %v823
  %v825 = vpop.f32.mrf.mxu0
  %v826 = vadd.f32 0.0, %v825
  %v827 = vpop.f32.mrf.mxu0
  %v828 = vadd.f32 0.0, %v827
  %829 = vmatprep.mubr.bf16.mxu0 %v249
  %830 = vmatmul.mubr.bf16.gmra.mxu0 %v248
  %v831 = vpop.f32.mrf.mxu0
  %v832 = vadd.f32 0.0, %v831
  %v833 = vpop.f32.mrf.mxu0
  %v834 = vadd.f32 0.0, %v833
  %v835 = vpop.f32.mrf.mxu0
  %v836 = vadd.f32 0.0, %v835
  %v837 = vpop.f32.mrf.mxu0
  %v838 = vadd.f32 0.0, %v837
  %839 = vdwg.mxu0
  %840 = vmatprep.subr.bf16.mxu0 %v589
  %841 = vmatpush1.bf16.msra.mxu0 %v588
  %842 = vmatprep.subr.bf16.mxu0 %v583
  %843 = vmatpush1.bf16.msra.mxu0 %v582
  %844 = vmatprep.subr.bf16.mxu0 %v577
  %845 = vmatpush1.bf16.msra.mxu0 %v576
  %846 = vmatprep.subr.bf16.mxu0 %v571
  %847 = vmatpush1.bf16.msra.mxu0 %v570
  %848 = vmatprep.subr.bf16.mxu0 %v565
  %849 = vmatpush1.bf16.msra.mxu0 %v564
  %850 = vmatprep.subr.bf16.mxu0 %v559
  %851 = vmatpush1.bf16.msra.mxu0 %v558
  %852 = vmatprep.subr.bf16.mxu0 %v553
  %853 = vmatpush1.bf16.msra.mxu0 %v552
  %854 = vmatprep.subr.bf16.mxu0 %v547
  %855 = vmatpush1.bf16.msra.mxu0 %v546
  %856 = vmatprep.subr.bf16.mxu0 %v637
  %857 = vmatpush2.bf16.msra.mxu0 %v636
  %858 = vmatprep.subr.bf16.mxu0 %v631
  %859 = vmatpush2.bf16.msra.mxu0 %v630
  %860 = vmatprep.subr.bf16.mxu0 %v625
  %861 = vmatpush2.bf16.msra.mxu0 %v624
  %862 = vmatprep.subr.bf16.mxu0 %v619
  %863 = vmatpush2.bf16.msra.mxu0 %v618
  %864 = vmatprep.subr.bf16.mxu0 %v613
  %865 = vmatpush2.bf16.msra.mxu0 %v612
  %866 = vmatprep.subr.bf16.mxu0 %v607
  %867 = vmatpush2.bf16.msra.mxu0 %v606
  %868 = vmatprep.subr.bf16.mxu0 %v601
  %869 = vmatpush2.bf16.msra.mxu0 %v600
  %870 = vmatprep.subr.bf16.mxu0 %v595
  %871 = vmatpush2.bf16.msra.mxu0 %v594
  %872 = vmatprep.mubr.bf16.mxu0 %v247
  %873 = vmatmul.mubr.bf16.gmra.mxu0 %v246
  %v874 = vpop.f32.mrf.mxu0
  %v875 = vadd.f32 0.0, %v874
  %v876 = vpop.f32.mrf.mxu0
  %v877 = vadd.f32 0.0, %v876
  %v878 = vpop.f32.mrf.mxu0
  %v879 = vadd.f32 0.0, %v878
  %v880 = vpop.f32.mrf.mxu0
  %v881 = vadd.f32 0.0, %v880
  %882 = vmatprep.mubr.bf16.mxu0 %v249
  %883 = vmatmul.mubr.bf16.gmra.mxu0 %v248
  %v884 = vpop.f32.mrf.mxu0
  %v885 = vadd.f32 0.0, %v884
  %v886 = vpop.f32.mrf.mxu0
  %v887 = vadd.f32 0.0, %v886
  %v888 = vpop.f32.mrf.mxu0
  %v889 = vadd.f32 0.0, %v888
  %v890 = vpop.f32.mrf.mxu0
  %v891 = vadd.f32 0.0, %v890
  %892 = vdwg.mxu0
  %v893 = vld [vmem:[%s3] sm:$0xff]
  %v894 = vld [vmem:[%s3 + $0x8] sm:$0xff]
  %v895 = vld [vmem:[%s3 + $0x10] sm:$0xff]
  %v896 = vld [vmem:[%s3 + $0x18] sm:$0xff]
  %v897 = vld [vmem:[%s3 + $0x20] sm:$0xff]
  %v898 = vld [vmem:[%s3 + $0x28] sm:$0xff]
  %v899 = vld [vmem:[%s3 + $0x30] sm:$0xff]
  %v900 = vld [vmem:[%s3 + $0x38] sm:$0xff]
  %v901 = vld [vmem:[%s3 + $0x40] sm:$0xff]
  %v902 = vld [vmem:[%s3 + $0x48] sm:$0xff]
  %v903 = vld [vmem:[%s3 + $0x50] sm:$0xff]
  %v904 = vld [vmem:[%s3 + $0x58] sm:$0xff]
  %v905 = vld [vmem:[%s3 + $0x60] sm:$0xff]
  %v906 = vld [vmem:[%s3 + $0x68] sm:$0xff]
  %v907 = vld [vmem:[%s3 + $0x70] sm:$0xff]
  %v908 = vld [vmem:[%s3 + $0x78] sm:$0xff]
  %v909 = vld [vmem:[%s3 + $0x80] sm:$0xff]
  %v910 = vld [vmem:[%s3 + $0x88] sm:$0xff]
  %v911 = vld [vmem:[%s3 + $0x90] sm:$0xff]
  %v912 = vld [vmem:[%s3 + $0x98] sm:$0xff]
  %v913 = vld [vmem:[%s3 + $0xa0] sm:$0xff]
  %v914 = vld [vmem:[%s3 + $0xa8] sm:$0xff]
  %v915 = vld [vmem:[%s3 + $0xb0] sm:$0xff]
  %v916 = vld [vmem:[%s3 + $0xb8] sm:$0xff]
  %v917 = vld [vmem:[%s3 + $0xc0] sm:$0xff]
  %v918 = vld [vmem:[%s3 + $0xc8] sm:$0xff]
  %v919 = vld [vmem:[%s3 + $0xd0] sm:$0xff]
  %v920 = vld [vmem:[%s3 + $0xd8] sm:$0xff]
  %v921 = vld [vmem:[%s3 + $0xe0] sm:$0xff]
  %v922 = vld [vmem:[%s3 + $0xe8] sm:$0xff]
  %v923 = vld [vmem:[%s3 + $0xf0] sm:$0xff]
  %v924 = vld [vmem:[%s3 + $0xf8] sm:$0xff]
  %v925 = vld [vmem:[%s3 + $0x100] sm:$0xff]
  %v926 = vld [vmem:[%s3 + $0x108] sm:$0xff]
  %v927 = vld [vmem:[%s3 + $0x110] sm:$0xff]
  %v928 = vld [vmem:[%s3 + $0x118] sm:$0xff]
  %v929 = vld [vmem:[%s3 + $0x120] sm:$0xff]
  %v930 = vld [vmem:[%s3 + $0x128] sm:$0xff]
  %v931 = vld [vmem:[%s3 + $0x130] sm:$0xff]
  %v932 = vld [vmem:[%s3 + $0x138] sm:$0xff]
  %v933 = vld [vmem:[%s3 + $0x140] sm:$0xff]
  %v934 = vld [vmem:[%s3 + $0x148] sm:$0xff]
  %v935 = vld [vmem:[%s3 + $0x150] sm:$0xff]
  %v936 = vld [vmem:[%s3 + $0x158] sm:$0xff]
  %v937 = vld [vmem:[%s3 + $0x160] sm:$0xff]
  %v938 = vld [vmem:[%s3 + $0x168] sm:$0xff]
  %v939 = vld [vmem:[%s3 + $0x170] sm:$0xff]
  %v940 = vld [vmem:[%s3 + $0x178] sm:$0xff]
  %v941 = vld [vmem:[%s3 + $0x180] sm:$0xff]
  %v942 = vld [vmem:[%s3 + $0x188] sm:$0xff]
  %v943 = vld [vmem:[%s3 + $0x190] sm:$0xff]
  %v944 = vld [vmem:[%s3 + $0x198] sm:$0xff]
  %v945 = vld [vmem:[%s3 + $0x1a0] sm:$0xff]
  %v946 = vld [vmem:[%s3 + $0x1a8] sm:$0xff]
  %v947 = vld [vmem:[%s3 + $0x1b0] sm:$0xff]
  %v948 = vld [vmem:[%s3 + $0x1b8] sm:$0xff]
  %v949 = vld [vmem:[%s3 + $0x1c0] sm:$0xff]
  %v950 = vld [vmem:[%s3 + $0x1c8] sm:$0xff]
  %v951 = vld [vmem:[%s3 + $0x1d0] sm:$0xff]
  %v952 = vld [vmem:[%s3 + $0x1d8] sm:$0xff]
  %v953 = vld [vmem:[%s3 + $0x1e0] sm:$0xff]
  %v954 = vld [vmem:[%s3 + $0x1e8] sm:$0xff]
  %v955 = vld [vmem:[%s3 + $0x1f0] sm:$0xff]
  %v956 = vld [vmem:[%s3 + $0x1f8] sm:$0xff]
  %v957 = vld [vmem:[%s3 + $0x200] sm:$0xff]
  %v958 = vld [vmem:[%s3 + $0x208] sm:$0xff]
  %v959 = vld [vmem:[%s3 + $0x210] sm:$0xff]
  %v960 = vld [vmem:[%s3 + $0x218] sm:$0xff]
  %v961 = vld [vmem:[%s3 + $0x220] sm:$0xff]
  %v962 = vld [vmem:[%s3 + $0x228] sm:$0xff]
  %v963 = vld [vmem:[%s3 + $0x230] sm:$0xff]
  %v964 = vld [vmem:[%s3 + $0x238] sm:$0xff]
  %v965 = vld [vmem:[%s3 + $0x240] sm:$0xff]
  %v966 = vld [vmem:[%s3 + $0x248] sm:$0xff]
  %v967 = vld [vmem:[%s3 + $0x250] sm:$0xff]
  %v968 = vld [vmem:[%s3 + $0x258] sm:$0xff]
  %v969 = vld [vmem:[%s3 + $0x260] sm:$0xff]
  %v970 = vld [vmem:[%s3 + $0x268] sm:$0xff]
  %v971 = vld [vmem:[%s3 + $0x270] sm:$0xff]
  %v972 = vld [vmem:[%s3 + $0x278] sm:$0xff]
  %v973 = vld [vmem:[%s3 + $0x280] sm:$0xff]
  %v974 = vld [vmem:[%s3 + $0x288] sm:$0xff]
  %v975 = vld [vmem:[%s3 + $0x290] sm:$0xff]
  %v976 = vld [vmem:[%s3 + $0x298] sm:$0xff]
  %v977 = vld [vmem:[%s3 + $0x2a0] sm:$0xff]
  %v978 = vld [vmem:[%s3 + $0x2a8] sm:$0xff]
  %v979 = vld [vmem:[%s3 + $0x2b0] sm:$0xff]
  %v980 = vld [vmem:[%s3 + $0x2b8] sm:$0xff]
  %v981 = vld [vmem:[%s3 + $0x2c0] sm:$0xff]
  %v982 = vld [vmem:[%s3 + $0x2c8] sm:$0xff]
  %v983 = vld [vmem:[%s3 + $0x2d0] sm:$0xff]
  %v984 = vld [vmem:[%s3 + $0x2d8] sm:$0xff]
  %v985 = vld [vmem:[%s3 + $0x2e0] sm:$0xff]
  %v986 = vld [vmem:[%s3 + $0x2e8] sm:$0xff]
  %v987 = vld [vmem:[%s3 + $0x2f0] sm:$0xff]
  %v988 = vld [vmem:[%s3 + $0x2f8] sm:$0xff]
  %v1085 = vunpack.c.l.b16 %v893
  %v1086 = vunpack.c.h.b16 %v893
  %v1087 = vunpack.c.l.b16 %v894
  %v1088 = vunpack.c.h.b16 %v894
  %v1089 = vunpack.c.l.b16 %v895
  %v1090 = vunpack.c.h.b16 %v895
  %v1091 = vunpack.c.l.b16 %v896
  %v1092 = vunpack.c.h.b16 %v896
  %v1093 = vunpack.c.l.b16 %v897
  %v1094 = vunpack.c.h.b16 %v897
  %v1095 = vunpack.c.l.b16 %v898
  %v1096 = vunpack.c.h.b16 %v898
  %v1097 = vunpack.c.l.b16 %v899
  %v1098 = vunpack.c.h.b16 %v899
  %v1099 = vunpack.c.l.b16 %v900
  %v1100 = vunpack.c.h.b16 %v900
  %v1101 = vunpack.c.l.b16 %v901
  %v1102 = vunpack.c.h.b16 %v901
  %v1103 = vunpack.c.l.b16 %v902
  %v1104 = vunpack.c.h.b16 %v902
  %v1105 = vunpack.c.l.b16 %v903
  %v1106 = vunpack.c.h.b16 %v903
  %v1107 = vunpack.c.l.b16 %v904
  %v1108 = vunpack.c.h.b16 %v904
  %v1109 = vunpack.c.l.b16 %v905
  %v1110 = vunpack.c.h.b16 %v905
  %v1111 = vunpack.c.l.b16 %v906
  %v1112 = vunpack.c.h.b16 %v906
  %v1113 = vunpack.c.l.b16 %v907
  %v1114 = vunpack.c.h.b16 %v907
  %v1115 = vunpack.c.l.b16 %v908
  %v1116 = vunpack.c.h.b16 %v908
  %v1117 = vunpack.c.l.b16 %v909
  %v1118 = vunpack.c.h.b16 %v909
  %v1119 = vunpack.c.l.b16 %v910
  %v1120 = vunpack.c.h.b16 %v910
  %v1121 = vunpack.c.l.b16 %v911
  %v1122 = vunpack.c.h.b16 %v911
  %v1123 = vunpack.c.l.b16 %v912
  %v1124 = vunpack.c.h.b16 %v912
  %v1125 = vunpack.c.l.b16 %v913
  %v1126 = vunpack.c.h.b16 %v913
  %v1127 = vunpack.c.l.b16 %v914
  %v1128 = vunpack.c.h.b16 %v914
  %v1129 = vunpack.c.l.b16 %v915
  %v1130 = vunpack.c.h.b16 %v915
  %v1131 = vunpack.c.l.b16 %v916
  %v1132 = vunpack.c.h.b16 %v916
  %v1133 = vunpack.c.l.b16 %v917
  %v1134 = vunpack.c.h.b16 %v917
  %v1135 = vunpack.c.l.b16 %v918
  %v1136 = vunpack.c.h.b16 %v918
  %v1137 = vunpack.c.l.b16 %v919
  %v1138 = vunpack.c.h.b16 %v919
  %v1139 = vunpack.c.l.b16 %v920
  %v1140 = vunpack.c.h.b16 %v920
  %v1141 = vunpack.c.l.b16 %v921
  %v1142 = vunpack.c.h.b16 %v921
  %v1143 = vunpack.c.l.b16 %v922
  %v1144 = vunpack.c.h.b16 %v922
  %v1145 = vunpack.c.l.b16 %v923
  %v1146 = vunpack.c.h.b16 %v923
  %v1147 = vunpack.c.l.b16 %v924
  %v1148 = vunpack.c.h.b16 %v924
  %v1149 = vunpack.c.l.b16 %v925
  %v1150 = vunpack.c.h.b16 %v925
  %v1151 = vunpack.c.l.b16 %v926
  %v1152 = vunpack.c.h.b16 %v926
  %v1153 = vunpack.c.l.b16 %v927
  %v1154 = vunpack.c.h.b16 %v927
  %v1155 = vunpack.c.l.b16 %v928
  %v1156 = vunpack.c.h.b16 %v928
  %v1157 = vunpack.c.l.b16 %v929
  %v1158 = vunpack.c.h.b16 %v929
  %v1159 = vunpack.c.l.b16 %v930
  %v1160 = vunpack.c.h.b16 %v930
  %v1161 = vunpack.c.l.b16 %v931
  %v1162 = vunpack.c.h.b16 %v931
  %v1163 = vunpack.c.l.b16 %v932
  %v1164 = vunpack.c.h.b16 %v932
  %v1165 = vunpack.c.l.b16 %v933
  %v1166 = vunpack.c.h.b16 %v933
  %v1167 = vunpack.c.l.b16 %v934
  %v1168 = vunpack.c.h.b16 %v934
  %v1169 = vunpack.c.l.b16 %v935
  %v1170 = vunpack.c.h.b16 %v935
  %v1171 = vunpack.c.l.b16 %v936
  %v1172 = vunpack.c.h.b16 %v936
  %v1173 = vunpack.c.l.b16 %v937
  %v1174 = vunpack.c.h.b16 %v937
  %v1175 = vunpack.c.l.b16 %v938
  %v1176 = vunpack.c.h.b16 %v938
  %v1177 = vunpack.c.l.b16 %v939
  %v1178 = vunpack.c.h.b16 %v939
  %v1179 = vunpack.c.l.b16 %v940
  %v1180 = vunpack.c.h.b16 %v940
  %v1181 = vunpack.c.l.b16 %v941
  %v1182 = vunpack.c.h.b16 %v941
  %v1183 = vunpack.c.l.b16 %v942
  %v1184 = vunpack.c.h.b16 %v942
  %v1185 = vunpack.c.l.b16 %v943
  %v1186 = vunpack.c.h.b16 %v943
  %v1187 = vunpack.c.l.b16 %v944
  %v1188 = vunpack.c.h.b16 %v944
  %v1189 = vunpack.c.l.b16 %v945
  %v1190 = vunpack.c.h.b16 %v945
  %v1191 = vunpack.c.l.b16 %v946
  %v1192 = vunpack.c.h.b16 %v946
  %v1193 = vunpack.c.l.b16 %v947
  %v1194 = vunpack.c.h.b16 %v947
  %v1195 = vunpack.c.l.b16 %v948
  %v1196 = vunpack.c.h.b16 %v948
  %v1197 = vunpack.c.l.b16 %v949
  %v1198 = vunpack.c.h.b16 %v949
  %v1199 = vunpack.c.l.b16 %v950
  %v1200 = vunpack.c.h.b16 %v950
  %v1201 = vunpack.c.l.b16 %v951
  %v1202 = vunpack.c.h.b16 %v951
  %v1203 = vunpack.c.l.b16 %v952
  %v1204 = vunpack.c.h.b16 %v952
  %v1205 = vunpack.c.l.b16 %v953
  %v1206 = vunpack.c.h.b16 %v953
  %v1207 = vunpack.c.l.b16 %v954
  %v1208 = vunpack.c.h.b16 %v954
  %v1209 = vunpack.c.l.b16 %v955
  %v1210 = vunpack.c.h.b16 %v955
  %v1211 = vunpack.c.l.b16 %v956
  %v1212 = vunpack.c.h.b16 %v956
  %v1213 = vunpack.c.l.b16 %v957
  %v1214 = vunpack.c.h.b16 %v957
  %v1215 = vunpack.c.l.b16 %v958
  %v1216 = vunpack.c.h.b16 %v958
  %v1217 = vunpack.c.l.b16 %v959
  %v1218 = vunpack.c.h.b16 %v959
  %v1219 = vunpack.c.l.b16 %v960
  %v1220 = vunpack.c.h.b16 %v960
  %v1221 = vunpack.c.l.b16 %v961
  %v1222 = vunpack.c.h.b16 %v961
  %v1223 = vunpack.c.l.b16 %v962
  %v1224 = vunpack.c.h.b16 %v962
  %v1225 = vunpack.c.l.b16 %v963
  %v1226 = vunpack.c.h.b16 %v963
  %v1227 = vunpack.c.l.b16 %v964
  %v1228 = vunpack.c.h.b16 %v964
  %v1229 = vunpack.c.l.b16 %v965
  %v1230 = vunpack.c.h.b16 %v965
  %v1231 = vunpack.c.l.b16 %v966
  %v1232 = vunpack.c.h.b16 %v966
  %v1233 = vunpack.c.l.b16 %v967
  %v1234 = vunpack.c.h.b16 %v967
  %v1235 = vunpack.c.l.b16 %v968
  %v1236 = vunpack.c.h.b16 %v968
  %v1237 = vunpack.c.l.b16 %v969
  %v1238 = vunpack.c.h.b16 %v969
  %v1239 = vunpack.c.l.b16 %v970
  %v1240 = vunpack.c.h.b16 %v970
  %v1241 = vunpack.c.l.b16 %v971
  %v1242 = vunpack.c.h.b16 %v971
  %v1243 = vunpack.c.l.b16 %v972
  %v1244 = vunpack.c.h.b16 %v972
  %v1245 = vunpack.c.l.b16 %v973
  %v1246 = vunpack.c.h.b16 %v973
  %v1247 = vunpack.c.l.b16 %v974
  %v1248 = vunpack.c.h.b16 %v974
  %v1249 = vunpack.c.l.b16 %v975
  %v1250 = vunpack.c.h.b16 %v975
  %v1251 = vunpack.c.l.b16 %v976
  %v1252 = vunpack.c.h.b16 %v976
  %v1253 = vunpack.c.l.b16 %v977
  %v1254 = vunpack.c.h.b16 %v977
  %v1255 = vunpack.c.l.b16 %v978
  %v1256 = vunpack.c.h.b16 %v978
  %v1257 = vunpack.c.l.b16 %v979
  %v1258 = vunpack.c.h.b16 %v979
  %v1259 = vunpack.c.l.b16 %v980
  %v1260 = vunpack.c.h.b16 %v980
  %v1261 = vunpack.c.l.b16 %v981
  %v1262 = vunpack.c.h.b16 %v981
  %v1263 = vunpack.c.l.b16 %v982
  %v1264 = vunpack.c.h.b16 %v982
  %v1265 = vunpack.c.l.b16 %v983
  %v1266 = vunpack.c.h.b16 %v983
  %v1267 = vunpack.c.l.b16 %v984
  %v1268 = vunpack.c.h.b16 %v984
  %v1269 = vunpack.c.l.b16 %v985
  %v1270 = vunpack.c.h.b16 %v985
  %v1271 = vunpack.c.l.b16 %v986
  %v1272 = vunpack.c.h.b16 %v986
  %v1273 = vunpack.c.l.b16 %v987
  %v1274 = vunpack.c.h.b16 %v987
  %v1275 = vunpack.c.l.b16 %v988
  %v1276 = vunpack.c.h.b16 %v988
  %v1277 = vpack.c.b16 %v1091, %v1085
  %v1278 = vpack.c.b16 %v1092, %v1086
  %v1279 = vpack.c.b16 %v1093, %v1087
  %v1280 = vpack.c.b16 %v1094, %v1088
  %v1281 = vpack.c.b16 %v1095, %v1089
  %v1282 = vpack.c.b16 %v1096, %v1090
  %v1283 = vpack.c.b16 %v1103, %v1097
  %v1284 = vpack.c.b16 %v1104, %v1098
  %v1285 = vpack.c.b16 %v1105, %v1099
  %v1286 = vpack.c.b16 %v1106, %v1100
  %v1287 = vpack.c.b16 %v1107, %v1101
  %v1288 = vpack.c.b16 %v1108, %v1102
  %v1289 = vpack.c.b16 %v1115, %v1109
  %v1290 = vpack.c.b16 %v1116, %v1110
  %v1291 = vpack.c.b16 %v1117, %v1111
  %v1292 = vpack.c.b16 %v1118, %v1112
  %v1293 = vpack.c.b16 %v1119, %v1113
  %v1294 = vpack.c.b16 %v1120, %v1114
  %v1295 = vpack.c.b16 %v1127, %v1121
  %v1296 = vpack.c.b16 %v1128, %v1122
  %v1297 = vpack.c.b16 %v1129, %v1123
  %v1298 = vpack.c.b16 %v1130, %v1124
  %v1299 = vpack.c.b16 %v1131, %v1125
  %v1300 = vpack.c.b16 %v1132, %v1126
  %v1301 = vpack.c.b16 %v1139, %v1133
  %v1302 = vpack.c.b16 %v1140, %v1134
  %v1303 = vpack.c.b16 %v1141, %v1135
  %v1304 = vpack.c.b16 %v1142, %v1136
  %v1305 = vpack.c.b16 %v1143, %v1137
  %v1306 = vpack.c.b16 %v1144, %v1138
  %v1307 = vpack.c.b16 %v1151, %v1145
  %v1308 = vpack.c.b16 %v1152, %v1146
  %v1309 = vpack.c.b16 %v1153, %v1147
  %v1310 = vpack.c.b16 %v1154, %v1148
  %v1311 = vpack.c.b16 %v1155, %v1149
  %v1312 = vpack.c.b16 %v1156, %v1150
  %v1313 = vpack.c.b16 %v1163, %v1157
  %v1314 = vpack.c.b16 %v1164, %v1158
  %v1315 = vpack.c.b16 %v1165, %v1159
  %v1316 = vpack.c.b16 %v1166, %v1160
  %v1317 = vpack.c.b16 %v1167, %v1161
  %v1318 = vpack.c.b16 %v1168, %v1162
  %v1319 = vpack.c.b16 %v1175, %v1169
  %v1320 = vpack.c.b16 %v1176, %v1170
  %v1321 = vpack.c.b16 %v1177, %v1171
  %v1322 = vpack.c.b16 %v1178, %v1172
  %v1323 = vpack.c.b16 %v1179, %v1173
  %v1324 = vpack.c.b16 %v1180, %v1174
  %v1325 = vpack.c.b16 %v1187, %v1181
  %v1326 = vpack.c.b16 %v1188, %v1182
  %v1327 = vpack.c.b16 %v1189, %v1183
  %v1328 = vpack.c.b16 %v1190, %v1184
  %v1329 = vpack.c.b16 %v1191, %v1185
  %v1330 = vpack.c.b16 %v1192, %v1186
  %v1331 = vpack.c.b16 %v1199, %v1193
  %v1332 = vpack.c.b16 %v1200, %v1194
  %v1333 = vpack.c.b16 %v1201, %v1195
  %v1334 = vpack.c.b16 %v1202, %v1196
  %v1335 = vpack.c.b16 %v1203, %v1197
  %v1336 = vpack.c.b16 %v1204, %v1198
  %v1337 = vpack.c.b16 %v1211, %v1205
  %v1338 = vpack.c.b16 %v1212, %v1206
  %v1339 = vpack.c.b16 %v1213, %v1207
  %v1340 = vpack.c.b16 %v1214, %v1208
  %v1341 = vpack.c.b16 %v1215, %v1209
  %v1342 = vpack.c.b16 %v1216, %v1210
  %v1343 = vpack.c.b16 %v1223, %v1217
  %v1344 = vpack.c.b16 %v1224, %v1218
  %v1345 = vpack.c.b16 %v1225, %v1219
  %v1346 = vpack.c.b16 %v1226, %v1220
  %v1347 = vpack.c.b16 %v1227, %v1221
  %v1348 = vpack.c.b16 %v1228, %v1222
  %v1349 = vpack.c.b16 %v1235, %v1229
  %v1350 = vpack.c.b16 %v1236, %v1230
  %v1351 = vpack.c.b16 %v1237, %v1231
  %v1352 = vpack.c.b16 %v1238, %v1232
  %v1353 = vpack.c.b16 %v1239, %v1233
  %v1354 = vpack.c.b16 %v1240, %v1234
  %v1355 = vpack.c.b16 %v1247, %v1241
  %v1356 = vpack.c.b16 %v1248, %v1242
  %v1357 = vpack.c.b16 %v1249, %v1243
  %v1358 = vpack.c.b16 %v1250, %v1244
  %v1359 = vpack.c.b16 %v1251, %v1245
  %v1360 = vpack.c.b16 %v1252, %v1246
  %v1361 = vpack.c.b16 %v1259, %v1253
  %v1362 = vpack.c.b16 %v1260, %v1254
  %v1363 = vpack.c.b16 %v1261, %v1255
  %v1364 = vpack.c.b16 %v1262, %v1256
  %v1365 = vpack.c.b16 %v1263, %v1257
  %v1366 = vpack.c.b16 %v1264, %v1258
  %v1367 = vpack.c.b16 %v1271, %v1265
  %v1368 = vpack.c.b16 %v1272, %v1266
  %v1369 = vpack.c.b16 %v1273, %v1267
  %v1370 = vpack.c.b16 %v1274, %v1268
  %v1371 = vpack.c.b16 %v1275, %v1269
  %v1372 = vpack.c.b16 %v1276, %v1270
  %1469 = vmatprep.subr.bf16.mxu0 %v1320
  %1470 = vmatpush1.bf16.msra.mxu0 %v1319
  %1471 = vmatprep.subr.bf16.mxu0 %v1314
  %1472 = vmatpush1.bf16.msra.mxu0 %v1313
  %1473 = vmatprep.subr.bf16.mxu0 %v1308
  %1474 = vmatpush1.bf16.msra.mxu0 %v1307
  %1475 = vmatprep.subr.bf16.mxu0 %v1302
  %1476 = vmatpush1.bf16.msra.mxu0 %v1301
  %1477 = vmatprep.subr.bf16.mxu0 %v1296
  %1478 = vmatpush1.bf16.msra.mxu0 %v1295
  %1479 = vmatprep.subr.bf16.mxu0 %v1290
  %1480 = vmatpush1.bf16.msra.mxu0 %v1289
  %1481 = vmatprep.subr.bf16.mxu0 %v1284
  %1482 = vmatpush1.bf16.msra.mxu0 %v1283
  %1483 = vmatprep.subr.bf16.mxu0 %v1278
  %1484 = vmatpush1.bf16.msra.mxu0 %v1277
  %1485 = vmatprep.subr.bf16.mxu0 %v1368
  %1486 = vmatpush2.bf16.msra.mxu0 %v1367
  %1487 = vmatprep.subr.bf16.mxu0 %v1362
  %1488 = vmatpush2.bf16.msra.mxu0 %v1361
  %1489 = vmatprep.subr.bf16.mxu0 %v1356
  %1490 = vmatpush2.bf16.msra.mxu0 %v1355
  %1491 = vmatprep.subr.bf16.mxu0 %v1350
  %1492 = vmatpush2.bf16.msra.mxu0 %v1349
  %1493 = vmatprep.subr.bf16.mxu0 %v1344
  %1494 = vmatpush2.bf16.msra.mxu0 %v1343
  %1495 = vmatprep.subr.bf16.mxu0 %v1338
  %1496 = vmatpush2.bf16.msra.mxu0 %v1337
  %1497 = vmatprep.subr.bf16.mxu0 %v1332
  %1498 = vmatpush2.bf16.msra.mxu0 %v1331
  %1499 = vmatprep.subr.bf16.mxu0 %v1326
  %1500 = vmatpush2.bf16.msra.mxu0 %v1325
  %1501 = vmatprep.mubr.bf16.mxu0 %v247
  %1502 = vmatmul.mubr.bf16.gmra.mxu0 %v246
  %v1503 = vpop.f32.mrf.mxu0
  %v1504 = vadd.f32 0.0, %v1503
  %v1505 = vpop.f32.mrf.mxu0
  %v1506 = vadd.f32 0.0, %v1505
  %v1507 = vpop.f32.mrf.mxu0
  %v1508 = vadd.f32 0.0, %v1507
  %v1509 = vpop.f32.mrf.mxu0
  %v1510 = vadd.f32 0.0, %v1509
  %1511 = vmatprep.mubr.bf16.mxu0 %v249
  %1512 = vmatmul.mubr.bf16.gmra.mxu0 %v248
  %v1513 = vpop.f32.mrf.mxu0
  %v1514 = vadd.f32 0.0, %v1513
  %v1515 = vpop.f32.mrf.mxu0
  %v1516 = vadd.f32 0.0, %v1515
  %v1517 = vpop.f32.mrf.mxu0
  %v1518 = vadd.f32 0.0, %v1517
  %v1519 = vpop.f32.mrf.mxu0
  %v1520 = vadd.f32 0.0, %v1519
  %1521 = vdwg.mxu0
  %1522 = vmatprep.subr.bf16.mxu0 %v1322
  %1523 = vmatpush1.bf16.msra.mxu0 %v1321
  %1524 = vmatprep.subr.bf16.mxu0 %v1316
  %1525 = vmatpush1.bf16.msra.mxu0 %v1315
  %1526 = vmatprep.subr.bf16.mxu0 %v1310
  %1527 = vmatpush1.bf16.msra.mxu0 %v1309
  %1528 = vmatprep.subr.bf16.mxu0 %v1304
  %1529 = vmatpush1.bf16.msra.mxu0 %v1303
  %1530 = vmatprep.subr.bf16.mxu0 %v1298
  %1531 = vmatpush1.bf16.msra.mxu0 %v1297
  %1532 = vmatprep.subr.bf16.mxu0 %v1292
  %1533 = vmatpush1.bf16.msra.mxu0 %v1291
  %1534 = vmatprep.subr.bf16.mxu0 %v1286
  %1535 = vmatpush1.bf16.msra.mxu0 %v1285
  %1536 = vmatprep.subr.bf16.mxu0 %v1280
  %1537 = vmatpush1.bf16.msra.mxu0 %v1279
  %1538 = vmatprep.subr.bf16.mxu0 %v1370
  %1539 = vmatpush2.bf16.msra.mxu0 %v1369
  %1540 = vmatprep.subr.bf16.mxu0 %v1364
  %1541 = vmatpush2.bf16.msra.mxu0 %v1363
  %1542 = vmatprep.subr.bf16.mxu0 %v1358
  %1543 = vmatpush2.bf16.msra.mxu0 %v1357
  %1544 = vmatprep.subr.bf16.mxu0 %v1352
  %1545 = vmatpush2.bf16.msra.mxu0 %v1351
  %1546 = vmatprep.subr.bf16.mxu0 %v1346
  %1547 = vmatpush2.bf16.msra.mxu0 %v1345
  %1548 = vmatprep.subr.bf16.mxu0 %v1340
  %1549 = vmatpush2.bf16.msra.mxu0 %v1339
  %1550 = vmatprep.subr.bf16.mxu0 %v1334
  %1551 = vmatpush2.bf16.msra.mxu0 %v1333
  %1552 = vmatprep.subr.bf16.mxu0 %v1328
  %1553 = vmatpush2.bf16.msra.mxu0 %v1327
  %1554 = vmatprep.mubr.bf16.mxu0 %v247
  %1555 = vmatmul.mubr.bf16.gmra.mxu0 %v246
  %v1556 = vpop.f32.mrf.mxu0
  %v1557 = vadd.f32 0.0, %v1556
  %v1558 = vpop.f32.mrf.mxu0
  %v1559 = vadd.f32 0.0, %v1558
  %v1560 = vpop.f32.mrf.mxu0
  %v1561 = vadd.f32 0.0, %v1560
  %v1562 = vpop.f32.mrf.mxu0
  %v1563 = vadd.f32 0.0, %v1562
  %1564 = vmatprep.mubr.bf16.mxu0 %v249
  %1565 = vmatmul.mubr.bf16.gmra.mxu0 %v248
  %v1566 = vpop.f32.mrf.mxu0
  %v1567 = vadd.f32 0.0, %v1566
  %v1568 = vpop.f32.mrf.mxu0
  %v1569 = vadd.f32 0.0, %v1568
  %v1570 = vpop.f32.mrf.mxu0
  %v1571 = vadd.f32 0.0, %v1570
  %v1572 = vpop.f32.mrf.mxu0
  %v1573 = vadd.f32 0.0, %v1572
  %1574 = vdwg.mxu0
  %1575 = vmatprep.subr.bf16.mxu0 %v1324
  %1576 = vmatpush1.bf16.msra.mxu0 %v1323
  %1577 = vmatprep.subr.bf16.mxu0 %v1318
  %1578 = vmatpush1.bf16.msra.mxu0 %v1317
  %1579 = vmatprep.subr.bf16.mxu0 %v1312
  %1580 = vmatpush1.bf16.msra.mxu0 %v1311
  %1581 = vmatprep.subr.bf16.mxu0 %v1306
  %1582 = vmatpush1.bf16.msra.mxu0 %v1305
  %1583 = vmatprep.subr.bf16.mxu0 %v1300
  %1584 = vmatpush1.bf16.msra.mxu0 %v1299
  %1585 = vmatprep.subr.bf16.mxu0 %v1294
  %1586 = vmatpush1.bf16.msra.mxu0 %v1293
  %1587 = vmatprep.subr.bf16.mxu0 %v1288
  %1588 = vmatpush1.bf16.msra.mxu0 %v1287
  %1589 = vmatprep.subr.bf16.mxu0 %v1282
  %1590 = vmatpush1.bf16.msra.mxu0 %v1281
  %1591 = vmatprep.subr.bf16.mxu0 %v1372
  %1592 = vmatpush2.bf16.msra.mxu0 %v1371
  %1593 = vmatprep.subr.bf16.mxu0 %v1366
  %1594 = vmatpush2.bf16.msra.mxu0 %v1365
  %1595 = vmatprep.subr.bf16.mxu0 %v1360
  %1596 = vmatpush2.bf16.msra.mxu0 %v1359
  %1597 = vmatprep.subr.bf16.mxu0 %v1354
  %1598 = vmatpush2.bf16.msra.mxu0 %v1353
  %1599 = vmatprep.subr.bf16.mxu0 %v1348
  %1600 = vmatpush2.bf16.msra.mxu0 %v1347
  %1601 = vmatprep.subr.bf16.mxu0 %v1342
  %1602 = vmatpush2.bf16.msra.mxu0 %v1341
  %1603 = vmatprep.subr.bf16.mxu0 %v1336
  %1604 = vmatpush2.bf16.msra.mxu0 %v1335
  %1605 = vmatprep.subr.bf16.mxu0 %v1330
  %1606 = vmatpush2.bf16.msra.mxu0 %v1329
  %1607 = vmatprep.mubr.bf16.mxu0 %v247
  %1608 = vmatmul.mubr.bf16.gmra.mxu0 %v246
  %v1609 = vpop.f32.mrf.mxu0
  %v1610 = vadd.f32 0.0, %v1609
  %v1611 = vpop.f32.mrf.mxu0
  %v1612 = vadd.f32 0.0, %v1611
  %v1613 = vpop.f32.mrf.mxu0
  %v1614 = vadd.f32 0.0, %v1613
  %v1615 = vpop.f32.mrf.mxu0
  %v1616 = vadd.f32 0.0, %v1615
  %1617 = vmatprep.mubr.bf16.mxu0 %v249
  %1618 = vmatmul.mubr.bf16.gmra.mxu0 %v248
  %v1619 = vpop.f32.mrf.mxu0
  %v1620 = vadd.f32 0.0, %v1619
  %v1621 = vpop.f32.mrf.mxu0
  %v1622 = vadd.f32 0.0, %v1621
  %v1623 = vpop.f32.mrf.mxu0
  %v1624 = vadd.f32 0.0, %v1623
  %v1625 = vpop.f32.mrf.mxu0
  %v1626 = vadd.f32 0.0, %v1625
  %1627 = vdwg.mxu0
  %v1628 = vxor.u32 %v769, 2147483648
  %v1629 = vxor.u32 %v771, 2147483648
  %v1630 = vxor.u32 %v822, 2147483648
  %v1631 = vxor.u32 %v824, 2147483648
  %v1632 = vxor.u32 %v875, 2147483648
  %v1633 = vxor.u32 %v877, 2147483648
  %v1634 = vxor.u32 %v773, 2147483648
  %v1635 = vxor.u32 %v775, 2147483648
  %v1636 = vxor.u32 %v826, 2147483648
  %v1637 = vxor.u32 %v828, 2147483648
  %v1638 = vxor.u32 %v879, 2147483648
  %v1639 = vxor.u32 %v881, 2147483648
  %v1640 = vxor.u32 %v779, 2147483648
  %v1641 = vxor.u32 %v781, 2147483648
  %v1642 = vxor.u32 %v832, 2147483648
  %v1643 = vxor.u32 %v834, 2147483648
  %v1644 = vxor.u32 %v885, 2147483648
  %v1645 = vxor.u32 %v887, 2147483648
  %v1646 = vxor.u32 %v783, 2147483648
  %v1647 = vxor.u32 %v785, 2147483648
  %v1648 = vxor.u32 %v836, 2147483648
  %v1649 = vxor.u32 %v838, 2147483648
  %v1650 = vxor.u32 %v889, 2147483648
  %v1651 = vxor.u32 %v891, 2147483648
  %v1652 = vmul.f32 %v1628, 1.442695
  %v1653 = vpow.pop %v1652
  %v1654 = vmul.f32 %v1629, 1.442695
  %v1655 = vpow.pop %v1654
  %v1656 = vmul.f32 %v1630, 1.442695
  %v1657 = vpow.pop %v1656
  %v1658 = vmul.f32 %v1631, 1.442695
  %v1659 = vpow.pop %v1658
  %v1660 = vmul.f32 %v1632, 1.442695
  %v1661 = vpow.pop %v1660
  %v1662 = vmul.f32 %v1633, 1.442695
  %v1663 = vpow.pop %v1662
  %v1664 = vmul.f32 %v1634, 1.442695
  %v1665 = vpow.pop %v1664
  %v1666 = vmul.f32 %v1635, 1.442695
  %v1667 = vpow.pop %v1666
  %v1668 = vmul.f32 %v1636, 1.442695
  %v1669 = vpow.pop %v1668
  %v1670 = vmul.f32 %v1637, 1.442695
  %v1671 = vpow.pop %v1670
  %v1672 = vmul.f32 %v1638, 1.442695
  %v1673 = vpow.pop %v1672
  %v1674 = vmul.f32 %v1639, 1.442695
  %v1675 = vpow.pop %v1674
  %v1676 = vmul.f32 %v1640, 1.442695
  %v1677 = vpow.pop %v1676
  %v1678 = vmul.f32 %v1641, 1.442695
  %v1679 = vpow.pop %v1678
  %v1680 = vmul.f32 %v1642, 1.442695
  %v1681 = vpow.pop %v1680
  %v1682 = vmul.f32 %v1643, 1.442695
  %v1683 = vpow.pop %v1682
  %v1684 = vmul.f32 %v1644, 1.442695
  %v1685 = vpow.pop %v1684
  %v1686 = vmul.f32 %v1645, 1.442695
  %v1687 = vpow.pop %v1686
  %v1688 = vmul.f32 %v1646, 1.442695
  %v1689 = vpow.pop %v1688
  %v1690 = vmul.f32 %v1647, 1.442695
  %v1691 = vpow.pop %v1690
  %v1692 = vmul.f32 %v1648, 1.442695
  %v1693 = vpow.pop %v1692
  %v1694 = vmul.f32 %v1649, 1.442695
  %v1695 = vpow.pop %v1694
  %v1696 = vmul.f32 %v1650, 1.442695
  %v1697 = vpow.pop %v1696
  %v1698 = vmul.f32 %v1651, 1.442695
  %v1699 = vpow.pop %v1698
  %v1700 = vadd.f32 %v1653, 1.0
  %v1701 = vadd.f32 %v1655, 1.0
  %v1702 = vadd.f32 %v1657, 1.0
  %v1703 = vadd.f32 %v1659, 1.0
  %v1704 = vadd.f32 %v1661, 1.0
  %v1705 = vadd.f32 %v1663, 1.0
  %v1706 = vadd.f32 %v1665, 1.0
  %v1707 = vadd.f32 %v1667, 1.0
  %v1708 = vadd.f32 %v1669, 1.0
  %v1709 = vadd.f32 %v1671, 1.0
  %v1710 = vadd.f32 %v1673, 1.0
  %v1711 = vadd.f32 %v1675, 1.0
  %v1712 = vadd.f32 %v1677, 1.0
  %v1713 = vadd.f32 %v1679, 1.0
  %v1714 = vadd.f32 %v1681, 1.0
  %v1715 = vadd.f32 %v1683, 1.0
  %v1716 = vadd.f32 %v1685, 1.0
  %v1717 = vadd.f32 %v1687, 1.0
  %v1718 = vadd.f32 %v1689, 1.0
  %v1719 = vadd.f32 %v1691, 1.0
  %v1720 = vadd.f32 %v1693, 1.0
  %v1721 = vadd.f32 %v1695, 1.0
  %v1722 = vadd.f32 %v1697, 1.0
  %v1723 = vadd.f32 %v1699, 1.0
  %v1724 = vrcp.pop %v1700
  %v1725 = vmul.f32 1.0, %v1724
  %v1726 = vrcp.pop %v1701
  %v1727 = vmul.f32 1.0, %v1726
  %v1728 = vrcp.pop %v1702
  %v1729 = vmul.f32 1.0, %v1728
  %v1730 = vrcp.pop %v1703
  %v1731 = vmul.f32 1.0, %v1730
  %v1732 = vrcp.pop %v1704
  %v1733 = vmul.f32 1.0, %v1732
  %v1734 = vrcp.pop %v1705
  %v1735 = vmul.f32 1.0, %v1734
  %v1736 = vrcp.pop %v1706
  %v1737 = vmul.f32 1.0, %v1736
  %v1738 = vrcp.pop %v1707
  %v1739 = vmul.f32 1.0, %v1738
  %v1740 = vrcp.pop %v1708
  %v1741 = vmul.f32 1.0, %v1740
  %v1742 = vrcp.pop %v1709
  %v1743 = vmul.f32 1.0, %v1742
  %v1744 = vrcp.pop %v1710
  %v1745 = vmul.f32 1.0, %v1744
  %v1746 = vrcp.pop %v1711
  %v1747 = vmul.f32 1.0, %v1746
  %v1748 = vrcp.pop %v1712
  %v1749 = vmul.f32 1.0, %v1748
  %v1750 = vrcp.pop %v1713
  %v1751 = vmul.f32 1.0, %v1750
  %v1752 = vrcp.pop %v1714
  %v1753 = vmul.f32 1.0, %v1752
  %v1754 = vrcp.pop %v1715
  %v1755 = vmul.f32 1.0, %v1754
  %v1756 = vrcp.pop %v1716
  %v1757 = vmul.f32 1.0, %v1756
  %v1758 = vrcp.pop %v1717
  %v1759 = vmul.f32 1.0, %v1758
  %v1760 = vrcp.pop %v1718
  %v1761 = vmul.f32 1.0, %v1760
  %v1762 = vrcp.pop %v1719
  %v1763 = vmul.f32 1.0, %v1762
  %v1764 = vrcp.pop %v1720
  %v1765 = vmul.f32 1.0, %v1764
  %v1766 = vrcp.pop %v1721
  %v1767 = vmul.f32 1.0, %v1766
  %v1768 = vrcp.pop %v1722
  %v1769 = vmul.f32 1.0, %v1768
  %v1770 = vrcp.pop %v1723
  %v1771 = vmul.f32 1.0, %v1770
  %v1772 = vmul.f32 %v769, %v1725
  %v1773 = vmul.f32 %v771, %v1727
  %v1774 = vmul.f32 %v822, %v1729
  %v1775 = vmul.f32 %v824, %v1731
  %v1776 = vmul.f32 %v875, %v1733
  %v1777 = vmul.f32 %v877, %v1735
  %v1778 = vmul.f32 %v773, %v1737
  %v1779 = vmul.f32 %v775, %v1739
  %v1780 = vmul.f32 %v826, %v1741
  %v1781 = vmul.f32 %v828, %v1743
  %v1782 = vmul.f32 %v879, %v1745
  %v1783 = vmul.f32 %v881, %v1747
  %v1784 = vmul.f32 %v779, %v1749
  %v1785 = vmul.f32 %v781, %v1751
  %v1786 = vmul.f32 %v832, %v1753
  %v1787 = vmul.f32 %v834, %v1755
  %v1788 = vmul.f32 %v885, %v1757
  %v1789 = vmul.f32 %v887, %v1759
  %v1790 = vmul.f32 %v783, %v1761
  %v1791 = vmul.f32 %v785, %v1763
  %v1792 = vmul.f32 %v836, %v1765
  %v1793 = vmul.f32 %v838, %v1767
  %v1794 = vmul.f32 %v889, %v1769
  %v1795 = vmul.f32 %v891, %v1771
  %v1796 = vmul.f32 %v1772, %v1504
  %v1797 = vmul.f32 %v1773, %v1506
  %v1798 = vmul.f32 %v1774, %v1557
  %v1799 = vmul.f32 %v1775, %v1559
  %v1800 = vmul.f32 %v1776, %v1610
  %v1801 = vmul.f32 %v1777, %v1612
  %v1802 = vmul.f32 %v1778, %v1508
  %v1803 = vmul.f32 %v1779, %v1510
  %v1804 = vmul.f32 %v1780, %v1561
  %v1805 = vmul.f32 %v1781, %v1563
  %v1806 = vmul.f32 %v1782, %v1614
  %v1807 = vmul.f32 %v1783, %v1616
  %v1808 = vmul.f32 %v1784, %v1514
  %v1809 = vmul.f32 %v1785, %v1516
  %v1810 = vmul.f32 %v1786, %v1567
  %v1811 = vmul.f32 %v1787, %v1569
  %v1812 = vmul.f32 %v1788, %v1620
  %v1813 = vmul.f32 %v1789, %v1622
  %v1814 = vmul.f32 %v1790, %v1518
  %v1815 = vmul.f32 %v1791, %v1520
  %v1816 = vmul.f32 %v1792, %v1571
  %v1817 = vmul.f32 %v1793, %v1573
  %v1818 = vmul.f32 %v1794, %v1624
  %v1819 = vmul.f32 %v1795, %v1626
  %v1820 = vld [vmem:[#allocation3] sm:$0xff]
  %v1821 = vld [vmem:[#allocation3 + $0x8] sm:$0xff]
  %v1822 = vld [vmem:[#allocation3 + $0x10] sm:$0xff]
  %v1823 = vld [vmem:[#allocation3 + $0x18] sm:$0xff]
  %v1824 = vld [vmem:[#allocation3 + $0x20] sm:$0xff]
  %v1825 = vld [vmem:[#allocation3 + $0x28] sm:$0xff]
  %v1826 = vld [vmem:[#allocation3 + $0x30] sm:$0xff]
  %v1827 = vld [vmem:[#allocation3 + $0x38] sm:$0xff]
  %v1828 = vpack.c.bf16 %v1802, %v1796
  %v1829 = vpack.c.bf16 %v1803, %v1797
  %v1830 = vpack.c.bf16 %v1804, %v1798
  %v1831 = vpack.c.bf16 %v1805, %v1799
  %v1832 = vpack.c.bf16 %v1806, %v1800
  %v1833 = vpack.c.bf16 %v1807, %v1801
  %v1834 = vpack.c.bf16 %v1814, %v1808
  %v1835 = vpack.c.bf16 %v1815, %v1809
  %v1836 = vpack.c.bf16 %v1816, %v1810
  %v1837 = vpack.c.bf16 %v1817, %v1811
  %v1838 = vpack.c.bf16 %v1818, %v1812
  %v1839 = vpack.c.bf16 %v1819, %v1813
  %v1840 = vld [vmem:[%s4] sm:$0xff]
  %v1841 = vld [vmem:[%s4 + $0x8] sm:$0xff]
  %v1842 = vld [vmem:[%s4 + $0x10] sm:$0xff]
  %v1843 = vld [vmem:[%s4 + $0x18] sm:$0xff]
  %v1844 = vld [vmem:[%s4 + $0x20] sm:$0xff]
  %v1845 = vld [vmem:[%s4 + $0x28] sm:$0xff]
  %v1846 = vld [vmem:[%s4 + $0x30] sm:$0xff]
  %v1847 = vld [vmem:[%s4 + $0x38] sm:$0xff]
  %v1848 = vld [vmem:[%s4 + $0x40] sm:$0xff]
  %v1849 = vld [vmem:[%s4 + $0x48] sm:$0xff]
  %v1850 = vld [vmem:[%s4 + $0x50] sm:$0xff]
  %v1851 = vld [vmem:[%s4 + $0x58] sm:$0xff]
  %v1852 = vld [vmem:[%s4 + $0x60] sm:$0xff]
  %v1853 = vld [vmem:[%s4 + $0x68] sm:$0xff]
  %v1854 = vld [vmem:[%s4 + $0x70] sm:$0xff]
  %v1855 = vld [vmem:[%s4 + $0x78] sm:$0xff]
  %v1856 = vld [vmem:[%s4 + $0x80] sm:$0xff]
  %v1857 = vld [vmem:[%s4 + $0x88] sm:$0xff]
  %v1858 = vld [vmem:[%s4 + $0x90] sm:$0xff]
  %v1859 = vld [vmem:[%s4 + $0x98] sm:$0xff]
  %v1860 = vld [vmem:[%s4 + $0xa0] sm:$0xff]
  %v1861 = vld [vmem:[%s4 + $0xa8] sm:$0xff]
  %v1862 = vld [vmem:[%s4 + $0xb0] sm:$0xff]
  %v1863 = vld [vmem:[%s4 + $0xb8] sm:$0xff]
  %v1864 = vld [vmem:[%s4 + $0xc0] sm:$0xff]
  %v1865 = vld [vmem:[%s4 + $0xc8] sm:$0xff]
  %v1866 = vld [vmem:[%s4 + $0xd0] sm:$0xff]
  %v1867 = vld [vmem:[%s4 + $0xd8] sm:$0xff]
  %v1868 = vld [vmem:[%s4 + $0xe0] sm:$0xff]
  %v1869 = vld [vmem:[%s4 + $0xe8] sm:$0xff]
  %v1870 = vld [vmem:[%s4 + $0xf0] sm:$0xff]
  %v1871 = vld [vmem:[%s4 + $0xf8] sm:$0xff]
  %v1872 = vld [vmem:[%s4 + $0x100] sm:$0xff]
  %v1873 = vld [vmem:[%s4 + $0x108] sm:$0xff]
  %v1874 = vld [vmem:[%s4 + $0x110] sm:$0xff]
  %v1875 = vld [vmem:[%s4 + $0x118] sm:$0xff]
  %v1876 = vld [vmem:[%s4 + $0x120] sm:$0xff]
  %v1877 = vld [vmem:[%s4 + $0x128] sm:$0xff]
  %v1878 = vld [vmem:[%s4 + $0x130] sm:$0xff]
  %v1879 = vld [vmem:[%s4 + $0x138] sm:$0xff]
  %v1880 = vld [vmem:[%s4 + $0x140] sm:$0xff]
  %v1881 = vld [vmem:[%s4 + $0x148] sm:$0xff]
  %v1882 = vld [vmem:[%s4 + $0x150] sm:$0xff]
  %v1883 = vld [vmem:[%s4 + $0x158] sm:$0xff]
  %v1884 = vld [vmem:[%s4 + $0x160] sm:$0xff]
  %v1885 = vld [vmem:[%s4 + $0x168] sm:$0xff]
  %v1886 = vld [vmem:[%s4 + $0x170] sm:$0xff]
  %v1887 = vld [vmem:[%s4 + $0x178] sm:$0xff]
  %v1888 = vld [vmem:[%s4 + $0x180] sm:$0xff]
  %v1889 = vld [vmem:[%s4 + $0x188] sm:$0xff]
  %v1890 = vld [vmem:[%s4 + $0x190] sm:$0xff]
  %v1891 = vld [vmem:[%s4 + $0x198] sm:$0xff]
  %v1892 = vld [vmem:[%s4 + $0x1a0] sm:$0xff]
  %v1893 = vld [vmem:[%s4 + $0x1a8] sm:$0xff]
  %v1894 = vld [vmem:[%s4 + $0x1b0] sm:$0xff]
  %v1895 = vld [vmem:[%s4 + $0x1b8] sm:$0xff]
  %v1896 = vld [vmem:[%s4 + $0x1c0] sm:$0xff]
  %v1897 = vld [vmem:[%s4 + $0x1c8] sm:$0xff]
  %v1898 = vld [vmem:[%s4 + $0x1d0] sm:$0xff]
  %v1899 = vld [vmem:[%s4 + $0x1d8] sm:$0xff]
  %v1900 = vld [vmem:[%s4 + $0x1e0] sm:$0xff]
  %v1901 = vld [vmem:[%s4 + $0x1e8] sm:$0xff]
  %v1902 = vld [vmem:[%s4 + $0x1f0] sm:$0xff]
  %v1903 = vld [vmem:[%s4 + $0x1f8] sm:$0xff]
  %v1904 = vld [vmem:[%s4 + $0x200] sm:$0xff]
  %v1905 = vld [vmem:[%s4 + $0x208] sm:$0xff]
  %v1906 = vld [vmem:[%s4 + $0x210] sm:$0xff]
  %v1907 = vld [vmem:[%s4 + $0x218] sm:$0xff]
  %v1908 = vld [vmem:[%s4 + $0x220] sm:$0xff]
  %v1909 = vld [vmem:[%s4 + $0x228] sm:$0xff]
  %v1910 = vld [vmem:[%s4 + $0x230] sm:$0xff]
  %v1911 = vld [vmem:[%s4 + $0x238] sm:$0xff]
  %v1912 = vld [vmem:[%s4 + $0x240] sm:$0xff]
  %v1913 = vld [vmem:[%s4 + $0x248] sm:$0xff]
  %v1914 = vld [vmem:[%s4 + $0x250] sm:$0xff]
  %v1915 = vld [vmem:[%s4 + $0x258] sm:$0xff]
  %v1916 = vld [vmem:[%s4 + $0x260] sm:$0xff]
  %v1917 = vld [vmem:[%s4 + $0x268] sm:$0xff]
  %v1918 = vld [vmem:[%s4 + $0x270] sm:$0xff]
  %v1919 = vld [vmem:[%s4 + $0x278] sm:$0xff]
  %v1920 = vld [vmem:[%s4 + $0x280] sm:$0xff]
  %v1921 = vld [vmem:[%s4 + $0x288] sm:$0xff]
  %v1922 = vld [vmem:[%s4 + $0x290] sm:$0xff]
  %v1923 = vld [vmem:[%s4 + $0x298] sm:$0xff]
  %v1924 = vld [vmem:[%s4 + $0x2a0] sm:$0xff]
  %v1925 = vld [vmem:[%s4 + $0x2a8] sm:$0xff]
  %v1926 = vld [vmem:[%s4 + $0x2b0] sm:$0xff]
  %v1927 = vld [vmem:[%s4 + $0x2b8] sm:$0xff]
  %v2016 = vunpack.c.l.b16 %v1840
  %v2017 = vunpack.c.h.b16 %v1840
  %v2018 = vunpack.c.l.b16 %v1841
  %v2019 = vunpack.c.h.b16 %v1841
  %v2020 = vunpack.c.l.b16 %v1842
  %v2021 = vunpack.c.h.b16 %v1842
  %v2022 = vunpack.c.l.b16 %v1843
  %v2023 = vunpack.c.h.b16 %v1843
  %v2024 = vunpack.c.l.b16 %v1844
  %v2025 = vunpack.c.h.b16 %v1844
  %v2026 = vunpack.c.l.b16 %v1845
  %v2027 = vunpack.c.h.b16 %v1845
  %v2028 = vunpack.c.l.b16 %v1846
  %v2029 = vunpack.c.h.b16 %v1846
  %v2030 = vunpack.c.l.b16 %v1847
  %v2031 = vunpack.c.h.b16 %v1847
  %v2032 = vunpack.c.l.b16 %v1848
  %v2033 = vunpack.c.h.b16 %v1848
  %v2034 = vunpack.c.l.b16 %v1849
  %v2035 = vunpack.c.h.b16 %v1849
  %v2036 = vunpack.c.l.b16 %v1850
  %v2037 = vunpack.c.h.b16 %v1850
  %v2038 = vunpack.c.l.b16 %v1851
  %v2039 = vunpack.c.h.b16 %v1851
  %v2040 = vunpack.c.l.b16 %v1852
  %v2041 = vunpack.c.h.b16 %v1852
  %v2042 = vunpack.c.l.b16 %v1853
  %v2043 = vunpack.c.h.b16 %v1853
  %v2044 = vunpack.c.l.b16 %v1854
  %v2045 = vunpack.c.h.b16 %v1854
  %v2046 = vunpack.c.l.b16 %v1855
  %v2047 = vunpack.c.h.b16 %v1855
  %v2048 = vunpack.c.l.b16 %v1856
  %v2049 = vunpack.c.h.b16 %v1856
  %v2050 = vunpack.c.l.b16 %v1857
  %v2051 = vunpack.c.h.b16 %v1857
  %v2052 = vunpack.c.l.b16 %v1858
  %v2053 = vunpack.c.h.b16 %v1858
  %v2054 = vunpack.c.l.b16 %v1859
  %v2055 = vunpack.c.h.b16 %v1859
  %v2056 = vunpack.c.l.b16 %v1860
  %v2057 = vunpack.c.h.b16 %v1860
  %v2058 = vunpack.c.l.b16 %v1861
  %v2059 = vunpack.c.h.b16 %v1861
  %v2060 = vunpack.c.l.b16 %v1862
  %v2061 = vunpack.c.h.b16 %v1862
  %v2062 = vunpack.c.l.b16 %v1863
  %v2063 = vunpack.c.h.b16 %v1863
  %v2064 = vunpack.c.l.b16 %v1864
  %v2065 = vunpack.c.h.b16 %v1864
  %v2066 = vunpack.c.l.b16 %v1865
  %v2067 = vunpack.c.h.b16 %v1865
  %v2068 = vunpack.c.l.b16 %v1866
  %v2069 = vunpack.c.h.b16 %v1866
  %v2070 = vunpack.c.l.b16 %v1867
  %v2071 = vunpack.c.h.b16 %v1867
  %v2072 = vunpack.c.l.b16 %v1868
  %v2073 = vunpack.c.h.b16 %v1868
  %v2074 = vunpack.c.l.b16 %v1869
  %v2075 = vunpack.c.h.b16 %v1869
  %v2076 = vunpack.c.l.b16 %v1870
  %v2077 = vunpack.c.h.b16 %v1870
  %v2078 = vunpack.c.l.b16 %v1871
  %v2079 = vunpack.c.h.b16 %v1871
  %v2080 = vunpack.c.l.b16 %v1872
  %v2081 = vunpack.c.h.b16 %v1872
  %v2082 = vunpack.c.l.b16 %v1873
  %v2083 = vunpack.c.h.b16 %v1873
  %v2084 = vunpack.c.l.b16 %v1874
  %v2085 = vunpack.c.h.b16 %v1874
  %v2086 = vunpack.c.l.b16 %v1875
  %v2087 = vunpack.c.h.b16 %v1875
  %v2088 = vunpack.c.l.b16 %v1876
  %v2089 = vunpack.c.h.b16 %v1876
  %v2090 = vunpack.c.l.b16 %v1877
  %v2091 = vunpack.c.h.b16 %v1877
  %v2092 = vunpack.c.l.b16 %v1878
  %v2093 = vunpack.c.h.b16 %v1878
  %v2094 = vunpack.c.l.b16 %v1879
  %v2095 = vunpack.c.h.b16 %v1879
  %v2096 = vunpack.c.l.b16 %v1880
  %v2097 = vunpack.c.h.b16 %v1880
  %v2098 = vunpack.c.l.b16 %v1881
  %v2099 = vunpack.c.h.b16 %v1881
  %v2100 = vunpack.c.l.b16 %v1882
  %v2101 = vunpack.c.h.b16 %v1882
  %v2102 = vunpack.c.l.b16 %v1883
  %v2103 = vunpack.c.h.b16 %v1883
  %v2104 = vunpack.c.l.b16 %v1884
  %v2105 = vunpack.c.h.b16 %v1884
  %v2106 = vunpack.c.l.b16 %v1885
  %v2107 = vunpack.c.h.b16 %v1885
  %v2108 = vunpack.c.l.b16 %v1886
  %v2109 = vunpack.c.h.b16 %v1886
  %v2110 = vunpack.c.l.b16 %v1887
  %v2111 = vunpack.c.h.b16 %v1887
  %v2112 = vunpack.c.l.b16 %v1888
  %v2113 = vunpack.c.h.b16 %v1888
  %v2114 = vunpack.c.l.b16 %v1889
  %v2115 = vunpack.c.h.b16 %v1889
  %v2116 = vunpack.c.l.b16 %v1890
  %v2117 = vunpack.c.h.b16 %v1890
  %v2118 = vunpack.c.l.b16 %v1891
  %v2119 = vunpack.c.h.b16 %v1891
  %v2120 = vunpack.c.l.b16 %v1892
  %v2121 = vunpack.c.h.b16 %v1892
  %v2122 = vunpack.c.l.b16 %v1893
  %v2123 = vunpack.c.h.b16 %v1893
  %v2124 = vunpack.c.l.b16 %v1894
  %v2125 = vunpack.c.h.b16 %v1894
  %v2126 = vunpack.c.l.b16 %v1895
  %v2127 = vunpack.c.h.b16 %v1895
  %v2128 = vunpack.c.l.b16 %v1896
  %v2129 = vunpack.c.h.b16 %v1896
  %v2130 = vunpack.c.l.b16 %v1897
  %v2131 = vunpack.c.h.b16 %v1897
  %v2132 = vunpack.c.l.b16 %v1898
  %v2133 = vunpack.c.h.b16 %v1898
  %v2134 = vunpack.c.l.b16 %v1899
  %v2135 = vunpack.c.h.b16 %v1899
  %v2136 = vunpack.c.l.b16 %v1900
  %v2137 = vunpack.c.h.b16 %v1900
  %v2138 = vunpack.c.l.b16 %v1901
  %v2139 = vunpack.c.h.b16 %v1901
  %v2140 = vunpack.c.l.b16 %v1902
  %v2141 = vunpack.c.h.b16 %v1902
  %v2142 = vunpack.c.l.b16 %v1903
  %v2143 = vunpack.c.h.b16 %v1903
  %v2144 = vunpack.c.l.b16 %v1904
  %v2145 = vunpack.c.h.b16 %v1904
  %v2146 = vunpack.c.l.b16 %v1905
  %v2147 = vunpack.c.h.b16 %v1905
  %v2148 = vunpack.c.l.b16 %v1906
  %v2149 = vunpack.c.h.b16 %v1906
  %v2150 = vunpack.c.l.b16 %v1907
  %v2151 = vunpack.c.h.b16 %v1907
  %v2152 = vunpack.c.l.b16 %v1908
  %v2153 = vunpack.c.h.b16 %v1908
  %v2154 = vunpack.c.l.b16 %v1909
  %v2155 = vunpack.c.h.b16 %v1909
  %v2156 = vunpack.c.l.b16 %v1910
  %v2157 = vunpack.c.h.b16 %v1910
  %v2158 = vunpack.c.l.b16 %v1911
  %v2159 = vunpack.c.h.b16 %v1911
  %v2160 = vunpack.c.l.b16 %v1912
  %v2161 = vunpack.c.h.b16 %v1912
  %v2162 = vunpack.c.l.b16 %v1913
  %v2163 = vunpack.c.h.b16 %v1913
  %v2164 = vunpack.c.l.b16 %v1914
  %v2165 = vunpack.c.h.b16 %v1914
  %v2166 = vunpack.c.l.b16 %v1915
  %v2167 = vunpack.c.h.b16 %v1915
  %v2168 = vunpack.c.l.b16 %v1916
  %v2169 = vunpack.c.h.b16 %v1916
  %v2170 = vunpack.c.l.b16 %v1917
  %v2171 = vunpack.c.h.b16 %v1917
  %v2172 = vunpack.c.l.b16 %v1918
  %v2173 = vunpack.c.h.b16 %v1918
  %v2174 = vunpack.c.l.b16 %v1919
  %v2175 = vunpack.c.h.b16 %v1919
  %v2176 = vunpack.c.l.b16 %v1920
  %v2177 = vunpack.c.h.b16 %v1920
  %v2178 = vunpack.c.l.b16 %v1921
  %v2179 = vunpack.c.h.b16 %v1921
  %v2180 = vunpack.c.l.b16 %v1922
  %v2181 = vunpack.c.h.b16 %v1922
  %v2182 = vunpack.c.l.b16 %v1923
  %v2183 = vunpack.c.h.b16 %v1923
  %v2184 = vunpack.c.l.b16 %v1924
  %v2185 = vunpack.c.h.b16 %v1924
  %v2186 = vunpack.c.l.b16 %v1925
  %v2187 = vunpack.c.h.b16 %v1925
  %v2188 = vunpack.c.l.b16 %v1926
  %v2189 = vunpack.c.h.b16 %v1926
  %v2190 = vunpack.c.l.b16 %v1927
  %v2191 = vunpack.c.h.b16 %v1927
  %v2192 = vpack.c.b16 %v2018, %v2016
  %v2193 = vpack.c.b16 %v2019, %v2017
  %v2194 = vpack.c.b16 %v2022, %v2020
  %v2195 = vpack.c.b16 %v2023, %v2021
  %v2196 = vpack.c.b16 %v2026, %v2024
  %v2197 = vpack.c.b16 %v2027, %v2025
  %v2198 = vpack.c.b16 %v2030, %v2028
  %v2199 = vpack.c.b16 %v2031, %v2029
  %v2200 = vpack.c.b16 %v2034, %v2032
  %v2201 = vpack.c.b16 %v2035, %v2033
  %v2202 = vpack.c.b16 %v2038, %v2036
  %v2203 = vpack.c.b16 %v2039, %v2037
  %v2204 = vpack.c.b16 %v2042, %v2040
  %v2205 = vpack.c.b16 %v2043, %v2041
  %v2206 = vpack.c.b16 %v2046, %v2044
  %v2207 = vpack.c.b16 %v2047, %v2045
  %v2208 = vpack.c.b16 %v2050, %v2048
  %v2209 = vpack.c.b16 %v2051, %v2049
  %v2210 = vpack.c.b16 %v2054, %v2052
  %v2211 = vpack.c.b16 %v2055, %v2053
  %v2212 = vpack.c.b16 %v2058, %v2056
  %v2213 = vpack.c.b16 %v2059, %v2057
  %v2214 = vpack.c.b16 %v2062, %v2060
  %v2215 = vpack.c.b16 %v2063, %v2061
  %v2216 = vpack.c.b16 %v2066, %v2064
  %v2217 = vpack.c.b16 %v2067, %v2065
  %v2218 = vpack.c.b16 %v2070, %v2068
  %v2219 = vpack.c.b16 %v2071, %v2069
  %v2220 = vpack.c.b16 %v2074, %v2072
  %v2221 = vpack.c.b16 %v2075, %v2073
  %v2222 = vpack.c.b16 %v2078, %v2076
  %v2223 = vpack.c.b16 %v2079, %v2077
  %v2224 = vpack.c.b16 %v2082, %v2080
  %v2225 = vpack.c.b16 %v2083, %v2081
  %v2226 = vpack.c.b16 %v2086, %v2084
  %v2227 = vpack.c.b16 %v2087, %v2085
  %v2228 = vpack.c.b16 %v2090, %v2088
  %v2229 = vpack.c.b16 %v2091, %v2089
  %v2230 = vpack.c.b16 %v2094, %v2092
  %v2231 = vpack.c.b16 %v2095, %v2093
  %v2232 = vpack.c.b16 %v2098, %v2096
  %v2233 = vpack.c.b16 %v2099, %v2097
  %v2234 = vpack.c.b16 %v2102, %v2100
  %v2235 = vpack.c.b16 %v2103, %v2101
  %v2236 = vpack.c.b16 %v2106, %v2104
  %v2237 = vpack.c.b16 %v2107, %v2105
  %v2238 = vpack.c.b16 %v2110, %v2108
  %v2239 = vpack.c.b16 %v2111, %v2109
  %v2240 = vpack.c.b16 %v2114, %v2112
  %v2241 = vpack.c.b16 %v2115, %v2113
  %v2242 = vpack.c.b16 %v2118, %v2116
  %v2243 = vpack.c.b16 %v2119, %v2117
  %v2244 = vpack.c.b16 %v2122, %v2120
  %v2245 = vpack.c.b16 %v2123, %v2121
  %v2246 = vpack.c.b16 %v2126, %v2124
  %v2247 = vpack.c.b16 %v2127, %v2125
  %v2248 = vpack.c.b16 %v2130, %v2128
  %v2249 = vpack.c.b16 %v2131, %v2129
  %v2250 = vpack.c.b16 %v2134, %v2132
  %v2251 = vpack.c.b16 %v2135, %v2133
  %v2252 = vpack.c.b16 %v2138, %v2136
  %v2253 = vpack.c.b16 %v2139, %v2137
  %v2254 = vpack.c.b16 %v2142, %v2140
  %v2255 = vpack.c.b16 %v2143, %v2141
  %v2256 = vpack.c.b16 %v2146, %v2144
  %v2257 = vpack.c.b16 %v2147, %v2145
  %v2258 = vpack.c.b16 %v2150, %v2148
  %v2259 = vpack.c.b16 %v2151, %v2149
  %v2260 = vpack.c.b16 %v2154, %v2152
  %v2261 = vpack.c.b16 %v2155, %v2153
  %v2262 = vpack.c.b16 %v2158, %v2156
  %v2263 = vpack.c.b16 %v2159, %v2157
  %v2264 = vpack.c.b16 %v2162, %v2160
  %v2265 = vpack.c.b16 %v2163, %v2161
  %v2266 = vpack.c.b16 %v2166, %v2164
  %v2267 = vpack.c.b16 %v2167, %v2165
  %v2268 = vpack.c.b16 %v2170, %v2168
  %v2269 = vpack.c.b16 %v2171, %v2169
  %v2270 = vpack.c.b16 %v2174, %v2172
  %v2271 = vpack.c.b16 %v2175, %v2173
  %v2272 = vpack.c.b16 %v2178, %v2176
  %v2273 = vpack.c.b16 %v2179, %v2177
  %v2274 = vpack.c.b16 %v2182, %v2180
  %v2275 = vpack.c.b16 %v2183, %v2181
  %v2276 = vpack.c.b16 %v2186, %v2184
  %v2277 = vpack.c.b16 %v2187, %v2185
  %v2278 = vpack.c.b16 %v2190, %v2188
  %v2279 = vpack.c.b16 %v2191, %v2189
  %vm2368 = vcmask 523264
  %v2370 = vsel %vm2368, %v1833, 0
  %v2373 = vsel %vm2368, %v1839, 0
  %2375 = vmatprep.subr.bf16.mxu0 %v2207
  %2376 = vmatpush1.bf16.msra.mxu0 %v2206
  %2377 = vmatprep.subr.bf16.mxu0 %v2205
  %2378 = vmatpush1.bf16.msra.mxu0 %v2204
  %2379 = vmatprep.subr.bf16.mxu0 %v2203
  %2380 = vmatpush1.bf16.msra.mxu0 %v2202
  %2381 = vmatprep.subr.bf16.mxu0 %v2201
  %2382 = vmatpush1.bf16.msra.mxu0 %v2200
  %2383 = vmatprep.subr.bf16.mxu0 %v2199
  %2384 = vmatpush1.bf16.msra.mxu0 %v2198
  %2385 = vmatprep.subr.bf16.mxu0 %v2197
  %2386 = vmatpush1.bf16.msra.mxu0 %v2196
  %2387 = vmatprep.subr.bf16.mxu0 %v2195
  %2388 = vmatpush1.bf16.msra.mxu0 %v2194
  %2389 = vmatprep.subr.bf16.mxu0 %v2193
  %2390 = vmatpush1.bf16.msra.mxu0 %v2192
  %2391 = vmatprep.subr.bf16.mxu0 %v2223
  %2392 = vmatpush2.bf16.msra.mxu0 %v2222
  %2393 = vmatprep.subr.bf16.mxu0 %v2221
  %2394 = vmatpush2.bf16.msra.mxu0 %v2220
  %2395 = vmatprep.subr.bf16.mxu0 %v2219
  %2396 = vmatpush2.bf16.msra.mxu0 %v2218
  %2397 = vmatprep.subr.bf16.mxu0 %v2217
  %2398 = vmatpush2.bf16.msra.mxu0 %v2216
  %2399 = vmatprep.subr.bf16.mxu0 %v2215
  %2400 = vmatpush2.bf16.msra.mxu0 %v2214
  %2401 = vmatprep.subr.bf16.mxu0 %v2213
  %2402 = vmatpush2.bf16.msra.mxu0 %v2212
  %2403 = vmatprep.subr.bf16.mxu0 %v2211
  %2404 = vmatpush2.bf16.msra.mxu0 %v2210
  %2405 = vmatprep.subr.bf16.mxu0 %v2209
  %2406 = vmatpush2.bf16.msra.mxu0 %v2208
  %2407 = vmatprep.mubr.bf16.mxu0 %v1829
  %2408 = vmatmul.mubr.bf16.gmra.mxu0 %v1828
  %v2409 = vpop.f32.mrf.mxu0
  %v2410 = vadd.f32 0.0, %v2409
  %v2411 = vpop.f32.mrf.mxu0
  %v2412 = vadd.f32 0.0, %v2411
  %v2413 = vpop.f32.mrf.mxu0
  %v2414 = vadd.f32 0.0, %v2413
  %v2415 = vpop.f32.mrf.mxu0
  %v2416 = vadd.f32 0.0, %v2415
  %2417 = vmatprep.mubr.bf16.mxu0 %v1835
  %2418 = vmatmul.mubr.bf16.gmra.mxu0 %v1834
  %v2419 = vpop.f32.mrf.mxu0
  %v2420 = vadd.f32 0.0, %v2419
  %v2421 = vpop.f32.mrf.mxu0
  %v2422 = vadd.f32 0.0, %v2421
  %v2423 = vpop.f32.mrf.mxu0
  %v2424 = vadd.f32 0.0, %v2423
  %v2425 = vpop.f32.mrf.mxu0
  %v2426 = vadd.f32 0.0, %v2425
  %2427 = vdwg.mxu0
  %2428 = vmatprep.subr.bf16.mxu0 %v2239
  %2429 = vmatpush1.bf16.msra.mxu0 %v2238
  %2430 = vmatprep.subr.bf16.mxu0 %v2237
  %2431 = vmatpush1.bf16.msra.mxu0 %v2236
  %2432 = vmatprep.subr.bf16.mxu0 %v2235
  %2433 = vmatpush1.bf16.msra.mxu0 %v2234
  %2434 = vmatprep.subr.bf16.mxu0 %v2233
  %2435 = vmatpush1.bf16.msra.mxu0 %v2232
  %2436 = vmatprep.subr.bf16.mxu0 %v2231
  %2437 = vmatpush1.bf16.msra.mxu0 %v2230
  %2438 = vmatprep.subr.bf16.mxu0 %v2229
  %2439 = vmatpush1.bf16.msra.mxu0 %v2228
  %2440 = vmatprep.subr.bf16.mxu0 %v2227
  %2441 = vmatpush1.bf16.msra.mxu0 %v2226
  %2442 = vmatprep.subr.bf16.mxu0 %v2225
  %2443 = vmatpush1.bf16.msra.mxu0 %v2224
  %2444 = vmatprep.subr.bf16.mxu0 %v2255
  %2445 = vmatpush2.bf16.msra.mxu0 %v2254
  %2446 = vmatprep.subr.bf16.mxu0 %v2253
  %2447 = vmatpush2.bf16.msra.mxu0 %v2252
  %2448 = vmatprep.subr.bf16.mxu0 %v2251
  %2449 = vmatpush2.bf16.msra.mxu0 %v2250
  %2450 = vmatprep.subr.bf16.mxu0 %v2249
  %2451 = vmatpush2.bf16.msra.mxu0 %v2248
  %2452 = vmatprep.subr.bf16.mxu0 %v2247
  %2453 = vmatpush2.bf16.msra.mxu0 %v2246
  %2454 = vmatprep.subr.bf16.mxu0 %v2245
  %2455 = vmatpush2.bf16.msra.mxu0 %v2244
  %2456 = vmatprep.subr.bf16.mxu0 %v2243
  %2457 = vmatpush2.bf16.msra.mxu0 %v2242
  %2458 = vmatprep.subr.bf16.mxu0 %v2241
  %2459 = vmatpush2.bf16.msra.mxu0 %v2240
  %2460 = vmatprep.mubr.bf16.mxu0 %v1831
  %2461 = vmatmul.mubr.bf16.gmra.mxu0 %v1830
  %v2462 = vpop.f32.mrf.mxu0
  %v2463 = vadd.f32 %v2410, %v2462
  %v2464 = vpop.f32.mrf.mxu0
  %v2465 = vadd.f32 %v2412, %v2464
  %v2466 = vpop.f32.mrf.mxu0
  %v2467 = vadd.f32 %v2414, %v2466
  %v2468 = vpop.f32.mrf.mxu0
  %v2469 = vadd.f32 %v2416, %v2468
  %2470 = vmatprep.mubr.bf16.mxu0 %v1837
  %2471 = vmatmul.mubr.bf16.gmra.mxu0 %v1836
  %v2472 = vpop.f32.mrf.mxu0
  %v2473 = vadd.f32 %v2420, %v2472
  %v2474 = vpop.f32.mrf.mxu0
  %v2475 = vadd.f32 %v2422, %v2474
  %v2476 = vpop.f32.mrf.mxu0
  %v2477 = vadd.f32 %v2424, %v2476
  %v2478 = vpop.f32.mrf.mxu0
  %v2479 = vadd.f32 %v2426, %v2478
  %2480 = vdwg.mxu0
  %2481 = vmatprep.subr.bf16.mxu0 %v2271
  %2482 = vmatpush1.bf16.msra.mxu0 %v2270
  %2483 = vmatprep.subr.bf16.mxu0 %v2269
  %2484 = vmatpush1.bf16.msra.mxu0 %v2268
  %2485 = vmatprep.subr.bf16.mxu0 %v2267
  %2486 = vmatpush1.bf16.msra.mxu0 %v2266
  %2487 = vmatprep.subr.bf16.mxu0 %v2265
  %2488 = vmatpush1.bf16.msra.mxu0 %v2264
  %2489 = vmatprep.subr.bf16.mxu0 %v2263
  %2490 = vmatpush1.bf16.msra.mxu0 %v2262
  %2491 = vmatprep.subr.bf16.mxu0 %v2261
  %2492 = vmatpush1.bf16.msra.mxu0 %v2260
  %2493 = vmatprep.subr.bf16.mxu0 %v2259
  %2494 = vmatpush1.bf16.msra.mxu0 %v2258
  %2495 = vmatprep.subr.bf16.mxu0 %v2257
  %2496 = vmatpush1.bf16.msra.mxu0 %v2256
  %2497 = vmatprep.subr.bf16.mxu0 0
  %2498 = vmatpush2.bf16.msra.mxu0 0
  %2499 = vmatprep.subr.bf16.mxu0 0
  %2500 = vmatpush2.bf16.msra.mxu0 0
  %2501 = vmatprep.subr.bf16.mxu0 0
  %2502 = vmatpush2.bf16.msra.mxu0 0
  %2503 = vmatprep.subr.bf16.mxu0 0
  %2504 = vmatpush2.bf16.msra.mxu0 0
  %2505 = vmatprep.subr.bf16.mxu0 %v2279
  %2506 = vmatpush2.bf16.msra.mxu0 %v2278
  %2507 = vmatprep.subr.bf16.mxu0 %v2277
  %2508 = vmatpush2.bf16.msra.mxu0 %v2276
  %2509 = vmatprep.subr.bf16.mxu0 %v2275
  %2510 = vmatpush2.bf16.msra.mxu0 %v2274
  %2511 = vmatprep.subr.bf16.mxu0 %v2273
  %2512 = vmatpush2.bf16.msra.mxu0 %v2272
  %2513 = vmatprep.mubr.bf16.mxu0 %v2370
  %2514 = vmatmul.mubr.bf16.gmra.mxu0 %v1832
  %v2515 = vpop.f32.mrf.mxu0
  %v2516 = vadd.f32 %v2463, %v2515
  %v2517 = vpop.f32.mrf.mxu0
  %v2518 = vadd.f32 %v2465, %v2517
  %v2519 = vpop.f32.mrf.mxu0
  %v2520 = vadd.f32 %v2467, %v2519
  %v2521 = vpop.f32.mrf.mxu0
  %v2522 = vadd.f32 %v2469, %v2521
  %2523 = vmatprep.mubr.bf16.mxu0 %v2373
  %2524 = vmatmul.mubr.bf16.gmra.mxu0 %v1838
  %v2525 = vpop.f32.mrf.mxu0
  %v2526 = vadd.f32 %v2473, %v2525
  %v2527 = vpop.f32.mrf.mxu0
  %v2528 = vadd.f32 %v2475, %v2527
  %v2529 = vpop.f32.mrf.mxu0
  %v2530 = vadd.f32 %v2477, %v2529
  %v2531 = vpop.f32.mrf.mxu0
  %v2532 = vadd.f32 %v2479, %v2531
  %2533 = vdwg.mxu0
  %v2534 = vadd.f32 %v1820, %v2516
  %v2535 = vadd.f32 %v1821, %v2518
  %v2536 = vadd.f32 %v1822, %v2520
  %v2537 = vadd.f32 %v1823, %v2522
  %v2538 = vadd.f32 %v1824, %v2526
  %v2539 = vadd.f32 %v1825, %v2528
  %v2540 = vadd.f32 %v1826, %v2530
  %v2541 = vadd.f32 %v1827, %v2532
  %2542 = vst [vmem:[#allocation3] sm:$0xff] %v2534
  %2543 = vst [vmem:[#allocation3 + $0x8] sm:$0xff] %v2535
  %2544 = vst [vmem:[#allocation3 + $0x10] sm:$0xff] %v2536
  %2545 = vst [vmem:[#allocation3 + $0x18] sm:$0xff] %v2537
  %2546 = vst [vmem:[#allocation3 + $0x20] sm:$0xff] %v2538
  %2547 = vst [vmem:[#allocation3 + $0x28] sm:$0xff] %v2539
  %2548 = vst [vmem:[#allocation3 + $0x30] sm:$0xff] %v2540
  %2549 = vst [vmem:[#allocation3 + $0x38] sm:$0xff] %v2541
  // Predicated region
  $region26: #{transformer_forward.12} parent=0 // pred_check
    %p2550 = pneg %p21
  $region27: #{transformer_forward.12} parent=0 // pred_check_branch
    %2552 = sbr.rel (%p2550) target = $region29
  $region28: #{transformer_forward.12} parent=0 // pred_region
    %v2553 = vld [vmem:[#allocation3] sm:$0xff]
    %v2554 = vld [vmem:[#allocation3 + $0x8] sm:$0xff]
    %v2555 = vld [vmem:[#allocation3 + $0x10] sm:$0xff]
    %v2556 = vld [vmem:[#allocation3 + $0x18] sm:$0xff]
    %v2557 = vld [vmem:[#allocation3 + $0x20] sm:$0xff]
    %v2558 = vld [vmem:[#allocation3 + $0x28] sm:$0xff]
    %v2559 = vld [vmem:[#allocation3 + $0x30] sm:$0xff]
    %v2560 = vld [vmem:[#allocation3 + $0x38] sm:$0xff]
    %v2561 = vld [vmem:[%s0] sm:$0xff]
    %v2562 = vld [vmem:[%s0 + $0x8] sm:$0xff]
    %v2563 = vld [vmem:[%s0 + $0x10] sm:$0xff]
    %v2564 = vld [vmem:[%s0 + $0x18] sm:$0xff]
    %v2565 = vunpack.c.l.bf16 %v2561
    %v2566 = vunpack.c.h.bf16 %v2561
    %v2567 = vunpack.c.l.bf16 %v2562
    %v2568 = vunpack.c.h.bf16 %v2562
    %v2569 = vunpack.c.l.bf16 %v2563
    %v2570 = vunpack.c.h.bf16 %v2563
    %v2571 = vunpack.c.l.bf16 %v2564
    %v2572 = vunpack.c.h.bf16 %v2564
    %v2573 = vadd.f32 %v2553, %v2565
    %v2574 = vadd.f32 %v2554, %v2566
    %v2575 = vadd.f32 %v2555, %v2567
    %v2576 = vadd.f32 %v2556, %v2568
    %v2577 = vadd.f32 %v2557, %v2569
    %v2578 = vadd.f32 %v2558, %v2570
    %v2579 = vadd.f32 %v2559, %v2571
    %v2580 = vadd.f32 %v2560, %v2572
    %v2581 = vpack.c.bf16 %v2575, %v2573
    %v2582 = vpack.c.bf16 %v2576, %v2574
    %v2583 = vpack.c.bf16 %v2579, %v2577
    %v2584 = vpack.c.bf16 %v2580, %v2578
    %v2589 = vunpack.c.l.b16 %v2581
    %v2590 = vunpack.c.l.b16 %v2582
    %v2591 = vunpack.c.h.b16 %v2581
    %v2592 = vunpack.c.h.b16 %v2582
    %v2593 = vunpack.c.l.b16 %v2583
    %v2594 = vunpack.c.l.b16 %v2584
    %v2595 = vunpack.c.h.b16 %v2583
    %v2596 = vunpack.c.h.b16 %v2584
    %v2597 = vpack.c.b16 %v2590, %v2589
    %v2598 = vpack.c.b16 %v2592, %v2591
    %v2599 = vpack.c.b16 %v2594, %v2593
    %v2600 = vpack.c.b16 %v2596, %v2595
    %2605 = vst [vmem:[%s5] sm:$0xff] %v2597
    %2606 = vst [vmem:[%s5 + $0x8] sm:$0xff] %v2598
    %2607 = vst [vmem:[%s5 + $0x10] sm:$0xff] %v2599
    %2608 = vst [vmem:[%s5 + $0x18] sm:$0xff] %v2600
  $region29: #{transformer_forward.12} parent=0 // pred_fallthru
    _
  // Predicated region
  $region30: #{transformer_forward.12} parent=0 // pred_check
    _
  $region31: #{transformer_forward.12} parent=0 // pred_check_branch
    %2610 = sbr.rel (0) target = $region33
  $region32: #{transformer_forward.12} parent=0 // pred_region
    _
  $region33: #{transformer_forward.12} parent=0 // pred_fallthru
    _
  // Predicated region
  $region34: #{transformer_forward.12} parent=0 // pred_check
    _
  $region35: #{transformer_forward.12} parent=0 // pred_check_branch
    %2612 = sbr.rel (0) target = $region37
  $region36: #{transformer_forward.12} parent=0 // pred_region
    _
  $region37: #{transformer_forward.12} parent=0 // pred_fallthru
    _

</llo_original>
